<compile_context>
chip_gen: v7x
topology: tpu7x:2x2x1
jax: 0.10.0
libtpu: 0.0.40
codegen_flags: <defaults>
</compile_context>

<pallas_src>
import jax
import jax.numpy as jnp
from jax.experimental import pallas as pl
from jax.experimental.pallas import tpu as pltpu
import numpy as np


LANE = 128


def _rup(x, m):
    return ((x + m - 1) // m) * m


# ---------------------------------------------------------------------------
# Pallas kernel: one row-tile (TN rows) of the whole TFN forward.
#   x_ref    : (TN, Ls)      packed [audio|1|video|text] slab, f32
#   wblk_ref : (Ls, 3*Fp)    block-diagonal expanded pre-fusion weights, bf16
#   w1_ref   : (Fp, Dp)      post_fusion_layer_1 weights, bf16
#   b1_ref   : (1, Dp)       f32
#   w2_ref   : (Dp, Dp)      post_fusion_layer_2 weights, bf16
#   b2_ref   : (1, Dp)       f32
#   out_ref  : (TN, Dp)      f32
# All slice boundaries (Fp, La+Lv) are multiples of 128 -> free lane slices.
# ---------------------------------------------------------------------------
def make_tfn_kernel(La, Lv, Fp):
    def tfn_kernel(x_ref, wblk_ref, w1_ref, b1_ref, w2_ref, b2_ref, out_ref):
        x = x_ref[...]                                           # (TN, Ls) f32

        # --- one fused MXU matmul for the three modality factors ----------
        # (bias of all three pre-fusion linears is folded via the constant-1
        #  slab column; BN scale/shift is folded into the weights.)
        factors = jnp.dot(x.astype(jnp.bfloat16), wblk_ref[...],
                          preferred_element_type=jnp.float32)    # (TN, 3*Fp)
        a_big = factors[:, 0:Fp]
        v_big = factors[:, Fp:2 * Fp]
        t_big = factors[:, 2 * Fp:3 * Fp]

        # --- tensor fusion (pure VPU, f32) + K=Fp MXU contraction ----------
        fusion = a_big * v_big * t_big                           # (TN, Fp) f32
        y1 = jnp.dot(fusion.astype(jnp.bfloat16), w1_ref[...],
                     preferred_element_type=jnp.float32) + b1_ref[...]
        y1 = jnp.maximum(y1, 0.0)                                # ReLU
        y2 = jnp.dot(y1.astype(jnp.bfloat16), w2_ref[...],
                     preferred_element_type=jnp.float32) + b2_ref[...]
        y2 = jnp.maximum(y2, 0.0)                                # ReLU

        # --- residual with the raw (un-normalized) text slice --------------
        text = x[:, La + Lv:]                                    # (TN, Dp) f32
        out_ref[...] = (y2 + text).astype(out_ref.dtype)

    return tfn_kernel


# ---------------------------------------------------------------------------
# Wrapper: weight folding (repeat matrices, BN, biases), lane-dense slab
# packing, row tiling, pallas_call.
# ---------------------------------------------------------------------------
def tfn_forward(text_x, audio_x, video_x, params, row_tile=512):
    """text_x: (S, B, text_in), audio_x: (S, B, audio_in), video_x: (S, B, video_in)."""
    S, B, Dt = text_x.shape
    Da = audio_x.shape[-1]
    Dv = video_x.shape[-1]
    N = S * B

    Wa, ba = params["Wa"], params["ba"]          # (Da, A1), (1, A1)
    Wv, bv = params["Wv"], params["bv"]          # (Dv, V1), (1, V1)
    Wt, bt = params["Wt"], params["bt"]          # (Dt, T1), (1, T1)
    W1, b1 = params["W1"], params["b1"]          # (F, Dt),  (1, Dt)
    W2, b2 = params["W2"], params["b2"]          # (Dt, Dt), (1, Dt)
    A1, V1, T1 = Wa.shape[1], Wv.shape[1], Wt.shape[1]
    F = A1 * V1 * T1

    # --- fold the fusion outer product into one-hot "repeat" matrices ------
    q = jnp.arange(F)
    Ra = (q[None, :] // (V1 * T1) == jnp.arange(A1)[:, None]).astype(jnp.float32)  # (A1, F)
    Rv = ((q[None, :] // T1) % V1 == jnp.arange(V1)[:, None]).astype(jnp.float32)  # (V1, F)
    Rt = (q[None, :] % T1 == jnp.arange(T1)[:, None]).astype(jnp.float32)          # (T1, F)
    Wa_e, ba_e = Wa @ Ra, ba @ Ra                # (Da, F), (1, F)
    Wv_e, bv_e = Wv @ Rv, bv @ Rv
    Wt_e, bt_e = Wt @ Rt, bt @ Rt

    # --- fold eval-mode BatchNorm scale/shift into the expanded weights ----
    Wa_f = params["a_scale"].T * Wa_e
    ba_f = params["a_shift"] @ Wa_e + ba_e
    Wv_f = params["v_scale"].T * Wv_e
    bv_f = params["v_shift"] @ Wv_e + bv_e
    Wt_f = params["t_scale"].T * Wt_e
    bt_f = params["t_shift"] @ Wt_e + bt_e

    # --- lane-dense padding sizes -------------------------------------------
    La = _rup(Da + 1, LANE)      # +1 lane for the folded-bias constant column
    Lv = _rup(Dv, LANE)
    Lt = _rup(Dt, LANE)
    Dp = Lt
    Fp = _rup(F, LANE)
    Ls = La + Lv + Lt

    # --- block weight for the fused factor matmul (bf16) -------------------
    Wblk = jnp.zeros((Ls, 3 * Fp), jnp.float32)
    Wblk = Wblk.at[0:Da, 0:F].set(Wa_f)
    Wblk = Wblk.at[Da, 0:F].set(ba_f[0])                      # all three biases
    Wblk = Wblk.at[Da, Fp:Fp + F].set(bv_f[0])                # live on the
    Wblk = Wblk.at[Da, 2 * Fp:2 * Fp + F].set(bt_f[0])        # constant-1 row
    Wblk = Wblk.at[La:La + Dv, Fp:Fp + F].set(Wv_f)
    Wblk = Wblk.at[La + Lv:La + Lv + Dt, 2 * Fp:2 * Fp + F].set(Wt_f)
    Wblk = Wblk.astype(jnp.bfloat16)

    W1p = jnp.zeros((Fp, Dp), jnp.float32).at[:F, :Dt].set(W1).astype(jnp.bfloat16)
    b1p = jnp.zeros((1, Dp), jnp.float32).at[:, :Dt].set(b1)
    W2p = jnp.zeros((Dp, Dp), jnp.float32).at[:Dt, :Dt].set(W2).astype(jnp.bfloat16)
    b2p = jnp.zeros((1, Dp), jnp.float32).at[:, :Dt].set(b2)

    # --- packed input slab: [audio | 1 | pad | video | pad | text | pad] ---
    slab = jnp.zeros((N, Ls), jnp.float32)
    slab = slab.at[:, 0:Da].set(audio_x.reshape(N, Da))
    slab = slab.at[:, Da].set(1.0)                            # bias constant
    slab = slab.at[:, La:La + Dv].set(video_x.reshape(N, Dv))
    slab = slab.at[:, La + Lv:La + Lv + Dt].set(text_x.reshape(N, Dt))

    # --- row tiling: big tiles, >= 2 tiles for megacore / v7x --------------
    TN = min(row_tile, _rup(N, 8))
    if N >= 16:
        TN = min(TN, _rup(-(-N // 2), 8))
    TN = max(8, (TN // 8) * 8)
    Np = _rup(N, TN)
    if Np > N:
        slab = jnp.pad(slab, ((0, Np - N), (0, 0)))

    kernel = make_tfn_kernel(La, Lv, Fp)
    out = pl.pallas_call(
        kernel,
        out_shape=jax.ShapeDtypeStruct((Np, Dp), jnp.float32),
        grid=(Np // TN,),
        in_specs=[
            pl.BlockSpec((TN, Ls), lambda i: (i, 0)),         # row-tiled slab
            pl.BlockSpec((Ls, 3 * Fp), lambda i: (0, 0)),     # resident weights
            pl.BlockSpec((Fp, Dp), lambda i: (0, 0)),
            pl.BlockSpec((1, Dp), lambda i: (0, 0)),
            pl.BlockSpec((Dp, Dp), lambda i: (0, 0)),
            pl.BlockSpec((1, Dp), lambda i: (0, 0)),
        ],
        out_specs=pl.BlockSpec((TN, Dp), lambda i: (i, 0)),
        compiler_params=pltpu.CompilerParams(
            dimension_semantics=("parallel",)),
    )(slab, Wblk, W1p, b1p, W2p, b2p)
    return out[:N, :Dt].reshape(S, B, Dt)


# ---------------------------------------------------------------------------
# Pure-JAX reference (mirrors the PyTorch forward, eval mode) for checking.
# ---------------------------------------------------------------------------
def tfn_reference(text_x, audio_x, video_x, p):
    S, B, Dt = text_x.shape
    N = S * B
    t = text_x.reshape(N, Dt)
    a = audio_x.reshape(N, -1)
    v = video_x.reshape(N, -1)

    a1 = (a * p["a_scale"] + p["a_shift"]) @ p["Wa"] + p["ba"]
    v1 = (v * p["v_scale"] + p["v_shift"]) @ p["Wv"] + p["bv"]
    t1 = (t * p["t_scale"] + p["t_shift"]) @ p["Wt"] + p["bt"]

    A1, V1, T1 = a1.shape[1], v1.shape[1], t1.shape[1]
    av = (a1[:, :, None] * v1[:, None, :]).reshape(N, A1 * V1)
    fusion = (av[:, :, None] * t1[:, None, :]).reshape(N, A1 * V1 * T1)

    y1 = jax.nn.relu(fusion @ p["W1"] + p["b1"])
    y2 = jax.nn.relu(y1 @ p["W2"] + p["b2"])
    return (y2 + t).reshape(S, B, Dt)


# ---------------------------------------------------------------------------
# Deterministic parameter construction (matches TFN.__init__ shapes).
# ---------------------------------------------------------------------------
def make_params(key, text_in, video_in, audio_in,
                text_hidden, video_hidden, audio_hidden):
    eps = 1e-5
    D = text_in                                    # post_fusion_dim = text_in
    F = (text_hidden + 1) * (video_hidden + 1) * (audio_hidden + 1)

    ks = jax.random.split(key, 10)

    def lin(k, fan_in, fan_out, scale=0.1):
        kw, kb = jax.random.split(k)
        W = jax.random.normal(kw, (fan_in, fan_out), jnp.float32) * scale
        b = jax.random.normal(kb, (fan_out,), jnp.float32) * scale
        return W, b

    Wa, ba = lin(ks[0], audio_in, audio_hidden)
    Wv, bv = lin(ks[1], video_in, video_hidden)
    Wt, bt = lin(ks[2], text_in, text_hidden)
    W1, b1 = lin(ks[3], F, D, scale=0.05)
    W2, b2 = lin(ks[4], D, D, scale=0.05)

    # Fold the "prepend constant 1" into the pre-fusion linear layers:
    # zero input column at index 0, bias 1 at index 0.
    def pad_plus_one(W, b):
        Wp = jnp.concatenate([jnp.zeros((W.shape[0], 1), jnp.float32), W], axis=1)
        bp = jnp.concatenate([jnp.ones((1,), jnp.float32), b])[None, :]
        return Wp, bp

    Wa_p, ba_p = pad_plus_one(Wa, ba)
    Wv_p, bv_p = pad_plus_one(Wv, bv)
    Wt_p, bt_p = pad_plus_one(Wt, bt)

    # BatchNorm1d eval-mode fold (PyTorch init: gamma=1, beta=0, mean=0, var=1).
    def bn_fold(dim):
        gamma = jnp.ones((dim,), jnp.float32)
        beta = jnp.zeros((dim,), jnp.float32)
        rmean = jnp.zeros((dim,), jnp.float32)
        rvar = jnp.ones((dim,), jnp.float32)
        scale = gamma / jnp.sqrt(rvar + eps)
        shift = beta - rmean * scale
        return scale[None, :], shift[None, :]

    a_scale, a_shift = bn_fold(audio_in)
    v_scale, v_shift = bn_fold(video_in)
    t_scale, t_shift = bn_fold(text_in)

    return dict(
        Wa=Wa_p, ba=ba_p, Wv=Wv_p, bv=bv_p, Wt=Wt_p, bt=bt_p,
        W1=W1, b1=b1[None, :], W2=W2, b2=b2[None, :],
        a_scale=a_scale, a_shift=a_shift,
        v_scale=v_scale, v_shift=v_shift,
        t_scale=t_scale, t_shift=t_shift,
    )


if __name__ == "__main__":
    # Small shapes consistent with the module.  N = 256 rows with the default
    # row_tile gives TN=128 and a 2-tile "parallel" grid (even tile count for
    # v7x dual-TC sharding, full MXU M on v5e).
    seq_len, batch = 32, 8
    text_in, video_in, audio_in = 32, 20, 12
    text_hidden, video_hidden, audio_hidden = 15, 7, 3   # F = 16*8*4 = 512

    key = jax.random.PRNGKey(0)
    k_t, k_a, k_v, k_p = jax.random.split(key, 4)

    text_x = jax.random.normal(k_t, (seq_len, batch, text_in), jnp.float32)
    audio_x = jax.random.normal(k_a, (seq_len, batch, audio_in), jnp.float32)
    video_x = jax.random.normal(k_v, (seq_len, batch, video_in), jnp.float32)

    params = make_params(k_p, text_in, video_in, audio_in,
                         text_hidden, video_hidden, audio_hidden)

    out = tfn_forward(text_x, audio_x, video_x, params)
    out = jax.block_until_ready(out)

    ref = jax.block_until_ready(tfn_reference(text_x, audio_x, video_x, params))
    # bf16 MXU operands with f32 accumulation -> looser tolerance than all-f32.
    np.testing.assert_allclose(np.asarray(out), np.asarray(ref), rtol=2e-2, atol=2e-2)

    print("KERNEL_OK")
</pallas_src>

<mosaic_0001>
module attributes {stable_mosaic.version = 11 : i64} {
  func.func @tfn_kernel(%arg0: i32, %arg1: memref<128x384xf32, #tpu.memory_space<vmem>>, %arg2: memref<384x1536xbf16, #tpu.memory_space<vmem>>, %arg3: memref<512x128xbf16, #tpu.memory_space<vmem>>, %arg4: memref<1x128xf32, #tpu.memory_space<vmem>>, %arg5: memref<128x128xbf16, #tpu.memory_space<vmem>>, %arg6: memref<1x128xf32, #tpu.memory_space<vmem>>, %arg7: memref<128x128xf32, #tpu.memory_space<vmem>>) attributes {dimension_semantics = [#tpu.dimension_semantics<parallel>], iteration_bounds = array<i64: 2>, scalar_prefetch = 0 : i64, scratch_operands = 0 : i64, tpu.core_type = #tpu.core_type<tc>, window_params = [{transform_indices = @transform_0, window_bounds = array<i64: 128, 384>}, {pipeline_mode = #tpu.pipeline_mode<synchronous>, transform_indices = @transform_1, window_bounds = array<i64: 384, 1536>}, {pipeline_mode = #tpu.pipeline_mode<synchronous>, transform_indices = @transform_2, window_bounds = array<i64: 512, 128>}, {pipeline_mode = #tpu.pipeline_mode<synchronous>, transform_indices = @transform_3, window_bounds = array<i64: 1, 128>}, {pipeline_mode = #tpu.pipeline_mode<synchronous>, transform_indices = @transform_4, window_bounds = array<i64: 128, 128>}, {pipeline_mode = #tpu.pipeline_mode<synchronous>, transform_indices = @transform_5, window_bounds = array<i64: 1, 128>}, {transform_indices = @transform_6, window_bounds = array<i64: 128, 128>}]} {
    %c0 = arith.constant 0 : index
    %c0_0 = arith.constant 0 : index
    %0 = vector.load %arg1[%c0, %c0_0] : memref<128x384xf32, #tpu.memory_space<vmem>>, vector<128x384xf32>
    %1 = arith.truncf %0 : vector<128x384xf32> to vector<128x384xbf16>
    %c0_1 = arith.constant 0 : index
    %c0_2 = arith.constant 0 : index
    %2 = vector.load %arg2[%c0_1, %c0_2] : memref<384x1536xbf16, #tpu.memory_space<vmem>>, vector<384x1536xbf16>
    %cst = arith.constant dense<0.000000e+00> : vector<128x1536xf32>
    %3 = tpu.matmul %1, %2, %cst {dimension_numbers = #tpu.dot_dimension_numbers<[1], [0], [0], [1], [0, 0, 1, 1], [], []>} : vector<128x384xbf16>, vector<384x1536xbf16>, vector<128x1536xf32> -> vector<128x1536xf32>
    %4 = vector.extract_strided_slice %3 {offsets = [0, 0], sizes = [128, 512], strides = [1, 1]} : vector<128x1536xf32> to vector<128x512xf32>
    %5 = vector.extract_strided_slice %3 {offsets = [0, 512], sizes = [128, 512], strides = [1, 1]} : vector<128x1536xf32> to vector<128x512xf32>
    %6 = vector.extract_strided_slice %3 {offsets = [0, 1024], sizes = [128, 512], strides = [1, 1]} : vector<128x1536xf32> to vector<128x512xf32>
    %7 = arith.mulf %4, %5 : vector<128x512xf32>
    %8 = arith.mulf %7, %6 : vector<128x512xf32>
    %9 = arith.truncf %8 : vector<128x512xf32> to vector<128x512xbf16>
    %c0_3 = arith.constant 0 : index
    %c0_4 = arith.constant 0 : index
    %10 = vector.load %arg3[%c0_3, %c0_4] : memref<512x128xbf16, #tpu.memory_space<vmem>>, vector<512x128xbf16>
    %cst_5 = arith.constant dense<0.000000e+00> : vector<128x128xf32>
    %11 = tpu.matmul %9, %10, %cst_5 {dimension_numbers = #tpu.dot_dimension_numbers<[1], [0], [0], [1], [0, 0, 1, 1], [], []>} : vector<128x512xbf16>, vector<512x128xbf16>, vector<128x128xf32> -> vector<128x128xf32>
    %c0_6 = arith.constant 0 : index
    %c0_7 = arith.constant 0 : index
    %12 = vector.load %arg4[%c0_6, %c0_7] : memref<1x128xf32, #tpu.memory_space<vmem>>, vector<1x128xf32>
    %13 = vector.broadcast %12 : vector<1x128xf32> to vector<128x128xf32>
    %14 = arith.addf %11, %13 : vector<128x128xf32>
    %cst_8 = arith.constant 0.000000e+00 : f32
    %15 = vector.broadcast %cst_8 : f32 to vector<128x128xf32>
    %16 = arith.maximumf %14, %15 : vector<128x128xf32>
    %17 = arith.truncf %16 : vector<128x128xf32> to vector<128x128xbf16>
    %c0_9 = arith.constant 0 : index
    %c0_10 = arith.constant 0 : index
    %18 = vector.load %arg5[%c0_9, %c0_10] : memref<128x128xbf16, #tpu.memory_space<vmem>>, vector<128x128xbf16>
    %cst_11 = arith.constant dense<0.000000e+00> : vector<128x128xf32>
    %19 = tpu.matmul %17, %18, %cst_11 {dimension_numbers = #tpu.dot_dimension_numbers<[1], [0], [0], [1], [0, 0, 1, 1], [], []>} : vector<128x128xbf16>, vector<128x128xbf16>, vector<128x128xf32> -> vector<128x128xf32>
    %c0_12 = arith.constant 0 : index
    %c0_13 = arith.constant 0 : index
    %20 = vector.load %arg6[%c0_12, %c0_13] : memref<1x128xf32, #tpu.memory_space<vmem>>, vector<1x128xf32>
    %21 = vector.broadcast %20 : vector<1x128xf32> to vector<128x128xf32>
    %22 = arith.addf %19, %21 : vector<128x128xf32>
    %cst_14 = arith.constant 0.000000e+00 : f32
    %23 = vector.broadcast %cst_14 : f32 to vector<128x128xf32>
    %24 = arith.maximumf %22, %23 : vector<128x128xf32>
    %25 = vector.extract_strided_slice %0 {offsets = [0, 256], sizes = [128, 128], strides = [1, 1]} : vector<128x384xf32> to vector<128x128xf32>
    %26 = arith.addf %24, %25 : vector<128x128xf32>
    %c0_15 = arith.constant 0 : index
    %c0_16 = arith.constant 0 : index
    %27 = vector.load %arg7[%c0_15, %c0_16] : memref<128x128xf32, #tpu.memory_space<vmem>>, vector<128x128xf32>
    tpu.vector_store %arg7[%c0_15, %c0_16], %26 {strides = array<i32>} : memref<128x128xf32, #tpu.memory_space<vmem>>, vector<128x128xf32>,
    return
  }
  func.func @transform_0(%arg0: i32) -> (i32, i32) {
    %c0_i32 = arith.constant 0 : i32
    %c0_i32_0 = arith.constant 0 : i32
    return %arg0, %c0_i32 : i32, i32
  }
  func.func @transform_1(%arg0: i32) -> (i32, i32) {
    %c0_i32 = arith.constant 0 : i32
    %c0_i32_0 = arith.constant 0 : i32
    %c0_i32_1 = arith.constant 0 : i32
    return %c0_i32, %c0_i32_0 : i32, i32
  }
  func.func @transform_2(%arg0: i32) -> (i32, i32) {
    %c0_i32 = arith.constant 0 : i32
    %c0_i32_0 = arith.constant 0 : i32
    %c0_i32_1 = arith.constant 0 : i32
    return %c0_i32, %c0_i32_0 : i32, i32
  }
  func.func @transform_3(%arg0: i32) -> (i32, i32) {
    %c0_i32 = arith.constant 0 : i32
    %c0_i32_0 = arith.constant 0 : i32
    %c0_i32_1 = arith.constant 0 : i32
    return %c0_i32, %c0_i32_0 : i32, i32
  }
  func.func @transform_4(%arg0: i32) -> (i32, i32) {
    %c0_i32 = arith.constant 0 : i32
    %c0_i32_0 = arith.constant 0 : i32
    %c0_i32_1 = arith.constant 0 : i32
    return %c0_i32, %c0_i32_0 : i32, i32
  }
  func.func @transform_5(%arg0: i32) -> (i32, i32) {
    %c0_i32 = arith.constant 0 : i32
    %c0_i32_0 = arith.constant 0 : i32
    %c0_i32_1 = arith.constant 0 : i32
    return %c0_i32, %c0_i32_0 : i32, i32
  }
  func.func @transform_6(%arg0: i32) -> (i32, i32) {
    %c0_i32 = arith.constant 0 : i32
    %c0_i32_0 = arith.constant 0 : i32
    return %arg0, %c0_i32 : i32, i32
  }
}

</mosaic_0001>

<llo_original>
// kernel: tpu_custom_call.1
$region0: #{tpu_custom_call.1}
  #allocation0 [shape = 'u32[]', space=smem, size = 0x4, offset = 0x4, fixed_abs, tag = 'smem constant byte address 0x4 - core index']
  #allocation1 [shape = 'u32[144,128]{1,0:T(1,128)}', space=vmem, size = 0x12000, scoped, tag = 'internal scratch']
  %s0 = inlined_call_operand.hbm [shape: f32[256,384], index: 0, kind: input, shape index: {}]
  %s1 = inlined_call_operand.hbm [shape: bf16[384,1536], index: 1, kind: input, shape index: {}]
  %s2 = inlined_call_operand.hbm [shape: bf16[512,128], index: 2, kind: input, shape index: {}]
  %s3 = inlined_call_operand.hbm [shape: f32[1,128], index: 3, kind: input, shape index: {}]
  %s4 = inlined_call_operand.hbm [shape: bf16[128,128], index: 4, kind: input, shape index: {}]
  %s5 = inlined_call_operand.hbm [shape: f32[1,128], index: 5, kind: input, shape index: {}]
  %s6 = inlined_call_operand.hbm [shape: f32[256,128], index: 6, kind: output, shape index: {}]
  %s7 = sld [smem:[#allocation0]]
  $region81: #{tpu_custom_call.1} parent=0
    _
  %s9 = ssub.s32 1, %s7
  %s10 = scalar_select 0, %s9, %s7
  $region1: #{tpu_custom_call.1} parent=0
    #allocation2 [shape = 'u8[393216]{0}', space=vmem, size = 0x60000, scoped, tag = 'input window, operand 0']
    #allocation3 [shape = 's32[2]{0}', space=sflag, size = 0x8, scoped, tag = 'scoped memory for tpu_custom_call.1']
    #allocation4 [shape = 's32[2]{0}', space=sflag, size = 0x8, scoped, tag = 'scoped memory for tpu_custom_call.1']
    #allocation5 [shape = 'u8[1179648]{0}', space=vmem, size = 0x120000, scoped, tag = 'input window, operand 1, single buffered']
    #allocation6 [shape = 's32[1]{0}', space=sflag, size = 0x4, scoped, tag = 'scoped memory for tpu_custom_call.1']
    #allocation7 [shape = 'u8[131072]{0}', space=vmem, size = 0x20000, scoped, tag = 'input window, operand 2, single buffered']
    #allocation8 [shape = 'u8[512]{0}', space=vmem, size = 0x400, scoped, tag = 'input window, operand 3, single buffered']
    #allocation9 [shape = 's32[1]{0}', space=sflag, size = 0x4, scoped, tag = 'scoped memory for tpu_custom_call.1']
    #allocation10 [shape = 'u8[32768]{0}', space=vmem, size = 0x8000, scoped, tag = 'input window, operand 4, single buffered']
    #allocation11 [shape = 'u8[512]{0}', space=vmem, size = 0x400, scoped, tag = 'input window, operand 5, single buffered']
    #allocation12 [shape = 's32[1]{0}', space=sflag, size = 0x4, scoped, tag = 'scoped memory for tpu_custom_call.1']
    #allocation13 [shape = 'u8[131072]{0}', space=vmem, size = 0x20000, scoped, tag = 'output window, operand 0']
    %11 = vsyncpa [#allocation3], 0
    %s12 = scalar_lea.sflag [#allocation3], 1
    %13 = vsyncpa %s12, 0
    %14 = vsyncpa [#allocation6], 0
    %15 = vsyncpa [#allocation9], 0
    %16 = vsyncpa [#allocation12], 0
    %17 = vsyncpa [#allocation4], 0
    %s18 = scalar_lea.sflag [#allocation4], 1
    %19 = vsyncpa %s18, 0
    loop: start=0, step=1, limit=4
    $region2: #{tpu_custom_call.1} parent=1 // loop_pre_header
      _
    $region3: #{tpu_custom_call.1} parent=1 // loop_header
      %s21 = sphi 0, %s25
      %p22 = scmp.ge.s32.totalorder %s21, 4
      %s31 = sphi 0, %s33
      %s34 = sphi 0, %s31
      %s35 = sphi 0, %s34
      %s51 = sphi 0, %s35
      %s55 = sphi 0, %s55
      %s57 = sphi 0, %s55
      %s58 = sphi 0, %s57
      %s72 = sphi 0, %s58
      %s76 = sphi 0, %s76
      %s78 = sphi 0, %s76
      %s79 = sphi 0, %s78
      %s93 = sphi 0, %s79
      %s97 = sphi 0, %s97
      %s99 = sphi 0, %s97
      %s100 = sphi 0, %s99
      %s114 = sphi 0, %s100
      %s118 = sphi 0, %s118
      %s120 = sphi 0, %s118
      %s121 = sphi 0, %s120
      %s135 = sphi 0, %s121
      %s139 = sphi 0, %s139
      %s141 = sphi 0, %s139
      %s142 = sphi 0, %s141
      %s156 = sphi 0, %s142
      %s162 = sphi 0, %s164
      %s165 = sphi 0, %s162
      %s166 = sphi 0, %s165
      %s182 = sphi 0, %s166
    $region4: #{tpu_custom_call.1} parent=1 // loop_header_branch
      %24 = sbr.rel (%p22) target = $region8
    $region5: #{tpu_custom_call.1} parent=1 // loop_body
      %s26 = ssub.s32 %s21, 1
      %s27 = ssub.s32 %s21, 2
      %s28 = sadd.s32 %s21, 1
      %s29 = ssub.s32 %s21, %s28
      %p30 = scmp.eq.s32.totalorder %s29, 0
      %s32 = sadd.s32 %s31, 1
      %s33 = scalar_select %p30, %s31, %s32
      %p36 = pneg %p30
      %p37 = scmp.eq.s32.totalorder %s21, 1
      %p38 = por %p36, %p37
      %p39 = scmp.ne.s32.totalorder %s31, %s34
      %p40 = scmp.eq.s32.totalorder %s21, 0
      %p41 = por %p39, %p40
      %p42 = scmp.ne.s32.totalorder %s31, %s34
      %p43 = scmp.eq.s32.totalorder %s26, 1
      %p44 = por %p42, %p43
      %p45 = scmp.ne.s32.totalorder %s34, %s35
      %p46 = scmp.eq.s32.totalorder %s26, 0
      %p47 = por %p45, %p46
      %p48 = scmp.ne.s32.totalorder %s34, %s35
      %p49 = scmp.eq.s32.totalorder %s27, 1
      %p50 = por %p48, %p49
      %p52 = scmp.ne.s32.totalorder %s35, %s51
      %p53 = scmp.eq.s32.totalorder %s27, 0
      %p54 = por %p52, %p53
      %s56 = sadd.s32 %s55, 1
      %p59 = scmp.eq.s32.totalorder %s21, 1
      %p60 = scmp.ne.s32.totalorder %s55, %s57
      %p61 = scmp.eq.s32.totalorder %s21, 0
      %p62 = por %p60, %p61
      %p63 = scmp.ne.s32.totalorder %s55, %s57
      %p64 = scmp.eq.s32.totalorder %s26, 1
      %p65 = por %p63, %p64
      %p66 = scmp.ne.s32.totalorder %s57, %s58
      %p67 = scmp.eq.s32.totalorder %s26, 0
      %p68 = por %p66, %p67
      %p69 = scmp.ne.s32.totalorder %s57, %s58
      %p70 = scmp.eq.s32.totalorder %s27, 1
      %p71 = por %p69, %p70
      %p73 = scmp.ne.s32.totalorder %s58, %s72
      %p74 = scmp.eq.s32.totalorder %s27, 0
      %p75 = por %p73, %p74
      %s77 = sadd.s32 %s76, 1
      %p80 = scmp.eq.s32.totalorder %s21, 1
      %p81 = scmp.ne.s32.totalorder %s76, %s78
      %p82 = scmp.eq.s32.totalorder %s21, 0
      %p83 = por %p81, %p82
      %p84 = scmp.ne.s32.totalorder %s76, %s78
      %p85 = scmp.eq.s32.totalorder %s26, 1
      %p86 = por %p84, %p85
      %p87 = scmp.ne.s32.totalorder %s78, %s79
      %p88 = scmp.eq.s32.totalorder %s26, 0
      %p89 = por %p87, %p88
      %p90 = scmp.ne.s32.totalorder %s78, %s79
      %p91 = scmp.eq.s32.totalorder %s27, 1
      %p92 = por %p90, %p91
      %p94 = scmp.ne.s32.totalorder %s79, %s93
      %p95 = scmp.eq.s32.totalorder %s27, 0
      %p96 = por %p94, %p95
      %s98 = sadd.s32 %s97, 1
      %p101 = scmp.eq.s32.totalorder %s21, 1
      %p102 = scmp.ne.s32.totalorder %s97, %s99
      %p103 = scmp.eq.s32.totalorder %s21, 0
      %p104 = por %p102, %p103
      %p105 = scmp.ne.s32.totalorder %s97, %s99
      %p106 = scmp.eq.s32.totalorder %s26, 1
      %p107 = por %p105, %p106
      %p108 = scmp.ne.s32.totalorder %s99, %s100
      %p109 = scmp.eq.s32.totalorder %s26, 0
      %p110 = por %p108, %p109
      %p111 = scmp.ne.s32.totalorder %s99, %s100
      %p112 = scmp.eq.s32.totalorder %s27, 1
      %p113 = por %p111, %p112
      %p115 = scmp.ne.s32.totalorder %s100, %s114
      %p116 = scmp.eq.s32.totalorder %s27, 0
      %p117 = por %p115, %p116
      %s119 = sadd.s32 %s118, 1
      %p122 = scmp.eq.s32.totalorder %s21, 1
      %p123 = scmp.ne.s32.totalorder %s118, %s120
      %p124 = scmp.eq.s32.totalorder %s21, 0
      %p125 = por %p123, %p124
      %p126 = scmp.ne.s32.totalorder %s118, %s120
      %p127 = scmp.eq.s32.totalorder %s26, 1
      %p128 = por %p126, %p127
      %p129 = scmp.ne.s32.totalorder %s120, %s121
      %p130 = scmp.eq.s32.totalorder %s26, 0
      %p131 = por %p129, %p130
      %p132 = scmp.ne.s32.totalorder %s120, %s121
      %p133 = scmp.eq.s32.totalorder %s27, 1
      %p134 = por %p132, %p133
      %p136 = scmp.ne.s32.totalorder %s121, %s135
      %p137 = scmp.eq.s32.totalorder %s27, 0
      %p138 = por %p136, %p137
      %s140 = sadd.s32 %s139, 1
      %p143 = scmp.eq.s32.totalorder %s21, 1
      %p144 = scmp.ne.s32.totalorder %s139, %s141
      %p145 = scmp.eq.s32.totalorder %s21, 0
      %p146 = por %p144, %p145
      %p147 = scmp.ne.s32.totalorder %s139, %s141
      %p148 = scmp.eq.s32.totalorder %s26, 1
      %p149 = por %p147, %p148
      %p150 = scmp.ne.s32.totalorder %s141, %s142
      %p151 = scmp.eq.s32.totalorder %s26, 0
      %p152 = por %p150, %p151
      %p153 = scmp.ne.s32.totalorder %s141, %s142
      %p154 = scmp.eq.s32.totalorder %s27, 1
      %p155 = por %p153, %p154
      %p157 = scmp.ne.s32.totalorder %s142, %s156
      %p158 = scmp.eq.s32.totalorder %s27, 0
      %p159 = por %p157, %p158
      %s160 = ssub.s32 %s21, %s28
      %p161 = scmp.eq.s32.totalorder %s160, 0
      %s163 = sadd.s32 %s162, 1
      %s164 = scalar_select %p161, %s162, %s163
      %p167 = pneg %p161
      %p168 = scmp.eq.s32.totalorder %s21, 1
      %p169 = por %p167, %p168
      %p170 = scmp.ne.s32.totalorder %s162, %s165
      %p171 = scmp.eq.s32.totalorder %s21, 0
      %p172 = por %p170, %p171
      %p173 = scmp.ne.s32.totalorder %s162, %s165
      %p174 = scmp.eq.s32.totalorder %s26, 1
      %p175 = por %p173, %p174
      %p176 = scmp.ne.s32.totalorder %s165, %s166
      %p177 = scmp.eq.s32.totalorder %s26, 0
      %p178 = por %p176, %p177
      %p179 = scmp.ne.s32.totalorder %s165, %s166
      %p180 = scmp.eq.s32.totalorder %s27, 1
      %p181 = por %p179, %p180
      %p183 = scmp.ne.s32.totalorder %s166, %s182
      %p184 = scmp.eq.s32.totalorder %s27, 0
      %p185 = por %p183, %p184
      %p186 = scmp.le.s32.totalorder 1, %s21
      %p187 = scmp.lt.s32.totalorder %s21, 3
      %p188 = pnand %p186, %p187
      %p189 = pneg %p188
      // Predicated region
      $region9: #{tpu_custom_call.1} parent=5 // pred_check
        _
      $region10: #{tpu_custom_call.1} parent=5 // pred_check_branch
        %191 = sbr.rel (%p188) target = $region12
      $region11: #{tpu_custom_call.1} parent=5 // pred_region
        %s192 = ssub.s32 %s21, 1
        // Predicated region
        $region13: #{tpu_custom_call.1} parent=11 // pred_check
          %p193 = pneg %p68
        $region14: #{tpu_custom_call.1} parent=11 // pred_check_branch
          %195 = sbr.rel (%p193) target = $region16
        $region15: #{tpu_custom_call.1} parent=11 // pred_region
          %s197 = ssub.s32 36864, 36864
          %198 = vsyncadd [#allocation6], %s197
          %s199 = sshll.u32 [#allocation5], 4
          %s200 = int_to_ptr.vmem [resolvable:$true] %s199
          %205 = dma.hbm_to_vmem [thread:$0]  %s1, 36864, %s200, [#allocation6], 768, 768, 48
        $region16: #{tpu_custom_call.1} parent=11 // pred_fallthru
          _
        // Predicated region
        $region17: #{tpu_custom_call.1} parent=11 // pred_check
          %p206 = pneg %p89
        $region18: #{tpu_custom_call.1} parent=11 // pred_check_branch
          %208 = sbr.rel (%p206) target = $region20
        $region19: #{tpu_custom_call.1} parent=11 // pred_region
          %s210 = ssub.s32 4096, 4096
          %211 = vsyncadd [#allocation6], %s210
          %s212 = sshll.u32 [#allocation7], 4
          %s213 = int_to_ptr.vmem [resolvable:$true] %s212
          %218 = dma.hbm_to_vmem [thread:$0]  %s2, 4096, %s213, [#allocation6], 64, 64, 4
        $region20: #{tpu_custom_call.1} parent=11 // pred_fallthru
          _
        // Predicated region
        $region21: #{tpu_custom_call.1} parent=11 // pred_check
          %p219 = pneg %p110
        $region22: #{tpu_custom_call.1} parent=11 // pred_check_branch
          %221 = sbr.rel (%p219) target = $region24
        $region23: #{tpu_custom_call.1} parent=11 // pred_region
          %s223 = ssub.s32 16, 16
          %224 = vsyncadd [#allocation9], %s223
          %s226 = sshll.u32 [#allocation8], 4
          %s227 = int_to_ptr.vmem [resolvable:$true] %s226
          %229 = dma.hbm_to_vmem [thread:$0]  %s3, 16, %s227, [#allocation9]
        $region24: #{tpu_custom_call.1} parent=11 // pred_fallthru
          _
        // Predicated region
        $region25: #{tpu_custom_call.1} parent=11 // pred_check
          %p230 = pneg %p131
        $region26: #{tpu_custom_call.1} parent=11 // pred_check_branch
          %232 = sbr.rel (%p230) target = $region28
        $region27: #{tpu_custom_call.1} parent=11 // pred_region
          %s234 = ssub.s32 1024, 1024
          %235 = vsyncadd [#allocation9], %s234
          %s236 = sshll.u32 [#allocation10], 4
          %s237 = int_to_ptr.vmem [resolvable:$true] %s236
          %242 = dma.hbm_to_vmem [thread:$0]  %s4, 1024, %s237, [#allocation9], 64, 64, 4
        $region28: #{tpu_custom_call.1} parent=11 // pred_fallthru
          _
        // Predicated region
        $region29: #{tpu_custom_call.1} parent=11 // pred_check
          %p243 = pneg %p152
        $region30: #{tpu_custom_call.1} parent=11 // pred_check_branch
          %245 = sbr.rel (%p243) target = $region32
        $region31: #{tpu_custom_call.1} parent=11 // pred_region
          %s247 = ssub.s32 16, 16
          %248 = vsyncadd [#allocation12], %s247
          %s250 = sshll.u32 [#allocation11], 4
          %s251 = int_to_ptr.vmem [resolvable:$true] %s250
          %253 = dma.hbm_to_vmem [thread:$0]  %s5, 16, %s251, [#allocation12]
        $region32: #{tpu_custom_call.1} parent=11 // pred_fallthru
          _
      $region12: #{tpu_custom_call.1} parent=5 // pred_fallthru
        _
      %p254 = scmp.lt.s32.totalorder %s21, 2
      // Predicated region
      $region33: #{tpu_custom_call.1} parent=5 // pred_check
        %p255 = pneg %p254
      $region34: #{tpu_custom_call.1} parent=5 // pred_check_branch
        %257 = sbr.rel (%p255) target = $region36
      $region35: #{tpu_custom_call.1} parent=5 // pred_region
        // Predicated region
        $region37: #{tpu_custom_call.1} parent=35 // pred_check
          %p258 = pneg %p41
        $region38: #{tpu_custom_call.1} parent=35 // pred_check_branch
          %260 = sbr.rel (%p258) target = $region40
        $region39: #{tpu_custom_call.1} parent=35 // pred_region
          %s261 = sand.u32 %s31, 1
          %s262 = scalar_lea.sflag [#allocation3], %s261
          %s263 = sand.u32 %s31, 1
          %s264 = smul.addr %s263, 384
          %s265 = scalar_lea.vmem [#allocation2], %s264
          %s266 = smul.u32 16, %s21
          %s268 = ssub.s32 6144, 6144
          %269 = vsyncadd %s262, %s268
          %s270 = smul.addr %s266, 3
          %s271 = smul.addr %s270, 128
          %s272 = scalar_lea.hbm %s0, %s271
          %s273 = sshll.u32 %s265, 4
          %s274 = int_to_ptr.vmem [resolvable:$true] %s273
          %279 = dma.hbm_to_vmem [thread:$0]  %s272, 6144, %s274, %s262, 384, 384, 24
        $region40: #{tpu_custom_call.1} parent=35 // pred_fallthru
          _
      $region36: #{tpu_custom_call.1} parent=5 // pred_fallthru
        _
      %p280 = scmp.le.s32.totalorder 1, %s21
      %p281 = scmp.lt.s32.totalorder %s21, 3
      %p282 = pnand %p280, %p281
      %p283 = pneg %p282
      // Predicated region
      $region41: #{tpu_custom_call.1} parent=5 // pred_check
        _
      $region42: #{tpu_custom_call.1} parent=5 // pred_check_branch
        %285 = sbr.rel (%p282) target = $region44
      $region43: #{tpu_custom_call.1} parent=5 // pred_region
        %s286 = ssub.s32 %s21, 1
        %s287 = sand.u32 %s34, 1
        %s288 = scalar_lea.sflag [#allocation3], %s287
        %s289 = sand.u32 %s34, 1
        %s290 = smul.addr %s289, 384
        %s291 = scalar_lea.vmem [#allocation2], %s290
        // Predicated region
        $region45: #{tpu_custom_call.1} parent=43 // pred_check
          %p292 = pneg %p47
        $region46: #{tpu_custom_call.1} parent=43 // pred_check_branch
          %294 = sbr.rel (%p292) target = $region48
        $region47: #{tpu_custom_call.1} parent=43 // pred_region
          %295 = dma.done %s288, 6144
        $region48: #{tpu_custom_call.1} parent=43 // pred_fallthru
          _
        // Predicated region
        $region49: #{tpu_custom_call.1} parent=43 // pred_check
          %p296 = pneg %p68
        $region50: #{tpu_custom_call.1} parent=43 // pred_check_branch
          %298 = sbr.rel (%p296) target = $region52
        $region51: #{tpu_custom_call.1} parent=43 // pred_region
          %299 = dma.done [#allocation6], 36864
        $region52: #{tpu_custom_call.1} parent=43 // pred_fallthru
          _
        // Predicated region
        $region53: #{tpu_custom_call.1} parent=43 // pred_check
          %p300 = pneg %p89
        $region54: #{tpu_custom_call.1} parent=43 // pred_check_branch
          %302 = sbr.rel (%p300) target = $region56
        $region55: #{tpu_custom_call.1} parent=43 // pred_region
          %303 = dma.done [#allocation6], 4096
        $region56: #{tpu_custom_call.1} parent=43 // pred_fallthru
          _
        // Predicated region
        $region57: #{tpu_custom_call.1} parent=43 // pred_check
          %p304 = pneg %p110
        $region58: #{tpu_custom_call.1} parent=43 // pred_check_branch
          %306 = sbr.rel (%p304) target = $region60
        $region59: #{tpu_custom_call.1} parent=43 // pred_region
          %307 = dma.done [#allocation9], 16
        $region60: #{tpu_custom_call.1} parent=43 // pred_fallthru
          _
        // Predicated region
        $region61: #{tpu_custom_call.1} parent=43 // pred_check
          %p308 = pneg %p131
        $region62: #{tpu_custom_call.1} parent=43 // pred_check_branch
          %310 = sbr.rel (%p308) target = $region64
        $region63: #{tpu_custom_call.1} parent=43 // pred_region
          %311 = dma.done [#allocation9], 1024
        $region64: #{tpu_custom_call.1} parent=43 // pred_fallthru
          _
        // Predicated region
        $region65: #{tpu_custom_call.1} parent=43 // pred_check
          %p312 = pneg %p152
        $region66: #{tpu_custom_call.1} parent=43 // pred_check_branch
          %314 = sbr.rel (%p312) target = $region68
        $region67: #{tpu_custom_call.1} parent=43 // pred_region
          %315 = dma.done [#allocation12], 16
        $region68: #{tpu_custom_call.1} parent=43 // pred_fallthru
          _
        %s316 = sand.u32 %s34, 1
        %s317 = scalar_lea.sflag [#allocation3], %s316
        %s318 = sand.u32 %s34, 1
        %s319 = smul.addr %s318, 384
        %s320 = scalar_lea.vmem [#allocation2], %s319
        %p321 = pneg %p47
        %p322 = pneg %p44
        %p323 = pneg %p68
        %p324 = pneg %p65
        %p325 = pneg %p89
        %p326 = pneg %p86
        %p327 = pneg %p110
        %p328 = pneg %p107
        %p329 = pneg %p131
        %p330 = pneg %p128
        %p331 = pneg %p152
        %p332 = pneg %p149
        %p333 = pneg %p178
        %p334 = pneg %p175
        %s335 = sand.u32 %s165, 1
        %s336 = scalar_lea.sflag [#allocation4], %s335
        %s337 = sand.u32 %s165, 1
        %s338 = smul.addr %s337, 128
        %s339 = scalar_lea.vmem [#allocation13], %s338
        %s340 = smul.u32 16, %s26
        %s341 = smul.u32 16, %s26
        %v343 = vld [vmem:[%s291] sm:$0xff]
        %v344 = vld [vmem:[%s291 + $0x8] sm:$0xff]
        %v345 = vld [vmem:[%s291 + $0x10] sm:$0xff]
        %v346 = vld [vmem:[%s291 + $0x18] sm:$0xff]
        %v347 = vld [vmem:[%s291 + $0x20] sm:$0xff]
        %v348 = vld [vmem:[%s291 + $0x28] sm:$0xff]
        %v349 = vld [vmem:[%s291 + $0x30] sm:$0xff]
        %v350 = vld [vmem:[%s291 + $0x38] sm:$0xff]
        %v351 = vld [vmem:[%s291 + $0x40] sm:$0xff]
        %v352 = vld [vmem:[%s291 + $0x48] sm:$0xff]
        %v353 = vld [vmem:[%s291 + $0x50] sm:$0xff]
        %v354 = vld [vmem:[%s291 + $0x58] sm:$0xff]
        %v355 = vld [vmem:[%s291 + $0x60] sm:$0xff]
        %v356 = vld [vmem:[%s291 + $0x68] sm:$0xff]
        %v357 = vld [vmem:[%s291 + $0x70] sm:$0xff]
        %v358 = vld [vmem:[%s291 + $0x78] sm:$0xff]
        %v359 = vld [vmem:[%s291 + $0x80] sm:$0xff]
        %v360 = vld [vmem:[%s291 + $0x88] sm:$0xff]
        %v361 = vld [vmem:[%s291 + $0x90] sm:$0xff]
        %v362 = vld [vmem:[%s291 + $0x98] sm:$0xff]
        %v363 = vld [vmem:[%s291 + $0xa0] sm:$0xff]
        %v364 = vld [vmem:[%s291 + $0xa8] sm:$0xff]
        %v365 = vld [vmem:[%s291 + $0xb0] sm:$0xff]
        %v366 = vld [vmem:[%s291 + $0xb8] sm:$0xff]
        %v367 = vld [vmem:[%s291 + $0xc0] sm:$0xff]
        %v368 = vld [vmem:[%s291 + $0xc8] sm:$0xff]
        %v369 = vld [vmem:[%s291 + $0xd0] sm:$0xff]
        %v370 = vld [vmem:[%s291 + $0xd8] sm:$0xff]
        %v371 = vld [vmem:[%s291 + $0xe0] sm:$0xff]
        %v372 = vld [vmem:[%s291 + $0xe8] sm:$0xff]
        %v373 = vld [vmem:[%s291 + $0xf0] sm:$0xff]
        %v374 = vld [vmem:[%s291 + $0xf8] sm:$0xff]
        %v375 = vld [vmem:[%s291 + $0x100] sm:$0xff]
        %v376 = vld [vmem:[%s291 + $0x108] sm:$0xff]
        %v377 = vld [vmem:[%s291 + $0x110] sm:$0xff]
        %v378 = vld [vmem:[%s291 + $0x118] sm:$0xff]
        %v379 = vld [vmem:[%s291 + $0x120] sm:$0xff]
        %v380 = vld [vmem:[%s291 + $0x128] sm:$0xff]
        %v381 = vld [vmem:[%s291 + $0x130] sm:$0xff]
        %v382 = vld [vmem:[%s291 + $0x138] sm:$0xff]
        %v383 = vld [vmem:[%s291 + $0x140] sm:$0xff]
        %v384 = vld [vmem:[%s291 + $0x148] sm:$0xff]
        %v385 = vld [vmem:[%s291 + $0x150] sm:$0xff]
        %v386 = vld [vmem:[%s291 + $0x158] sm:$0xff]
        %v387 = vld [vmem:[%s291 + $0x160] sm:$0xff]
        %v388 = vld [vmem:[%s291 + $0x168] sm:$0xff]
        %v389 = vld [vmem:[%s291 + $0x170] sm:$0xff]
        %v390 = vld [vmem:[%s291 + $0x178] sm:$0xff]
        %v391 = vpack.c.bf16 %v346, %v343
        %v392 = vpack.c.bf16 %v347, %v344
        %v393 = vpack.c.bf16 %v348, %v345
        %v394 = vpack.c.bf16 %v352, %v349
        %v395 = vpack.c.bf16 %v353, %v350
        %v396 = vpack.c.bf16 %v354, %v351
        %v397 = vpack.c.bf16 %v358, %v355
        %v398 = vpack.c.bf16 %v359, %v356
        %v399 = vpack.c.bf16 %v360, %v357
        %v400 = vpack.c.bf16 %v364, %v361
        %v401 = vpack.c.bf16 %v365, %v362
        %v402 = vpack.c.bf16 %v366, %v363
        %v403 = vpack.c.bf16 %v370, %v367
        %v404 = vpack.c.bf16 %v371, %v368
        %v405 = vpack.c.bf16 %v372, %v369
        %v406 = vpack.c.bf16 %v376, %v373
        %v407 = vpack.c.bf16 %v377, %v374
        %v408 = vpack.c.bf16 %v378, %v375
        %v409 = vpack.c.bf16 %v382, %v379
        %v410 = vpack.c.bf16 %v383, %v380
        %v411 = vpack.c.bf16 %v384, %v381
        %v412 = vpack.c.bf16 %v388, %v385
        %v413 = vpack.c.bf16 %v389, %v386
        %v414 = vpack.c.bf16 %v390, %v387
        %v415 = vld [vmem:[#allocation5] sm:$0xff]
        %v416 = vld [vmem:[#allocation5 + $0x8] sm:$0xff]
        %v417 = vld [vmem:[#allocation5 + $0x10] sm:$0xff]
        %v418 = vld [vmem:[#allocation5 + $0x18] sm:$0xff]
        %v419 = vld [vmem:[#allocation5 + $0x20] sm:$0xff]
        %v420 = vld [vmem:[#allocation5 + $0x28] sm:$0xff]
        %v421 = vld [vmem:[#allocation5 + $0x30] sm:$0xff]
        %v422 = vld [vmem:[#allocation5 + $0x38] sm:$0xff]
        %v423 = vld [vmem:[#allocation5 + $0x40] sm:$0xff]
        %v424 = vld [vmem:[#allocation5 + $0x48] sm:$0xff]
        %v425 = vld [vmem:[#allocation5 + $0x50] sm:$0xff]
        %v426 = vld [vmem:[#allocation5 + $0x58] sm:$0xff]
        %v427 = vld [vmem:[#allocation5 + $0x60] sm:$0xff]
        %v428 = vld [vmem:[#allocation5 + $0x68] sm:$0xff]
        %v429 = vld [vmem:[#allocation5 + $0x70] sm:$0xff]
        %v430 = vld [vmem:[#allocation5 + $0x78] sm:$0xff]
        %v431 = vld [vmem:[#allocation5 + $0x80] sm:$0xff]
        %v432 = vld [vmem:[#allocation5 + $0x88] sm:$0xff]
        %v433 = vld [vmem:[#allocation5 + $0x90] sm:$0xff]
        %v434 = vld [vmem:[#allocation5 + $0x98] sm:$0xff]
        %v435 = vld [vmem:[#allocation5 + $0xa0] sm:$0xff]
        %v436 = vld [vmem:[#allocation5 + $0xa8] sm:$0xff]
        %v437 = vld [vmem:[#allocation5 + $0xb0] sm:$0xff]
        %v438 = vld [vmem:[#allocation5 + $0xb8] sm:$0xff]
        %v439 = vld [vmem:[#allocation5 + $0xc0] sm:$0xff]
        %v440 = vld [vmem:[#allocation5 + $0xc8] sm:$0xff]
        %v441 = vld [vmem:[#allocation5 + $0xd0] sm:$0xff]
        %v442 = vld [vmem:[#allocation5 + $0xd8] sm:$0xff]
        %v443 = vld [vmem:[#allocation5 + $0xe0] sm:$0xff]
        %v444 = vld [vmem:[#allocation5 + $0xe8] sm:$0xff]
        %v445 = vld [vmem:[#allocation5 + $0xf0] sm:$0xff]
        %v446 = vld [vmem:[#allocation5 + $0xf8] sm:$0xff]
        %v447 = vld [vmem:[#allocation5 + $0x100] sm:$0xff]
        %v448 = vld [vmem:[#allocation5 + $0x108] sm:$0xff]
        %v449 = vld [vmem:[#allocation5 + $0x110] sm:$0xff]
        %v450 = vld [vmem:[#allocation5 + $0x118] sm:$0xff]
        %v451 = vld [vmem:[#allocation5 + $0x120] sm:$0xff]
        %v452 = vld [vmem:[#allocation5 + $0x128] sm:$0xff]
        %v453 = vld [vmem:[#allocation5 + $0x130] sm:$0xff]
        %v454 = vld [vmem:[#allocation5 + $0x138] sm:$0xff]
        %v455 = vld [vmem:[#allocation5 + $0x140] sm:$0xff]
        %v456 = vld [vmem:[#allocation5 + $0x148] sm:$0xff]
        %v457 = vld [vmem:[#allocation5 + $0x150] sm:$0xff]
        %v458 = vld [vmem:[#allocation5 + $0x158] sm:$0xff]
        %v459 = vld [vmem:[#allocation5 + $0x160] sm:$0xff]
        %v460 = vld [vmem:[#allocation5 + $0x168] sm:$0xff]
        %v461 = vld [vmem:[#allocation5 + $0x170] sm:$0xff]
        %v462 = vld [vmem:[#allocation5 + $0x178] sm:$0xff]
        %v463 = vld [vmem:[#allocation5 + $0x180] sm:$0xff]
        %v464 = vld [vmem:[#allocation5 + $0x188] sm:$0xff]
        %v465 = vld [vmem:[#allocation5 + $0x190] sm:$0xff]
        %v466 = vld [vmem:[#allocation5 + $0x198] sm:$0xff]
        %v467 = vld [vmem:[#allocation5 + $0x1a0] sm:$0xff]
        %v468 = vld [vmem:[#allocation5 + $0x1a8] sm:$0xff]
        %v469 = vld [vmem:[#allocation5 + $0x1b0] sm:$0xff]
        %v470 = vld [vmem:[#allocation5 + $0x1b8] sm:$0xff]
        %v471 = vld [vmem:[#allocation5 + $0x1c0] sm:$0xff]
        %v472 = vld [vmem:[#allocation5 + $0x1c8] sm:$0xff]
        %v473 = vld [vmem:[#allocation5 + $0x1d0] sm:$0xff]
        %v474 = vld [vmem:[#allocation5 + $0x1d8] sm:$0xff]
        %v475 = vld [vmem:[#allocation5 + $0x1e0] sm:$0xff]
        %v476 = vld [vmem:[#allocation5 + $0x1e8] sm:$0xff]
        %v477 = vld [vmem:[#allocation5 + $0x1f0] sm:$0xff]
        %v478 = vld [vmem:[#allocation5 + $0x1f8] sm:$0xff]
        %v479 = vld [vmem:[#allocation5 + $0x200] sm:$0xff]
        %v480 = vld [vmem:[#allocation5 + $0x208] sm:$0xff]
        %v481 = vld [vmem:[#allocation5 + $0x210] sm:$0xff]
        %v482 = vld [vmem:[#allocation5 + $0x218] sm:$0xff]
        %v483 = vld [vmem:[#allocation5 + $0x220] sm:$0xff]
        %v484 = vld [vmem:[#allocation5 + $0x228] sm:$0xff]
        %v485 = vld [vmem:[#allocation5 + $0x230] sm:$0xff]
        %v486 = vld [vmem:[#allocation5 + $0x238] sm:$0xff]
        %v487 = vld [vmem:[#allocation5 + $0x240] sm:$0xff]
        %v488 = vld [vmem:[#allocation5 + $0x248] sm:$0xff]
        %v489 = vld [vmem:[#allocation5 + $0x250] sm:$0xff]
        %v490 = vld [vmem:[#allocation5 + $0x258] sm:$0xff]
        %v491 = vld [vmem:[#allocation5 + $0x260] sm:$0xff]
        %v492 = vld [vmem:[#allocation5 + $0x268] sm:$0xff]
        %v493 = vld [vmem:[#allocation5 + $0x270] sm:$0xff]
        %v494 = vld [vmem:[#allocation5 + $0x278] sm:$0xff]
        %v495 = vld [vmem:[#allocation5 + $0x280] sm:$0xff]
        %v496 = vld [vmem:[#allocation5 + $0x288] sm:$0xff]
        %v497 = vld [vmem:[#allocation5 + $0x290] sm:$0xff]
        %v498 = vld [vmem:[#allocation5 + $0x298] sm:$0xff]
        %v499 = vld [vmem:[#allocation5 + $0x2a0] sm:$0xff]
        %v500 = vld [vmem:[#allocation5 + $0x2a8] sm:$0xff]
        %v501 = vld [vmem:[#allocation5 + $0x2b0] sm:$0xff]
        %v502 = vld [vmem:[#allocation5 + $0x2b8] sm:$0xff]
        %v503 = vld [vmem:[#allocation5 + $0x2c0] sm:$0xff]
        %v504 = vld [vmem:[#allocation5 + $0x2c8] sm:$0xff]
        %v505 = vld [vmem:[#allocation5 + $0x2d0] sm:$0xff]
        %v506 = vld [vmem:[#allocation5 + $0x2d8] sm:$0xff]
        %v507 = vld [vmem:[#allocation5 + $0x2e0] sm:$0xff]
        %v508 = vld [vmem:[#allocation5 + $0x2e8] sm:$0xff]
        %v509 = vld [vmem:[#allocation5 + $0x2f0] sm:$0xff]
        %v510 = vld [vmem:[#allocation5 + $0x2f8] sm:$0xff]
        %v511 = vld [vmem:[#allocation5 + $0x300] sm:$0xff]
        %v512 = vld [vmem:[#allocation5 + $0x308] sm:$0xff]
        %v513 = vld [vmem:[#allocation5 + $0x310] sm:$0xff]
        %v514 = vld [vmem:[#allocation5 + $0x318] sm:$0xff]
        %v515 = vld [vmem:[#allocation5 + $0x320] sm:$0xff]
        %v516 = vld [vmem:[#allocation5 + $0x328] sm:$0xff]
        %v517 = vld [vmem:[#allocation5 + $0x330] sm:$0xff]
        %v518 = vld [vmem:[#allocation5 + $0x338] sm:$0xff]
        %v519 = vld [vmem:[#allocation5 + $0x340] sm:$0xff]
        %v520 = vld [vmem:[#allocation5 + $0x348] sm:$0xff]
        %v521 = vld [vmem:[#allocation5 + $0x350] sm:$0xff]
        %v522 = vld [vmem:[#allocation5 + $0x358] sm:$0xff]
        %v523 = vld [vmem:[#allocation5 + $0x360] sm:$0xff]
        %v524 = vld [vmem:[#allocation5 + $0x368] sm:$0xff]
        %v525 = vld [vmem:[#allocation5 + $0x370] sm:$0xff]
        %v526 = vld [vmem:[#allocation5 + $0x378] sm:$0xff]
        %v527 = vld [vmem:[#allocation5 + $0x380] sm:$0xff]
        %v528 = vld [vmem:[#allocation5 + $0x388] sm:$0xff]
        %v529 = vld [vmem:[#allocation5 + $0x390] sm:$0xff]
        %v530 = vld [vmem:[#allocation5 + $0x398] sm:$0xff]
        %v531 = vld [vmem:[#allocation5 + $0x3a0] sm:$0xff]
        %v532 = vld [vmem:[#allocation5 + $0x3a8] sm:$0xff]
        %v533 = vld [vmem:[#allocation5 + $0x3b0] sm:$0xff]
        %v534 = vld [vmem:[#allocation5 + $0x3b8] sm:$0xff]
        %v535 = vld [vmem:[#allocation5 + $0x3c0] sm:$0xff]
        %v536 = vld [vmem:[#allocation5 + $0x3c8] sm:$0xff]
        %v537 = vld [vmem:[#allocation5 + $0x3d0] sm:$0xff]
        %v538 = vld [vmem:[#allocation5 + $0x3d8] sm:$0xff]
        %v539 = vld [vmem:[#allocation5 + $0x3e0] sm:$0xff]
        %v540 = vld [vmem:[#allocation5 + $0x3e8] sm:$0xff]
        %v541 = vld [vmem:[#allocation5 + $0x3f0] sm:$0xff]
        %v542 = vld [vmem:[#allocation5 + $0x3f8] sm:$0xff]
        %v543 = vld [vmem:[#allocation5 + $0x400] sm:$0xff]
        %v544 = vld [vmem:[#allocation5 + $0x408] sm:$0xff]
        %v545 = vld [vmem:[#allocation5 + $0x410] sm:$0xff]
        %v546 = vld [vmem:[#allocation5 + $0x418] sm:$0xff]
        %v547 = vld [vmem:[#allocation5 + $0x420] sm:$0xff]
        %v548 = vld [vmem:[#allocation5 + $0x428] sm:$0xff]
        %v549 = vld [vmem:[#allocation5 + $0x430] sm:$0xff]
        %v550 = vld [vmem:[#allocation5 + $0x438] sm:$0xff]
        %v551 = vld [vmem:[#allocation5 + $0x440] sm:$0xff]
        %v552 = vld [vmem:[#allocation5 + $0x448] sm:$0xff]
        %v553 = vld [vmem:[#allocation5 + $0x450] sm:$0xff]
        %v554 = vld [vmem:[#allocation5 + $0x458] sm:$0xff]
        %v555 = vld [vmem:[#allocation5 + $0x460] sm:$0xff]
        %v556 = vld [vmem:[#allocation5 + $0x468] sm:$0xff]
        %v557 = vld [vmem:[#allocation5 + $0x470] sm:$0xff]
        %v558 = vld [vmem:[#allocation5 + $0x478] sm:$0xff]
        %v559 = vld [vmem:[#allocation5 + $0x480] sm:$0xff]
        %v560 = vld [vmem:[#allocation5 + $0x488] sm:$0xff]
        %v561 = vld [vmem:[#allocation5 + $0x490] sm:$0xff]
        %v562 = vld [vmem:[#allocation5 + $0x498] sm:$0xff]
        %v563 = vld [vmem:[#allocation5 + $0x4a0] sm:$0xff]
        %v564 = vld [vmem:[#allocation5 + $0x4a8] sm:$0xff]
        %v565 = vld [vmem:[#allocation5 + $0x4b0] sm:$0xff]
        %v566 = vld [vmem:[#allocation5 + $0x4b8] sm:$0xff]
        %v567 = vld [vmem:[#allocation5 + $0x4c0] sm:$0xff]
        %v568 = vld [vmem:[#allocation5 + $0x4c8] sm:$0xff]
        %v569 = vld [vmem:[#allocation5 + $0x4d0] sm:$0xff]
        %v570 = vld [vmem:[#allocation5 + $0x4d8] sm:$0xff]
        %v571 = vld [vmem:[#allocation5 + $0x4e0] sm:$0xff]
        %v572 = vld [vmem:[#allocation5 + $0x4e8] sm:$0xff]
        %v573 = vld [vmem:[#allocation5 + $0x4f0] sm:$0xff]
        %v574 = vld [vmem:[#allocation5 + $0x4f8] sm:$0xff]
        %v575 = vld [vmem:[#allocation5 + $0x500] sm:$0xff]
        %v576 = vld [vmem:[#allocation5 + $0x508] sm:$0xff]
        %v577 = vld [vmem:[#allocation5 + $0x510] sm:$0xff]
        %v578 = vld [vmem:[#allocation5 + $0x518] sm:$0xff]
        %v579 = vld [vmem:[#allocation5 + $0x520] sm:$0xff]
        %v580 = vld [vmem:[#allocation5 + $0x528] sm:$0xff]
        %v581 = vld [vmem:[#allocation5 + $0x530] sm:$0xff]
        %v582 = vld [vmem:[#allocation5 + $0x538] sm:$0xff]
        %v583 = vld [vmem:[#allocation5 + $0x540] sm:$0xff]
        %v584 = vld [vmem:[#allocation5 + $0x548] sm:$0xff]
        %v585 = vld [vmem:[#allocation5 + $0x550] sm:$0xff]
        %v586 = vld [vmem:[#allocation5 + $0x558] sm:$0xff]
        %v587 = vld [vmem:[#allocation5 + $0x560] sm:$0xff]
        %v588 = vld [vmem:[#allocation5 + $0x568] sm:$0xff]
        %v589 = vld [vmem:[#allocation5 + $0x570] sm:$0xff]
        %v590 = vld [vmem:[#allocation5 + $0x578] sm:$0xff]
        %v591 = vld [vmem:[#allocation5 + $0x580] sm:$0xff]
        %v592 = vld [vmem:[#allocation5 + $0x588] sm:$0xff]
        %v593 = vld [vmem:[#allocation5 + $0x590] sm:$0xff]
        %v594 = vld [vmem:[#allocation5 + $0x598] sm:$0xff]
        %v595 = vld [vmem:[#allocation5 + $0x5a0] sm:$0xff]
        %v596 = vld [vmem:[#allocation5 + $0x5a8] sm:$0xff]
        %v597 = vld [vmem:[#allocation5 + $0x5b0] sm:$0xff]
        %v598 = vld [vmem:[#allocation5 + $0x5b8] sm:$0xff]
        %v599 = vld [vmem:[#allocation5 + $0x5c0] sm:$0xff]
        %v600 = vld [vmem:[#allocation5 + $0x5c8] sm:$0xff]
        %v601 = vld [vmem:[#allocation5 + $0x5d0] sm:$0xff]
        %v602 = vld [vmem:[#allocation5 + $0x5d8] sm:$0xff]
        %v603 = vld [vmem:[#allocation5 + $0x5e0] sm:$0xff]
        %v604 = vld [vmem:[#allocation5 + $0x5e8] sm:$0xff]
        %v605 = vld [vmem:[#allocation5 + $0x5f0] sm:$0xff]
        %v606 = vld [vmem:[#allocation5 + $0x5f8] sm:$0xff]
        %v607 = vld [vmem:[#allocation5 + $0x600] sm:$0xff]
        %v608 = vld [vmem:[#allocation5 + $0x608] sm:$0xff]
        %v609 = vld [vmem:[#allocation5 + $0x610] sm:$0xff]
        %v610 = vld [vmem:[#allocation5 + $0x618] sm:$0xff]
        %v611 = vld [vmem:[#allocation5 + $0x620] sm:$0xff]
        %v612 = vld [vmem:[#allocation5 + $0x628] sm:$0xff]
        %v613 = vld [vmem:[#allocation5 + $0x630] sm:$0xff]
        %v614 = vld [vmem:[#allocation5 + $0x638] sm:$0xff]
        %v615 = vld [vmem:[#allocation5 + $0x640] sm:$0xff]
        %v616 = vld [vmem:[#allocation5 + $0x648] sm:$0xff]
        %v617 = vld [vmem:[#allocation5 + $0x650] sm:$0xff]
        %v618 = vld [vmem:[#allocation5 + $0x658] sm:$0xff]
        %v619 = vld [vmem:[#allocation5 + $0x660] sm:$0xff]
        %v620 = vld [vmem:[#allocation5 + $0x668] sm:$0xff]
        %v621 = vld [vmem:[#allocation5 + $0x670] sm:$0xff]
        %v622 = vld [vmem:[#allocation5 + $0x678] sm:$0xff]
        %v623 = vld [vmem:[#allocation5 + $0x680] sm:$0xff]
        %v624 = vld [vmem:[#allocation5 + $0x688] sm:$0xff]
        %v625 = vld [vmem:[#allocation5 + $0x690] sm:$0xff]
        %v626 = vld [vmem:[#allocation5 + $0x698] sm:$0xff]
        %v627 = vld [vmem:[#allocation5 + $0x6a0] sm:$0xff]
        %v628 = vld [vmem:[#allocation5 + $0x6a8] sm:$0xff]
        %v629 = vld [vmem:[#allocation5 + $0x6b0] sm:$0xff]
        %v630 = vld [vmem:[#allocation5 + $0x6b8] sm:$0xff]
        %v631 = vld [vmem:[#allocation5 + $0x6c0] sm:$0xff]
        %v632 = vld [vmem:[#allocation5 + $0x6c8] sm:$0xff]
        %v633 = vld [vmem:[#allocation5 + $0x6d0] sm:$0xff]
        %v634 = vld [vmem:[#allocation5 + $0x6d8] sm:$0xff]
        %v635 = vld [vmem:[#allocation5 + $0x6e0] sm:$0xff]
        %v636 = vld [vmem:[#allocation5 + $0x6e8] sm:$0xff]
        %v637 = vld [vmem:[#allocation5 + $0x6f0] sm:$0xff]
        %v638 = vld [vmem:[#allocation5 + $0x6f8] sm:$0xff]
        %v639 = vld [vmem:[#allocation5 + $0x700] sm:$0xff]
        %v640 = vld [vmem:[#allocation5 + $0x708] sm:$0xff]
        %v641 = vld [vmem:[#allocation5 + $0x710] sm:$0xff]
        %v642 = vld [vmem:[#allocation5 + $0x718] sm:$0xff]
        %v643 = vld [vmem:[#allocation5 + $0x720] sm:$0xff]
        %v644 = vld [vmem:[#allocation5 + $0x728] sm:$0xff]
        %v645 = vld [vmem:[#allocation5 + $0x730] sm:$0xff]
        %v646 = vld [vmem:[#allocation5 + $0x738] sm:$0xff]
        %v647 = vld [vmem:[#allocation5 + $0x740] sm:$0xff]
        %v648 = vld [vmem:[#allocation5 + $0x748] sm:$0xff]
        %v649 = vld [vmem:[#allocation5 + $0x750] sm:$0xff]
        %v650 = vld [vmem:[#allocation5 + $0x758] sm:$0xff]
        %v651 = vld [vmem:[#allocation5 + $0x760] sm:$0xff]
        %v652 = vld [vmem:[#allocation5 + $0x768] sm:$0xff]
        %v653 = vld [vmem:[#allocation5 + $0x770] sm:$0xff]
        %v654 = vld [vmem:[#allocation5 + $0x778] sm:$0xff]
        %v655 = vld [vmem:[#allocation5 + $0x780] sm:$0xff]
        %v656 = vld [vmem:[#allocation5 + $0x788] sm:$0xff]
        %v657 = vld [vmem:[#allocation5 + $0x790] sm:$0xff]
        %v658 = vld [vmem:[#allocation5 + $0x798] sm:$0xff]
        %v659 = vld [vmem:[#allocation5 + $0x7a0] sm:$0xff]
        %v660 = vld [vmem:[#allocation5 + $0x7a8] sm:$0xff]
        %v661 = vld [vmem:[#allocation5 + $0x7b0] sm:$0xff]
        %v662 = vld [vmem:[#allocation5 + $0x7b8] sm:$0xff]
        %v663 = vld [vmem:[#allocation5 + $0x7c0] sm:$0xff]
        %v664 = vld [vmem:[#allocation5 + $0x7c8] sm:$0xff]
        %v665 = vld [vmem:[#allocation5 + $0x7d0] sm:$0xff]
        %v666 = vld [vmem:[#allocation5 + $0x7d8] sm:$0xff]
        %v667 = vld [vmem:[#allocation5 + $0x7e0] sm:$0xff]
        %v668 = vld [vmem:[#allocation5 + $0x7e8] sm:$0xff]
        %v669 = vld [vmem:[#allocation5 + $0x7f0] sm:$0xff]
        %v670 = vld [vmem:[#allocation5 + $0x7f8] sm:$0xff]
        %v671 = vld [vmem:[#allocation5 + $0x800] sm:$0xff]
        %v672 = vld [vmem:[#allocation5 + $0x808] sm:$0xff]
        %v673 = vld [vmem:[#allocation5 + $0x810] sm:$0xff]
        %v674 = vld [vmem:[#allocation5 + $0x818] sm:$0xff]
        %v675 = vld [vmem:[#allocation5 + $0x820] sm:$0xff]
        %v676 = vld [vmem:[#allocation5 + $0x828] sm:$0xff]
        %v677 = vld [vmem:[#allocation5 + $0x830] sm:$0xff]
        %v678 = vld [vmem:[#allocation5 + $0x838] sm:$0xff]
        %v679 = vld [vmem:[#allocation5 + $0x840] sm:$0xff]
        %v680 = vld [vmem:[#allocation5 + $0x848] sm:$0xff]
        %v681 = vld [vmem:[#allocation5 + $0x850] sm:$0xff]
        %v682 = vld [vmem:[#allocation5 + $0x858] sm:$0xff]
        %v683 = vld [vmem:[#allocation5 + $0x860] sm:$0xff]
        %v684 = vld [vmem:[#allocation5 + $0x868] sm:$0xff]
        %v685 = vld [vmem:[#allocation5 + $0x870] sm:$0xff]
        %v686 = vld [vmem:[#allocation5 + $0x878] sm:$0xff]
        %v687 = vld [vmem:[#allocation5 + $0x880] sm:$0xff]
        %v688 = vld [vmem:[#allocation5 + $0x888] sm:$0xff]
        %v689 = vld [vmem:[#allocation5 + $0x890] sm:$0xff]
        %v690 = vld [vmem:[#allocation5 + $0x898] sm:$0xff]
        %v691 = vld [vmem:[#allocation5 + $0x8a0] sm:$0xff]
        %v692 = vld [vmem:[#allocation5 + $0x8a8] sm:$0xff]
        %v693 = vld [vmem:[#allocation5 + $0x8b0] sm:$0xff]
        %v694 = vld [vmem:[#allocation5 + $0x8b8] sm:$0xff]
        %v695 = vld [vmem:[#allocation5 + $0x8c0] sm:$0xff]
        %v696 = vld [vmem:[#allocation5 + $0x8c8] sm:$0xff]
        %v697 = vld [vmem:[#allocation5 + $0x8d0] sm:$0xff]
        %v698 = vld [vmem:[#allocation5 + $0x8d8] sm:$0xff]
        %v699 = vld [vmem:[#allocation5 + $0x8e0] sm:$0xff]
        %v700 = vld [vmem:[#allocation5 + $0x8e8] sm:$0xff]
        %v701 = vld [vmem:[#allocation5 + $0x8f0] sm:$0xff]
        %v702 = vld [vmem:[#allocation5 + $0x8f8] sm:$0xff]
        %v991 = vunpack.c.l.b16 %v415
        %v992 = vunpack.c.h.b16 %v415
        %v993 = vunpack.c.l.b16 %v416
        %v994 = vunpack.c.h.b16 %v416
        %v995 = vunpack.c.l.b16 %v417
        %v996 = vunpack.c.h.b16 %v417
        %v997 = vunpack.c.l.b16 %v418
        %v998 = vunpack.c.h.b16 %v418
        %v999 = vunpack.c.l.b16 %v419
        %v1000 = vunpack.c.h.b16 %v419
        %v1001 = vunpack.c.l.b16 %v420
        %v1002 = vunpack.c.h.b16 %v420
        %v1003 = vunpack.c.l.b16 %v421
        %v1004 = vunpack.c.h.b16 %v421
        %v1005 = vunpack.c.l.b16 %v422
        %v1006 = vunpack.c.h.b16 %v422
        %v1007 = vunpack.c.l.b16 %v423
        %v1008 = vunpack.c.h.b16 %v423
        %v1009 = vunpack.c.l.b16 %v424
        %v1010 = vunpack.c.h.b16 %v424
        %v1011 = vunpack.c.l.b16 %v425
        %v1012 = vunpack.c.h.b16 %v425
        %v1013 = vunpack.c.l.b16 %v426
        %v1014 = vunpack.c.h.b16 %v426
        %v1015 = vunpack.c.l.b16 %v427
        %v1016 = vunpack.c.h.b16 %v427
        %v1017 = vunpack.c.l.b16 %v428
        %v1018 = vunpack.c.h.b16 %v428
        %v1019 = vunpack.c.l.b16 %v429
        %v1020 = vunpack.c.h.b16 %v429
        %v1021 = vunpack.c.l.b16 %v430
        %v1022 = vunpack.c.h.b16 %v430
        %v1023 = vunpack.c.l.b16 %v431
        %v1024 = vunpack.c.h.b16 %v431
        %v1025 = vunpack.c.l.b16 %v432
        %v1026 = vunpack.c.h.b16 %v432
        %v1027 = vunpack.c.l.b16 %v433
        %v1028 = vunpack.c.h.b16 %v433
        %v1029 = vunpack.c.l.b16 %v434
        %v1030 = vunpack.c.h.b16 %v434
        %v1031 = vunpack.c.l.b16 %v435
        %v1032 = vunpack.c.h.b16 %v435
        %v1033 = vunpack.c.l.b16 %v436
        %v1034 = vunpack.c.h.b16 %v436
        %v1035 = vunpack.c.l.b16 %v437
        %v1036 = vunpack.c.h.b16 %v437
        %v1037 = vunpack.c.l.b16 %v438
        %v1038 = vunpack.c.h.b16 %v438
        %v1039 = vunpack.c.l.b16 %v439
        %v1040 = vunpack.c.h.b16 %v439
        %v1041 = vunpack.c.l.b16 %v440
        %v1042 = vunpack.c.h.b16 %v440
        %v1043 = vunpack.c.l.b16 %v441
        %v1044 = vunpack.c.h.b16 %v441
        %v1045 = vunpack.c.l.b16 %v442
        %v1046 = vunpack.c.h.b16 %v442
        %v1047 = vunpack.c.l.b16 %v443
        %v1048 = vunpack.c.h.b16 %v443
        %v1049 = vunpack.c.l.b16 %v444
        %v1050 = vunpack.c.h.b16 %v444
        %v1051 = vunpack.c.l.b16 %v445
        %v1052 = vunpack.c.h.b16 %v445
        %v1053 = vunpack.c.l.b16 %v446
        %v1054 = vunpack.c.h.b16 %v446
        %v1055 = vunpack.c.l.b16 %v447
        %v1056 = vunpack.c.h.b16 %v447
        %v1057 = vunpack.c.l.b16 %v448
        %v1058 = vunpack.c.h.b16 %v448
        %v1059 = vunpack.c.l.b16 %v449
        %v1060 = vunpack.c.h.b16 %v449
        %v1061 = vunpack.c.l.b16 %v450
        %v1062 = vunpack.c.h.b16 %v450
        %v1063 = vunpack.c.l.b16 %v451
        %v1064 = vunpack.c.h.b16 %v451
        %v1065 = vunpack.c.l.b16 %v452
        %v1066 = vunpack.c.h.b16 %v452
        %v1067 = vunpack.c.l.b16 %v453
        %v1068 = vunpack.c.h.b16 %v453
        %v1069 = vunpack.c.l.b16 %v454
        %v1070 = vunpack.c.h.b16 %v454
        %v1071 = vunpack.c.l.b16 %v455
        %v1072 = vunpack.c.h.b16 %v455
        %v1073 = vunpack.c.l.b16 %v456
        %v1074 = vunpack.c.h.b16 %v456
        %v1075 = vunpack.c.l.b16 %v457
        %v1076 = vunpack.c.h.b16 %v457
        %v1077 = vunpack.c.l.b16 %v458
        %v1078 = vunpack.c.h.b16 %v458
        %v1079 = vunpack.c.l.b16 %v459
        %v1080 = vunpack.c.h.b16 %v459
        %v1081 = vunpack.c.l.b16 %v460
        %v1082 = vunpack.c.h.b16 %v460
        %v1083 = vunpack.c.l.b16 %v461
        %v1084 = vunpack.c.h.b16 %v461
        %v1085 = vunpack.c.l.b16 %v462
        %v1086 = vunpack.c.h.b16 %v462
        %v1087 = vunpack.c.l.b16 %v463
        %v1088 = vunpack.c.h.b16 %v463
        %v1089 = vunpack.c.l.b16 %v464
        %v1090 = vunpack.c.h.b16 %v464
        %v1091 = vunpack.c.l.b16 %v465
        %v1092 = vunpack.c.h.b16 %v465
        %v1093 = vunpack.c.l.b16 %v466
        %v1094 = vunpack.c.h.b16 %v466
        %v1095 = vunpack.c.l.b16 %v467
        %v1096 = vunpack.c.h.b16 %v467
        %v1097 = vunpack.c.l.b16 %v468
        %v1098 = vunpack.c.h.b16 %v468
        %v1099 = vunpack.c.l.b16 %v469
        %v1100 = vunpack.c.h.b16 %v469
        %v1101 = vunpack.c.l.b16 %v470
        %v1102 = vunpack.c.h.b16 %v470
        %v1103 = vunpack.c.l.b16 %v471
        %v1104 = vunpack.c.h.b16 %v471
        %v1105 = vunpack.c.l.b16 %v472
        %v1106 = vunpack.c.h.b16 %v472
        %v1107 = vunpack.c.l.b16 %v473
        %v1108 = vunpack.c.h.b16 %v473
        %v1109 = vunpack.c.l.b16 %v474
        %v1110 = vunpack.c.h.b16 %v474
        %v1111 = vunpack.c.l.b16 %v475
        %v1112 = vunpack.c.h.b16 %v475
        %v1113 = vunpack.c.l.b16 %v476
        %v1114 = vunpack.c.h.b16 %v476
        %v1115 = vunpack.c.l.b16 %v477
        %v1116 = vunpack.c.h.b16 %v477
        %v1117 = vunpack.c.l.b16 %v478
        %v1118 = vunpack.c.h.b16 %v478
        %v1119 = vunpack.c.l.b16 %v479
        %v1120 = vunpack.c.h.b16 %v479
        %v1121 = vunpack.c.l.b16 %v480
        %v1122 = vunpack.c.h.b16 %v480
        %v1123 = vunpack.c.l.b16 %v481
        %v1124 = vunpack.c.h.b16 %v481
        %v1125 = vunpack.c.l.b16 %v482
        %v1126 = vunpack.c.h.b16 %v482
        %v1127 = vunpack.c.l.b16 %v483
        %v1128 = vunpack.c.h.b16 %v483
        %v1129 = vunpack.c.l.b16 %v484
        %v1130 = vunpack.c.h.b16 %v484
        %v1131 = vunpack.c.l.b16 %v485
        %v1132 = vunpack.c.h.b16 %v485
        %v1133 = vunpack.c.l.b16 %v486
        %v1134 = vunpack.c.h.b16 %v486
        %v1135 = vunpack.c.l.b16 %v487
        %v1136 = vunpack.c.h.b16 %v487
        %v1137 = vunpack.c.l.b16 %v488
        %v1138 = vunpack.c.h.b16 %v488
        %v1139 = vunpack.c.l.b16 %v489
        %v1140 = vunpack.c.h.b16 %v489
        %v1141 = vunpack.c.l.b16 %v490
        %v1142 = vunpack.c.h.b16 %v490
        %v1143 = vunpack.c.l.b16 %v491
        %v1144 = vunpack.c.h.b16 %v491
        %v1145 = vunpack.c.l.b16 %v492
        %v1146 = vunpack.c.h.b16 %v492
        %v1147 = vunpack.c.l.b16 %v493
        %v1148 = vunpack.c.h.b16 %v493
        %v1149 = vunpack.c.l.b16 %v494
        %v1150 = vunpack.c.h.b16 %v494
        %v1151 = vunpack.c.l.b16 %v495
        %v1152 = vunpack.c.h.b16 %v495
        %v1153 = vunpack.c.l.b16 %v496
        %v1154 = vunpack.c.h.b16 %v496
        %v1155 = vunpack.c.l.b16 %v497
        %v1156 = vunpack.c.h.b16 %v497
        %v1157 = vunpack.c.l.b16 %v498
        %v1158 = vunpack.c.h.b16 %v498
        %v1159 = vunpack.c.l.b16 %v499
        %v1160 = vunpack.c.h.b16 %v499
        %v1161 = vunpack.c.l.b16 %v500
        %v1162 = vunpack.c.h.b16 %v500
        %v1163 = vunpack.c.l.b16 %v501
        %v1164 = vunpack.c.h.b16 %v501
        %v1165 = vunpack.c.l.b16 %v502
        %v1166 = vunpack.c.h.b16 %v502
        %v1167 = vunpack.c.l.b16 %v503
        %v1168 = vunpack.c.h.b16 %v503
        %v1169 = vunpack.c.l.b16 %v504
        %v1170 = vunpack.c.h.b16 %v504
        %v1171 = vunpack.c.l.b16 %v505
        %v1172 = vunpack.c.h.b16 %v505
        %v1173 = vunpack.c.l.b16 %v506
        %v1174 = vunpack.c.h.b16 %v506
        %v1175 = vunpack.c.l.b16 %v507
        %v1176 = vunpack.c.h.b16 %v507
        %v1177 = vunpack.c.l.b16 %v508
        %v1178 = vunpack.c.h.b16 %v508
        %v1179 = vunpack.c.l.b16 %v509
        %v1180 = vunpack.c.h.b16 %v509
        %v1181 = vunpack.c.l.b16 %v510
        %v1182 = vunpack.c.h.b16 %v510
        %v1183 = vunpack.c.l.b16 %v511
        %v1184 = vunpack.c.h.b16 %v511
        %v1185 = vunpack.c.l.b16 %v512
        %v1186 = vunpack.c.h.b16 %v512
        %v1187 = vunpack.c.l.b16 %v513
        %v1188 = vunpack.c.h.b16 %v513
        %v1189 = vunpack.c.l.b16 %v514
        %v1190 = vunpack.c.h.b16 %v514
        %v1191 = vunpack.c.l.b16 %v515
        %v1192 = vunpack.c.h.b16 %v515
        %v1193 = vunpack.c.l.b16 %v516
        %v1194 = vunpack.c.h.b16 %v516
        %v1195 = vunpack.c.l.b16 %v517
        %v1196 = vunpack.c.h.b16 %v517
        %v1197 = vunpack.c.l.b16 %v518
        %v1198 = vunpack.c.h.b16 %v518
        %v1199 = vunpack.c.l.b16 %v519
        %v1200 = vunpack.c.h.b16 %v519
        %v1201 = vunpack.c.l.b16 %v520
        %v1202 = vunpack.c.h.b16 %v520
        %v1203 = vunpack.c.l.b16 %v521
        %v1204 = vunpack.c.h.b16 %v521
        %v1205 = vunpack.c.l.b16 %v522
        %v1206 = vunpack.c.h.b16 %v522
        %v1207 = vunpack.c.l.b16 %v523
        %v1208 = vunpack.c.h.b16 %v523
        %v1209 = vunpack.c.l.b16 %v524
        %v1210 = vunpack.c.h.b16 %v524
        %v1211 = vunpack.c.l.b16 %v525
        %v1212 = vunpack.c.h.b16 %v525
        %v1213 = vunpack.c.l.b16 %v526
        %v1214 = vunpack.c.h.b16 %v526
        %v1215 = vunpack.c.l.b16 %v527
        %v1216 = vunpack.c.h.b16 %v527
        %v1217 = vunpack.c.l.b16 %v528
        %v1218 = vunpack.c.h.b16 %v528
        %v1219 = vunpack.c.l.b16 %v529
        %v1220 = vunpack.c.h.b16 %v529
        %v1221 = vunpack.c.l.b16 %v530
        %v1222 = vunpack.c.h.b16 %v530
        %v1223 = vunpack.c.l.b16 %v531
        %v1224 = vunpack.c.h.b16 %v531
        %v1225 = vunpack.c.l.b16 %v532
        %v1226 = vunpack.c.h.b16 %v532
        %v1227 = vunpack.c.l.b16 %v533
        %v1228 = vunpack.c.h.b16 %v533
        %v1229 = vunpack.c.l.b16 %v534
        %v1230 = vunpack.c.h.b16 %v534
        %v1231 = vunpack.c.l.b16 %v535
        %v1232 = vunpack.c.h.b16 %v535
        %v1233 = vunpack.c.l.b16 %v536
        %v1234 = vunpack.c.h.b16 %v536
        %v1235 = vunpack.c.l.b16 %v537
        %v1236 = vunpack.c.h.b16 %v537
        %v1237 = vunpack.c.l.b16 %v538
        %v1238 = vunpack.c.h.b16 %v538
        %v1239 = vunpack.c.l.b16 %v539
        %v1240 = vunpack.c.h.b16 %v539
        %v1241 = vunpack.c.l.b16 %v540
        %v1242 = vunpack.c.h.b16 %v540
        %v1243 = vunpack.c.l.b16 %v541
        %v1244 = vunpack.c.h.b16 %v541
        %v1245 = vunpack.c.l.b16 %v542
        %v1246 = vunpack.c.h.b16 %v542
        %v1247 = vunpack.c.l.b16 %v543
        %v1248 = vunpack.c.h.b16 %v543
        %v1249 = vunpack.c.l.b16 %v544
        %v1250 = vunpack.c.h.b16 %v544
        %v1251 = vunpack.c.l.b16 %v545
        %v1252 = vunpack.c.h.b16 %v545
        %v1253 = vunpack.c.l.b16 %v546
        %v1254 = vunpack.c.h.b16 %v546
        %v1255 = vunpack.c.l.b16 %v547
        %v1256 = vunpack.c.h.b16 %v547
        %v1257 = vunpack.c.l.b16 %v548
        %v1258 = vunpack.c.h.b16 %v548
        %v1259 = vunpack.c.l.b16 %v549
        %v1260 = vunpack.c.h.b16 %v549
        %v1261 = vunpack.c.l.b16 %v550
        %v1262 = vunpack.c.h.b16 %v550
        %v1263 = vunpack.c.l.b16 %v551
        %v1264 = vunpack.c.h.b16 %v551
        %v1265 = vunpack.c.l.b16 %v552
        %v1266 = vunpack.c.h.b16 %v552
        %v1267 = vunpack.c.l.b16 %v553
        %v1268 = vunpack.c.h.b16 %v553
        %v1269 = vunpack.c.l.b16 %v554
        %v1270 = vunpack.c.h.b16 %v554
        %v1271 = vunpack.c.l.b16 %v555
        %v1272 = vunpack.c.h.b16 %v555
        %v1273 = vunpack.c.l.b16 %v556
        %v1274 = vunpack.c.h.b16 %v556
        %v1275 = vunpack.c.l.b16 %v557
        %v1276 = vunpack.c.h.b16 %v557
        %v1277 = vunpack.c.l.b16 %v558
        %v1278 = vunpack.c.h.b16 %v558
        %v1279 = vunpack.c.l.b16 %v559
        %v1280 = vunpack.c.h.b16 %v559
        %v1281 = vunpack.c.l.b16 %v560
        %v1282 = vunpack.c.h.b16 %v560
        %v1283 = vunpack.c.l.b16 %v561
        %v1284 = vunpack.c.h.b16 %v561
        %v1285 = vunpack.c.l.b16 %v562
        %v1286 = vunpack.c.h.b16 %v562
        %v1287 = vunpack.c.l.b16 %v563
        %v1288 = vunpack.c.h.b16 %v563
        %v1289 = vunpack.c.l.b16 %v564
        %v1290 = vunpack.c.h.b16 %v564
        %v1291 = vunpack.c.l.b16 %v565
        %v1292 = vunpack.c.h.b16 %v565
        %v1293 = vunpack.c.l.b16 %v566
        %v1294 = vunpack.c.h.b16 %v566
        %v1295 = vunpack.c.l.b16 %v567
        %v1296 = vunpack.c.h.b16 %v567
        %v1297 = vunpack.c.l.b16 %v568
        %v1298 = vunpack.c.h.b16 %v568
        %v1299 = vunpack.c.l.b16 %v569
        %v1300 = vunpack.c.h.b16 %v569
        %v1301 = vunpack.c.l.b16 %v570
        %v1302 = vunpack.c.h.b16 %v570
        %v1303 = vunpack.c.l.b16 %v571
        %v1304 = vunpack.c.h.b16 %v571
        %v1305 = vunpack.c.l.b16 %v572
        %v1306 = vunpack.c.h.b16 %v572
        %v1307 = vunpack.c.l.b16 %v573
        %v1308 = vunpack.c.h.b16 %v573
        %v1309 = vunpack.c.l.b16 %v574
        %v1310 = vunpack.c.h.b16 %v574
        %v1311 = vunpack.c.l.b16 %v575
        %v1312 = vunpack.c.h.b16 %v575
        %v1313 = vunpack.c.l.b16 %v576
        %v1314 = vunpack.c.h.b16 %v576
        %v1315 = vunpack.c.l.b16 %v577
        %v1316 = vunpack.c.h.b16 %v577
        %v1317 = vunpack.c.l.b16 %v578
        %v1318 = vunpack.c.h.b16 %v578
        %v1319 = vunpack.c.l.b16 %v579
        %v1320 = vunpack.c.h.b16 %v579
        %v1321 = vunpack.c.l.b16 %v580
        %v1322 = vunpack.c.h.b16 %v580
        %v1323 = vunpack.c.l.b16 %v581
        %v1324 = vunpack.c.h.b16 %v581
        %v1325 = vunpack.c.l.b16 %v582
        %v1326 = vunpack.c.h.b16 %v582
        %v1327 = vunpack.c.l.b16 %v583
        %v1328 = vunpack.c.h.b16 %v583
        %v1329 = vunpack.c.l.b16 %v584
        %v1330 = vunpack.c.h.b16 %v584
        %v1331 = vunpack.c.l.b16 %v585
        %v1332 = vunpack.c.h.b16 %v585
        %v1333 = vunpack.c.l.b16 %v586
        %v1334 = vunpack.c.h.b16 %v586
        %v1335 = vunpack.c.l.b16 %v587
        %v1336 = vunpack.c.h.b16 %v587
        %v1337 = vunpack.c.l.b16 %v588
        %v1338 = vunpack.c.h.b16 %v588
        %v1339 = vunpack.c.l.b16 %v589
        %v1340 = vunpack.c.h.b16 %v589
        %v1341 = vunpack.c.l.b16 %v590
        %v1342 = vunpack.c.h.b16 %v590
        %v1343 = vunpack.c.l.b16 %v591
        %v1344 = vunpack.c.h.b16 %v591
        %v1345 = vunpack.c.l.b16 %v592
        %v1346 = vunpack.c.h.b16 %v592
        %v1347 = vunpack.c.l.b16 %v593
        %v1348 = vunpack.c.h.b16 %v593
        %v1349 = vunpack.c.l.b16 %v594
        %v1350 = vunpack.c.h.b16 %v594
        %v1351 = vunpack.c.l.b16 %v595
        %v1352 = vunpack.c.h.b16 %v595
        %v1353 = vunpack.c.l.b16 %v596
        %v1354 = vunpack.c.h.b16 %v596
        %v1355 = vunpack.c.l.b16 %v597
        %v1356 = vunpack.c.h.b16 %v597
        %v1357 = vunpack.c.l.b16 %v598
        %v1358 = vunpack.c.h.b16 %v598
        %v1359 = vunpack.c.l.b16 %v599
        %v1360 = vunpack.c.h.b16 %v599
        %v1361 = vunpack.c.l.b16 %v600
        %v1362 = vunpack.c.h.b16 %v600
        %v1363 = vunpack.c.l.b16 %v601
        %v1364 = vunpack.c.h.b16 %v601
        %v1365 = vunpack.c.l.b16 %v602
        %v1366 = vunpack.c.h.b16 %v602
        %v1367 = vunpack.c.l.b16 %v603
        %v1368 = vunpack.c.h.b16 %v603
        %v1369 = vunpack.c.l.b16 %v604
        %v1370 = vunpack.c.h.b16 %v604
        %v1371 = vunpack.c.l.b16 %v605
        %v1372 = vunpack.c.h.b16 %v605
        %v1373 = vunpack.c.l.b16 %v606
        %v1374 = vunpack.c.h.b16 %v606
        %v1375 = vunpack.c.l.b16 %v607
        %v1376 = vunpack.c.h.b16 %v607
        %v1377 = vunpack.c.l.b16 %v608
        %v1378 = vunpack.c.h.b16 %v608
        %v1379 = vunpack.c.l.b16 %v609
        %v1380 = vunpack.c.h.b16 %v609
        %v1381 = vunpack.c.l.b16 %v610
        %v1382 = vunpack.c.h.b16 %v610
        %v1383 = vunpack.c.l.b16 %v611
        %v1384 = vunpack.c.h.b16 %v611
        %v1385 = vunpack.c.l.b16 %v612
        %v1386 = vunpack.c.h.b16 %v612
        %v1387 = vunpack.c.l.b16 %v613
        %v1388 = vunpack.c.h.b16 %v613
        %v1389 = vunpack.c.l.b16 %v614
        %v1390 = vunpack.c.h.b16 %v614
        %v1391 = vunpack.c.l.b16 %v615
        %v1392 = vunpack.c.h.b16 %v615
        %v1393 = vunpack.c.l.b16 %v616
        %v1394 = vunpack.c.h.b16 %v616
        %v1395 = vunpack.c.l.b16 %v617
        %v1396 = vunpack.c.h.b16 %v617
        %v1397 = vunpack.c.l.b16 %v618
        %v1398 = vunpack.c.h.b16 %v618
        %v1399 = vunpack.c.l.b16 %v619
        %v1400 = vunpack.c.h.b16 %v619
        %v1401 = vunpack.c.l.b16 %v620
        %v1402 = vunpack.c.h.b16 %v620
        %v1403 = vunpack.c.l.b16 %v621
        %v1404 = vunpack.c.h.b16 %v621
        %v1405 = vunpack.c.l.b16 %v622
        %v1406 = vunpack.c.h.b16 %v622
        %v1407 = vunpack.c.l.b16 %v623
        %v1408 = vunpack.c.h.b16 %v623
        %v1409 = vunpack.c.l.b16 %v624
        %v1410 = vunpack.c.h.b16 %v624
        %v1411 = vunpack.c.l.b16 %v625
        %v1412 = vunpack.c.h.b16 %v625
        %v1413 = vunpack.c.l.b16 %v626
        %v1414 = vunpack.c.h.b16 %v626
        %v1415 = vunpack.c.l.b16 %v627
        %v1416 = vunpack.c.h.b16 %v627
        %v1417 = vunpack.c.l.b16 %v628
        %v1418 = vunpack.c.h.b16 %v628
        %v1419 = vunpack.c.l.b16 %v629
        %v1420 = vunpack.c.h.b16 %v629
        %v1421 = vunpack.c.l.b16 %v630
        %v1422 = vunpack.c.h.b16 %v630
        %v1423 = vunpack.c.l.b16 %v631
        %v1424 = vunpack.c.h.b16 %v631
        %v1425 = vunpack.c.l.b16 %v632
        %v1426 = vunpack.c.h.b16 %v632
        %v1427 = vunpack.c.l.b16 %v633
        %v1428 = vunpack.c.h.b16 %v633
        %v1429 = vunpack.c.l.b16 %v634
        %v1430 = vunpack.c.h.b16 %v634
        %v1431 = vunpack.c.l.b16 %v635
        %v1432 = vunpack.c.h.b16 %v635
        %v1433 = vunpack.c.l.b16 %v636
        %v1434 = vunpack.c.h.b16 %v636
        %v1435 = vunpack.c.l.b16 %v637
        %v1436 = vunpack.c.h.b16 %v637
        %v1437 = vunpack.c.l.b16 %v638
        %v1438 = vunpack.c.h.b16 %v638
        %v1439 = vunpack.c.l.b16 %v639
        %v1440 = vunpack.c.h.b16 %v639
        %v1441 = vunpack.c.l.b16 %v640
        %v1442 = vunpack.c.h.b16 %v640
        %v1443 = vunpack.c.l.b16 %v641
        %v1444 = vunpack.c.h.b16 %v641
        %v1445 = vunpack.c.l.b16 %v642
        %v1446 = vunpack.c.h.b16 %v642
        %v1447 = vunpack.c.l.b16 %v643
        %v1448 = vunpack.c.h.b16 %v643
        %v1449 = vunpack.c.l.b16 %v644
        %v1450 = vunpack.c.h.b16 %v644
        %v1451 = vunpack.c.l.b16 %v645
        %v1452 = vunpack.c.h.b16 %v645
        %v1453 = vunpack.c.l.b16 %v646
        %v1454 = vunpack.c.h.b16 %v646
        %v1455 = vunpack.c.l.b16 %v647
        %v1456 = vunpack.c.h.b16 %v647
        %v1457 = vunpack.c.l.b16 %v648
        %v1458 = vunpack.c.h.b16 %v648
        %v1459 = vunpack.c.l.b16 %v649
        %v1460 = vunpack.c.h.b16 %v649
        %v1461 = vunpack.c.l.b16 %v650
        %v1462 = vunpack.c.h.b16 %v650
        %v1463 = vunpack.c.l.b16 %v651
        %v1464 = vunpack.c.h.b16 %v651
        %v1465 = vunpack.c.l.b16 %v652
        %v1466 = vunpack.c.h.b16 %v652
        %v1467 = vunpack.c.l.b16 %v653
        %v1468 = vunpack.c.h.b16 %v653
        %v1469 = vunpack.c.l.b16 %v654
        %v1470 = vunpack.c.h.b16 %v654
        %v1471 = vunpack.c.l.b16 %v655
        %v1472 = vunpack.c.h.b16 %v655
        %v1473 = vunpack.c.l.b16 %v656
        %v1474 = vunpack.c.h.b16 %v656
        %v1475 = vunpack.c.l.b16 %v657
        %v1476 = vunpack.c.h.b16 %v657
        %v1477 = vunpack.c.l.b16 %v658
        %v1478 = vunpack.c.h.b16 %v658
        %v1479 = vunpack.c.l.b16 %v659
        %v1480 = vunpack.c.h.b16 %v659
        %v1481 = vunpack.c.l.b16 %v660
        %v1482 = vunpack.c.h.b16 %v660
        %v1483 = vunpack.c.l.b16 %v661
        %v1484 = vunpack.c.h.b16 %v661
        %v1485 = vunpack.c.l.b16 %v662
        %v1486 = vunpack.c.h.b16 %v662
        %v1487 = vunpack.c.l.b16 %v663
        %v1488 = vunpack.c.h.b16 %v663
        %v1489 = vunpack.c.l.b16 %v664
        %v1490 = vunpack.c.h.b16 %v664
        %v1491 = vunpack.c.l.b16 %v665
        %v1492 = vunpack.c.h.b16 %v665
        %v1493 = vunpack.c.l.b16 %v666
        %v1494 = vunpack.c.h.b16 %v666
        %v1495 = vunpack.c.l.b16 %v667
        %v1496 = vunpack.c.h.b16 %v667
        %v1497 = vunpack.c.l.b16 %v668
        %v1498 = vunpack.c.h.b16 %v668
        %v1499 = vunpack.c.l.b16 %v669
        %v1500 = vunpack.c.h.b16 %v669
        %v1501 = vunpack.c.l.b16 %v670
        %v1502 = vunpack.c.h.b16 %v670
        %v1503 = vunpack.c.l.b16 %v671
        %v1504 = vunpack.c.h.b16 %v671
        %v1505 = vunpack.c.l.b16 %v672
        %v1506 = vunpack.c.h.b16 %v672
        %v1507 = vunpack.c.l.b16 %v673
        %v1508 = vunpack.c.h.b16 %v673
        %v1509 = vunpack.c.l.b16 %v674
        %v1510 = vunpack.c.h.b16 %v674
        %v1511 = vunpack.c.l.b16 %v675
        %v1512 = vunpack.c.h.b16 %v675
        %v1513 = vunpack.c.l.b16 %v676
        %v1514 = vunpack.c.h.b16 %v676
        %v1515 = vunpack.c.l.b16 %v677
        %v1516 = vunpack.c.h.b16 %v677
        %v1517 = vunpack.c.l.b16 %v678
        %v1518 = vunpack.c.h.b16 %v678
        %v1519 = vunpack.c.l.b16 %v679
        %v1520 = vunpack.c.h.b16 %v679
        %v1521 = vunpack.c.l.b16 %v680
        %v1522 = vunpack.c.h.b16 %v680
        %v1523 = vunpack.c.l.b16 %v681
        %v1524 = vunpack.c.h.b16 %v681
        %v1525 = vunpack.c.l.b16 %v682
        %v1526 = vunpack.c.h.b16 %v682
        %v1527 = vunpack.c.l.b16 %v683
        %v1528 = vunpack.c.h.b16 %v683
        %v1529 = vunpack.c.l.b16 %v684
        %v1530 = vunpack.c.h.b16 %v684
        %v1531 = vunpack.c.l.b16 %v685
        %v1532 = vunpack.c.h.b16 %v685
        %v1533 = vunpack.c.l.b16 %v686
        %v1534 = vunpack.c.h.b16 %v686
        %v1535 = vunpack.c.l.b16 %v687
        %v1536 = vunpack.c.h.b16 %v687
        %v1537 = vunpack.c.l.b16 %v688
        %v1538 = vunpack.c.h.b16 %v688
        %v1539 = vunpack.c.l.b16 %v689
        %v1540 = vunpack.c.h.b16 %v689
        %v1541 = vunpack.c.l.b16 %v690
        %v1542 = vunpack.c.h.b16 %v690
        %v1543 = vunpack.c.l.b16 %v691
        %v1544 = vunpack.c.h.b16 %v691
        %v1545 = vunpack.c.l.b16 %v692
        %v1546 = vunpack.c.h.b16 %v692
        %v1547 = vunpack.c.l.b16 %v693
        %v1548 = vunpack.c.h.b16 %v693
        %v1549 = vunpack.c.l.b16 %v694
        %v1550 = vunpack.c.h.b16 %v694
        %v1551 = vunpack.c.l.b16 %v695
        %v1552 = vunpack.c.h.b16 %v695
        %v1553 = vunpack.c.l.b16 %v696
        %v1554 = vunpack.c.h.b16 %v696
        %v1555 = vunpack.c.l.b16 %v697
        %v1556 = vunpack.c.h.b16 %v697
        %v1557 = vunpack.c.l.b16 %v698
        %v1558 = vunpack.c.h.b16 %v698
        %v1559 = vunpack.c.l.b16 %v699
        %v1560 = vunpack.c.h.b16 %v699
        %v1561 = vunpack.c.l.b16 %v700
        %v1562 = vunpack.c.h.b16 %v700
        %v1563 = vunpack.c.l.b16 %v701
        %v1564 = vunpack.c.h.b16 %v701
        %v1565 = vunpack.c.l.b16 %v702
        %v1566 = vunpack.c.h.b16 %v702
        %v1567 = vpack.c.b16 %v1003, %v991
        %v1568 = vpack.c.b16 %v1004, %v992
        %v1569 = vpack.c.b16 %v1005, %v993
        %v1570 = vpack.c.b16 %v1006, %v994
        %v1571 = vpack.c.b16 %v1007, %v995
        %v1572 = vpack.c.b16 %v1008, %v996
        %v1573 = vpack.c.b16 %v1009, %v997
        %v1574 = vpack.c.b16 %v1010, %v998
        %v1575 = vpack.c.b16 %v1011, %v999
        %v1576 = vpack.c.b16 %v1012, %v1000
        %v1577 = vpack.c.b16 %v1013, %v1001
        %v1578 = vpack.c.b16 %v1014, %v1002
        %v1579 = vpack.c.b16 %v1027, %v1015
        %v1580 = vpack.c.b16 %v1028, %v1016
        %v1581 = vpack.c.b16 %v1029, %v1017
        %v1582 = vpack.c.b16 %v1030, %v1018
        %v1583 = vpack.c.b16 %v1031, %v1019
        %v1584 = vpack.c.b16 %v1032, %v1020
        %v1585 = vpack.c.b16 %v1033, %v1021
        %v1586 = vpack.c.b16 %v1034, %v1022
        %v1587 = vpack.c.b16 %v1035, %v1023
        %v1588 = vpack.c.b16 %v1036, %v1024
        %v1589 = vpack.c.b16 %v1037, %v1025
        %v1590 = vpack.c.b16 %v1038, %v1026
        %v1591 = vpack.c.b16 %v1051, %v1039
        %v1592 = vpack.c.b16 %v1052, %v1040
        %v1593 = vpack.c.b16 %v1053, %v1041
        %v1594 = vpack.c.b16 %v1054, %v1042
        %v1595 = vpack.c.b16 %v1055, %v1043
        %v1596 = vpack.c.b16 %v1056, %v1044
        %v1597 = vpack.c.b16 %v1057, %v1045
        %v1598 = vpack.c.b16 %v1058, %v1046
        %v1599 = vpack.c.b16 %v1059, %v1047
        %v1600 = vpack.c.b16 %v1060, %v1048
        %v1601 = vpack.c.b16 %v1061, %v1049
        %v1602 = vpack.c.b16 %v1062, %v1050
        %v1603 = vpack.c.b16 %v1075, %v1063
        %v1604 = vpack.c.b16 %v1076, %v1064
        %v1605 = vpack.c.b16 %v1077, %v1065
        %v1606 = vpack.c.b16 %v1078, %v1066
        %v1607 = vpack.c.b16 %v1079, %v1067
        %v1608 = vpack.c.b16 %v1080, %v1068
        %v1609 = vpack.c.b16 %v1081, %v1069
        %v1610 = vpack.c.b16 %v1082, %v1070
        %v1611 = vpack.c.b16 %v1083, %v1071
        %v1612 = vpack.c.b16 %v1084, %v1072
        %v1613 = vpack.c.b16 %v1085, %v1073
        %v1614 = vpack.c.b16 %v1086, %v1074
        %v1615 = vpack.c.b16 %v1099, %v1087
        %v1616 = vpack.c.b16 %v1100, %v1088
        %v1617 = vpack.c.b16 %v1101, %v1089
        %v1618 = vpack.c.b16 %v1102, %v1090
        %v1619 = vpack.c.b16 %v1103, %v1091
        %v1620 = vpack.c.b16 %v1104, %v1092
        %v1621 = vpack.c.b16 %v1105, %v1093
        %v1622 = vpack.c.b16 %v1106, %v1094
        %v1623 = vpack.c.b16 %v1107, %v1095
        %v1624 = vpack.c.b16 %v1108, %v1096
        %v1625 = vpack.c.b16 %v1109, %v1097
        %v1626 = vpack.c.b16 %v1110, %v1098
        %v1627 = vpack.c.b16 %v1123, %v1111
        %v1628 = vpack.c.b16 %v1124, %v1112
        %v1629 = vpack.c.b16 %v1125, %v1113
        %v1630 = vpack.c.b16 %v1126, %v1114
        %v1631 = vpack.c.b16 %v1127, %v1115
        %v1632 = vpack.c.b16 %v1128, %v1116
        %v1633 = vpack.c.b16 %v1129, %v1117
        %v1634 = vpack.c.b16 %v1130, %v1118
        %v1635 = vpack.c.b16 %v1131, %v1119
        %v1636 = vpack.c.b16 %v1132, %v1120
        %v1637 = vpack.c.b16 %v1133, %v1121
        %v1638 = vpack.c.b16 %v1134, %v1122
        %v1639 = vpack.c.b16 %v1147, %v1135
        %v1640 = vpack.c.b16 %v1148, %v1136
        %v1641 = vpack.c.b16 %v1149, %v1137
        %v1642 = vpack.c.b16 %v1150, %v1138
        %v1643 = vpack.c.b16 %v1151, %v1139
        %v1644 = vpack.c.b16 %v1152, %v1140
        %v1645 = vpack.c.b16 %v1153, %v1141
        %v1646 = vpack.c.b16 %v1154, %v1142
        %v1647 = vpack.c.b16 %v1155, %v1143
        %v1648 = vpack.c.b16 %v1156, %v1144
        %v1649 = vpack.c.b16 %v1157, %v1145
        %v1650 = vpack.c.b16 %v1158, %v1146
        %v1651 = vpack.c.b16 %v1171, %v1159
        %v1652 = vpack.c.b16 %v1172, %v1160
        %v1653 = vpack.c.b16 %v1173, %v1161
        %v1654 = vpack.c.b16 %v1174, %v1162
        %v1655 = vpack.c.b16 %v1175, %v1163
        %v1656 = vpack.c.b16 %v1176, %v1164
        %v1657 = vpack.c.b16 %v1177, %v1165
        %v1658 = vpack.c.b16 %v1178, %v1166
        %v1659 = vpack.c.b16 %v1179, %v1167
        %v1660 = vpack.c.b16 %v1180, %v1168
        %v1661 = vpack.c.b16 %v1181, %v1169
        %v1662 = vpack.c.b16 %v1182, %v1170
        %v1663 = vpack.c.b16 %v1195, %v1183
        %v1664 = vpack.c.b16 %v1196, %v1184
        %v1665 = vpack.c.b16 %v1197, %v1185
        %v1666 = vpack.c.b16 %v1198, %v1186
        %v1667 = vpack.c.b16 %v1199, %v1187
        %v1668 = vpack.c.b16 %v1200, %v1188
        %v1669 = vpack.c.b16 %v1201, %v1189
        %v1670 = vpack.c.b16 %v1202, %v1190
        %v1671 = vpack.c.b16 %v1203, %v1191
        %v1672 = vpack.c.b16 %v1204, %v1192
        %v1673 = vpack.c.b16 %v1205, %v1193
        %v1674 = vpack.c.b16 %v1206, %v1194
        %v1675 = vpack.c.b16 %v1219, %v1207
        %v1676 = vpack.c.b16 %v1220, %v1208
        %v1677 = vpack.c.b16 %v1221, %v1209
        %v1678 = vpack.c.b16 %v1222, %v1210
        %v1679 = vpack.c.b16 %v1223, %v1211
        %v1680 = vpack.c.b16 %v1224, %v1212
        %v1681 = vpack.c.b16 %v1225, %v1213
        %v1682 = vpack.c.b16 %v1226, %v1214
        %v1683 = vpack.c.b16 %v1227, %v1215
        %v1684 = vpack.c.b16 %v1228, %v1216
        %v1685 = vpack.c.b16 %v1229, %v1217
        %v1686 = vpack.c.b16 %v1230, %v1218
        %v1687 = vpack.c.b16 %v1243, %v1231
        %v1688 = vpack.c.b16 %v1244, %v1232
        %v1689 = vpack.c.b16 %v1245, %v1233
        %v1690 = vpack.c.b16 %v1246, %v1234
        %v1691 = vpack.c.b16 %v1247, %v1235
        %v1692 = vpack.c.b16 %v1248, %v1236
        %v1693 = vpack.c.b16 %v1249, %v1237
        %v1694 = vpack.c.b16 %v1250, %v1238
        %v1695 = vpack.c.b16 %v1251, %v1239
        %v1696 = vpack.c.b16 %v1252, %v1240
        %v1697 = vpack.c.b16 %v1253, %v1241
        %v1698 = vpack.c.b16 %v1254, %v1242
        %v1699 = vpack.c.b16 %v1267, %v1255
        %v1700 = vpack.c.b16 %v1268, %v1256
        %v1701 = vpack.c.b16 %v1269, %v1257
        %v1702 = vpack.c.b16 %v1270, %v1258
        %v1703 = vpack.c.b16 %v1271, %v1259
        %v1704 = vpack.c.b16 %v1272, %v1260
        %v1705 = vpack.c.b16 %v1273, %v1261
        %v1706 = vpack.c.b16 %v1274, %v1262
        %v1707 = vpack.c.b16 %v1275, %v1263
        %v1708 = vpack.c.b16 %v1276, %v1264
        %v1709 = vpack.c.b16 %v1277, %v1265
        %v1710 = vpack.c.b16 %v1278, %v1266
        %v1711 = vpack.c.b16 %v1291, %v1279
        %v1712 = vpack.c.b16 %v1292, %v1280
        %v1713 = vpack.c.b16 %v1293, %v1281
        %v1714 = vpack.c.b16 %v1294, %v1282
        %v1715 = vpack.c.b16 %v1295, %v1283
        %v1716 = vpack.c.b16 %v1296, %v1284
        %v1717 = vpack.c.b16 %v1297, %v1285
        %v1718 = vpack.c.b16 %v1298, %v1286
        %v1719 = vpack.c.b16 %v1299, %v1287
        %v1720 = vpack.c.b16 %v1300, %v1288
        %v1721 = vpack.c.b16 %v1301, %v1289
        %v1722 = vpack.c.b16 %v1302, %v1290
        %v1723 = vpack.c.b16 %v1315, %v1303
        %v1724 = vpack.c.b16 %v1316, %v1304
        %v1725 = vpack.c.b16 %v1317, %v1305
        %v1726 = vpack.c.b16 %v1318, %v1306
        %v1727 = vpack.c.b16 %v1319, %v1307
        %v1728 = vpack.c.b16 %v1320, %v1308
        %v1729 = vpack.c.b16 %v1321, %v1309
        %v1730 = vpack.c.b16 %v1322, %v1310
        %v1731 = vpack.c.b16 %v1323, %v1311
        %v1732 = vpack.c.b16 %v1324, %v1312
        %v1733 = vpack.c.b16 %v1325, %v1313
        %v1734 = vpack.c.b16 %v1326, %v1314
        %v1735 = vpack.c.b16 %v1339, %v1327
        %v1736 = vpack.c.b16 %v1340, %v1328
        %v1737 = vpack.c.b16 %v1341, %v1329
        %v1738 = vpack.c.b16 %v1342, %v1330
        %v1739 = vpack.c.b16 %v1343, %v1331
        %v1740 = vpack.c.b16 %v1344, %v1332
        %v1741 = vpack.c.b16 %v1345, %v1333
        %v1742 = vpack.c.b16 %v1346, %v1334
        %v1743 = vpack.c.b16 %v1347, %v1335
        %v1744 = vpack.c.b16 %v1348, %v1336
        %v1745 = vpack.c.b16 %v1349, %v1337
        %v1746 = vpack.c.b16 %v1350, %v1338
        %v1747 = vpack.c.b16 %v1363, %v1351
        %v1748 = vpack.c.b16 %v1364, %v1352
        %v1749 = vpack.c.b16 %v1365, %v1353
        %v1750 = vpack.c.b16 %v1366, %v1354
        %v1751 = vpack.c.b16 %v1367, %v1355
        %v1752 = vpack.c.b16 %v1368, %v1356
        %v1753 = vpack.c.b16 %v1369, %v1357
        %v1754 = vpack.c.b16 %v1370, %v1358
        %v1755 = vpack.c.b16 %v1371, %v1359
        %v1756 = vpack.c.b16 %v1372, %v1360
        %v1757 = vpack.c.b16 %v1373, %v1361
        %v1758 = vpack.c.b16 %v1374, %v1362
        %v1759 = vpack.c.b16 %v1387, %v1375
        %v1760 = vpack.c.b16 %v1388, %v1376
        %v1761 = vpack.c.b16 %v1389, %v1377
        %v1762 = vpack.c.b16 %v1390, %v1378
        %v1763 = vpack.c.b16 %v1391, %v1379
        %v1764 = vpack.c.b16 %v1392, %v1380
        %v1765 = vpack.c.b16 %v1393, %v1381
        %v1766 = vpack.c.b16 %v1394, %v1382
        %v1767 = vpack.c.b16 %v1395, %v1383
        %v1768 = vpack.c.b16 %v1396, %v1384
        %v1769 = vpack.c.b16 %v1397, %v1385
        %v1770 = vpack.c.b16 %v1398, %v1386
        %v1771 = vpack.c.b16 %v1411, %v1399
        %v1772 = vpack.c.b16 %v1412, %v1400
        %v1773 = vpack.c.b16 %v1413, %v1401
        %v1774 = vpack.c.b16 %v1414, %v1402
        %v1775 = vpack.c.b16 %v1415, %v1403
        %v1776 = vpack.c.b16 %v1416, %v1404
        %v1777 = vpack.c.b16 %v1417, %v1405
        %v1778 = vpack.c.b16 %v1418, %v1406
        %v1779 = vpack.c.b16 %v1419, %v1407
        %v1780 = vpack.c.b16 %v1420, %v1408
        %v1781 = vpack.c.b16 %v1421, %v1409
        %v1782 = vpack.c.b16 %v1422, %v1410
        %v1783 = vpack.c.b16 %v1435, %v1423
        %v1784 = vpack.c.b16 %v1436, %v1424
        %v1785 = vpack.c.b16 %v1437, %v1425
        %v1786 = vpack.c.b16 %v1438, %v1426
        %v1787 = vpack.c.b16 %v1439, %v1427
        %v1788 = vpack.c.b16 %v1440, %v1428
        %v1789 = vpack.c.b16 %v1441, %v1429
        %v1790 = vpack.c.b16 %v1442, %v1430
        %v1791 = vpack.c.b16 %v1443, %v1431
        %v1792 = vpack.c.b16 %v1444, %v1432
        %v1793 = vpack.c.b16 %v1445, %v1433
        %v1794 = vpack.c.b16 %v1446, %v1434
        %v1795 = vpack.c.b16 %v1459, %v1447
        %v1796 = vpack.c.b16 %v1460, %v1448
        %v1797 = vpack.c.b16 %v1461, %v1449
        %v1798 = vpack.c.b16 %v1462, %v1450
        %v1799 = vpack.c.b16 %v1463, %v1451
        %v1800 = vpack.c.b16 %v1464, %v1452
        %v1801 = vpack.c.b16 %v1465, %v1453
        %v1802 = vpack.c.b16 %v1466, %v1454
        %v1803 = vpack.c.b16 %v1467, %v1455
        %v1804 = vpack.c.b16 %v1468, %v1456
        %v1805 = vpack.c.b16 %v1469, %v1457
        %v1806 = vpack.c.b16 %v1470, %v1458
        %v1807 = vpack.c.b16 %v1483, %v1471
        %v1808 = vpack.c.b16 %v1484, %v1472
        %v1809 = vpack.c.b16 %v1485, %v1473
        %v1810 = vpack.c.b16 %v1486, %v1474
        %v1811 = vpack.c.b16 %v1487, %v1475
        %v1812 = vpack.c.b16 %v1488, %v1476
        %v1813 = vpack.c.b16 %v1489, %v1477
        %v1814 = vpack.c.b16 %v1490, %v1478
        %v1815 = vpack.c.b16 %v1491, %v1479
        %v1816 = vpack.c.b16 %v1492, %v1480
        %v1817 = vpack.c.b16 %v1493, %v1481
        %v1818 = vpack.c.b16 %v1494, %v1482
        %v1819 = vpack.c.b16 %v1507, %v1495
        %v1820 = vpack.c.b16 %v1508, %v1496
        %v1821 = vpack.c.b16 %v1509, %v1497
        %v1822 = vpack.c.b16 %v1510, %v1498
        %v1823 = vpack.c.b16 %v1511, %v1499
        %v1824 = vpack.c.b16 %v1512, %v1500
        %v1825 = vpack.c.b16 %v1513, %v1501
        %v1826 = vpack.c.b16 %v1514, %v1502
        %v1827 = vpack.c.b16 %v1515, %v1503
        %v1828 = vpack.c.b16 %v1516, %v1504
        %v1829 = vpack.c.b16 %v1517, %v1505
        %v1830 = vpack.c.b16 %v1518, %v1506
        %v1831 = vpack.c.b16 %v1531, %v1519
        %v1832 = vpack.c.b16 %v1532, %v1520
        %v1833 = vpack.c.b16 %v1533, %v1521
        %v1834 = vpack.c.b16 %v1534, %v1522
        %v1835 = vpack.c.b16 %v1535, %v1523
        %v1836 = vpack.c.b16 %v1536, %v1524
        %v1837 = vpack.c.b16 %v1537, %v1525
        %v1838 = vpack.c.b16 %v1538, %v1526
        %v1839 = vpack.c.b16 %v1539, %v1527
        %v1840 = vpack.c.b16 %v1540, %v1528
        %v1841 = vpack.c.b16 %v1541, %v1529
        %v1842 = vpack.c.b16 %v1542, %v1530
        %v1843 = vpack.c.b16 %v1555, %v1543
        %v1844 = vpack.c.b16 %v1556, %v1544
        %v1845 = vpack.c.b16 %v1557, %v1545
        %v1846 = vpack.c.b16 %v1558, %v1546
        %v1847 = vpack.c.b16 %v1559, %v1547
        %v1848 = vpack.c.b16 %v1560, %v1548
        %v1849 = vpack.c.b16 %v1561, %v1549
        %v1850 = vpack.c.b16 %v1562, %v1550
        %v1851 = vpack.c.b16 %v1563, %v1551
        %v1852 = vpack.c.b16 %v1564, %v1552
        %v1853 = vpack.c.b16 %v1565, %v1553
        %v1854 = vpack.c.b16 %v1566, %v1554
        %2143 = vmatprep.subr.bf16.mxu0 %v1568
        %2144 = vmatpush1.bf16.msra.mxu0 %v1567
        %2145 = vmatprep.subr.bf16.mxu0 %v1580
        %2146 = vmatpush1.bf16.msra.mxu0 %v1579
        %2147 = vmatprep.subr.bf16.mxu0 %v1592
        %2148 = vmatpush1.bf16.msra.mxu0 %v1591
        %2149 = vmatprep.subr.bf16.mxu0 %v1604
        %2150 = vmatpush1.bf16.msra.mxu0 %v1603
        %2151 = vmatprep.subr.bf16.mxu0 %v1616
        %2152 = vmatpush1.bf16.msra.mxu0 %v1615
        %2153 = vmatprep.subr.bf16.mxu0 %v1628
        %2154 = vmatpush1.bf16.msra.mxu0 %v1627
        %2155 = vmatprep.subr.bf16.mxu0 %v1640
        %2156 = vmatpush1.bf16.msra.mxu0 %v1639
        %2157 = vmatprep.subr.bf16.mxu0 %v1652
        %2158 = vmatpush1.bf16.msra.mxu0 %v1651
        %2159 = vmatprep.subr.bf16.mxu0 %v1664
        %2160 = vmatpush1.bf16.msra.mxu0 %v1663
        %2161 = vmatprep.subr.bf16.mxu0 %v1676
        %2162 = vmatpush1.bf16.msra.mxu0 %v1675
        %2163 = vmatprep.subr.bf16.mxu0 %v1688
        %2164 = vmatpush1.bf16.msra.mxu0 %v1687
        %2165 = vmatprep.subr.bf16.mxu0 %v1700
        %2166 = vmatpush1.bf16.msra.mxu0 %v1699
        %2167 = vmatprep.subr.bf16.mxu0 %v1712
        %2168 = vmatpush1.bf16.msra.mxu0 %v1711
        %2169 = vmatprep.subr.bf16.mxu0 %v1724
        %2170 = vmatpush1.bf16.msra.mxu0 %v1723
        %2171 = vmatprep.subr.bf16.mxu0 %v1736
        %2172 = vmatpush1.bf16.msra.mxu0 %v1735
        %2173 = vmatprep.subr.bf16.mxu0 %v1748
        %2174 = vmatpush1.bf16.msra.mxu0 %v1747
        %2175 = vmatprep.mubr.bf16.mxu0 %v392
        %2176 = vmatmul.mubr.bf16.gmra.mrb[0].mxu0 %v391
        %v2177 = vpop.f32.mrb[0].mxu0
        %v2178 = vadd.f32 0.0, %v2177
        %v2179 = vpop.f32.mrb[0].mxu0
        %v2180 = vadd.f32 0.0, %v2179
        %v2181 = vpop.f32.mrb[0].mxu0
        %v2182 = vadd.f32 0.0, %v2181
        %v2183 = vpop.f32.mrb[0].mxu0
        %v2184 = vadd.f32 0.0, %v2183
        %2185 = vmatprep.mubr.bf16.mxu0 %v395
        %2186 = vmatmul.mubr.bf16.gmra.mrb[0].mxu0 %v394
        %v2187 = vpop.f32.mrb[0].mxu0
        %v2188 = vadd.f32 0.0, %v2187
        %v2189 = vpop.f32.mrb[0].mxu0
        %v2190 = vadd.f32 0.0, %v2189
        %v2191 = vpop.f32.mrb[0].mxu0
        %v2192 = vadd.f32 0.0, %v2191
        %v2193 = vpop.f32.mrb[0].mxu0
        %v2194 = vadd.f32 0.0, %v2193
        %2195 = vmatprep.mubr.bf16.mxu0 %v398
        %2196 = vmatmul.mubr.bf16.gmra.mrb[0].mxu0 %v397
        %v2197 = vpop.f32.mrb[0].mxu0
        %v2198 = vadd.f32 0.0, %v2197
        %v2199 = vpop.f32.mrb[0].mxu0
        %v2200 = vadd.f32 0.0, %v2199
        %v2201 = vpop.f32.mrb[0].mxu0
        %v2202 = vadd.f32 0.0, %v2201
        %v2203 = vpop.f32.mrb[0].mxu0
        %v2204 = vadd.f32 0.0, %v2203
        %2205 = vmatprep.mubr.bf16.mxu0 %v401
        %2206 = vmatmul.mubr.bf16.gmra.mrb[0].mxu0 %v400
        %v2207 = vpop.f32.mrb[0].mxu0
        %v2208 = vadd.f32 0.0, %v2207
        %v2209 = vpop.f32.mrb[0].mxu0
        %v2210 = vadd.f32 0.0, %v2209
        %v2211 = vpop.f32.mrb[0].mxu0
        %v2212 = vadd.f32 0.0, %v2211
        %v2213 = vpop.f32.mrb[0].mxu0
        %v2214 = vadd.f32 0.0, %v2213
        %2215 = vmatprep.mubr.bf16.mxu0 %v404
        %2216 = vmatmul.mubr.bf16.gmra.mrb[0].mxu0 %v403
        %v2217 = vpop.f32.mrb[0].mxu0
        %v2218 = vadd.f32 0.0, %v2217
        %v2219 = vpop.f32.mrb[0].mxu0
        %v2220 = vadd.f32 0.0, %v2219
        %v2221 = vpop.f32.mrb[0].mxu0
        %v2222 = vadd.f32 0.0, %v2221
        %v2223 = vpop.f32.mrb[0].mxu0
        %v2224 = vadd.f32 0.0, %v2223
        %2225 = vmatprep.mubr.bf16.mxu0 %v407
        %2226 = vmatmul.mubr.bf16.gmra.mrb[0].mxu0 %v406
        %v2227 = vpop.f32.mrb[0].mxu0
        %v2228 = vadd.f32 0.0, %v2227
        %v2229 = vpop.f32.mrb[0].mxu0
        %v2230 = vadd.f32 0.0, %v2229
        %v2231 = vpop.f32.mrb[0].mxu0
        %v2232 = vadd.f32 0.0, %v2231
        %v2233 = vpop.f32.mrb[0].mxu0
        %v2234 = vadd.f32 0.0, %v2233
        %2235 = vmatprep.mubr.bf16.mxu0 %v410
        %2236 = vmatmul.mubr.bf16.gmra.mrb[0].mxu0 %v409
        %v2237 = vpop.f32.mrb[0].mxu0
        %v2238 = vadd.f32 0.0, %v2237
        %v2239 = vpop.f32.mrb[0].mxu0
        %v2240 = vadd.f32 0.0, %v2239
        %v2241 = vpop.f32.mrb[0].mxu0
        %v2242 = vadd.f32 0.0, %v2241
        %v2243 = vpop.f32.mrb[0].mxu0
        %v2244 = vadd.f32 0.0, %v2243
        %2245 = vmatprep.mubr.bf16.mxu0 %v413
        %2246 = vmatmul.mubr.bf16.gmra.mrb[0].mxu0 %v412
        %v2247 = vpop.f32.mrb[0].mxu0
        %v2248 = vadd.f32 0.0, %v2247
        %v2249 = vpop.f32.mrb[0].mxu0
        %v2250 = vadd.f32 0.0, %v2249
        %v2251 = vpop.f32.mrb[0].mxu0
        %v2252 = vadd.f32 0.0, %v2251
        %v2253 = vpop.f32.mrb[0].mxu0
        %v2254 = vadd.f32 0.0, %v2253
        %2255 = vdwg.mxu0
        %2256 = vmatprep.subr.bf16.mxu0 %v1760
        %2257 = vmatpush1.bf16.msra.mxu0 %v1759
        %2258 = vmatprep.subr.bf16.mxu0 %v1772
        %2259 = vmatpush1.bf16.msra.mxu0 %v1771
        %2260 = vmatprep.subr.bf16.mxu0 %v1784
        %2261 = vmatpush1.bf16.msra.mxu0 %v1783
        %2262 = vmatprep.subr.bf16.mxu0 %v1796
        %2263 = vmatpush1.bf16.msra.mxu0 %v1795
        %2264 = vmatprep.subr.bf16.mxu0 %v1808
        %2265 = vmatpush1.bf16.msra.mxu0 %v1807
        %2266 = vmatprep.subr.bf16.mxu0 %v1820
        %2267 = vmatpush1.bf16.msra.mxu0 %v1819
        %2268 = vmatprep.subr.bf16.mxu0 %v1832
        %2269 = vmatpush1.bf16.msra.mxu0 %v1831
        %2270 = vmatprep.subr.bf16.mxu0 %v1844
        %2271 = vmatpush1.bf16.msra.mxu0 %v1843
        %2272 = vmatprep.subr.bf16.mxu0 0
        %2273 = vmatpush1.bf16.msra.mxu0 0
        %2274 = vmatprep.subr.bf16.mxu0 0
        %2275 = vmatpush1.bf16.msra.mxu0 0
        %2276 = vmatprep.subr.bf16.mxu0 0
        %2277 = vmatpush1.bf16.msra.mxu0 0
        %2278 = vmatprep.subr.bf16.mxu0 0
        %2279 = vmatpush1.bf16.msra.mxu0 0
        %2280 = vmatprep.subr.bf16.mxu0 0
        %2281 = vmatpush1.bf16.msra.mxu0 0
        %2282 = vmatprep.subr.bf16.mxu0 0
        %2283 = vmatpush1.bf16.msra.mxu0 0
        %2284 = vmatprep.subr.bf16.mxu0 0
        %2285 = vmatpush1.bf16.msra.mxu0 0
        %2286 = vmatprep.subr.bf16.mxu0 0
        %2287 = vmatpush1.bf16.msra.mxu0 0
        %2288 = vmatprep.mubr.bf16.mxu0 0
        %2289 = vmatmul.mubr.bf16.gmra.mrb[0].mxu0 %v393
        %v2290 = vpop.f32.mrb[0].mxu0
        %v2291 = vadd.f32 %v2178, %v2290
        %v2292 = vpop.f32.mrb[0].mxu0
        %v2293 = vadd.f32 %v2180, %v2292
        %v2294 = vpop.f32.mrb[0].mxu0
        %v2295 = vadd.f32 %v2182, %v2294
        %v2296 = vpop.f32.mrb[0].mxu0
        %v2297 = vadd.f32 %v2184, %v2296
        %2298 = vmatprep.mubr.bf16.mxu0 0
        %2299 = vmatmul.mubr.bf16.gmra.mrb[0].mxu0 %v396
        %v2300 = vpop.f32.mrb[0].mxu0
        %v2301 = vadd.f32 %v2188, %v2300
        %v2302 = vpop.f32.mrb[0].mxu0
        %v2303 = vadd.f32 %v2190, %v2302
        %v2304 = vpop.f32.mrb[0].mxu0
        %v2305 = vadd.f32 %v2192, %v2304
        %v2306 = vpop.f32.mrb[0].mxu0
        %v2307 = vadd.f32 %v2194, %v2306
        %2308 = vmatprep.mubr.bf16.mxu0 0
        %2309 = vmatmul.mubr.bf16.gmra.mrb[0].mxu0 %v399
        %v2310 = vpop.f32.mrb[0].mxu0
        %v2311 = vadd.f32 %v2198, %v2310
        %v2312 = vpop.f32.mrb[0].mxu0
        %v2313 = vadd.f32 %v2200, %v2312
        %v2314 = vpop.f32.mrb[0].mxu0
        %v2315 = vadd.f32 %v2202, %v2314
        %v2316 = vpop.f32.mrb[0].mxu0
        %v2317 = vadd.f32 %v2204, %v2316
        %2318 = vmatprep.mubr.bf16.mxu0 0
        %2319 = vmatmul.mubr.bf16.gmra.mrb[0].mxu0 %v402
        %v2320 = vpop.f32.mrb[0].mxu0
        %v2321 = vadd.f32 %v2208, %v2320
        %v2322 = vpop.f32.mrb[0].mxu0
        %v2323 = vadd.f32 %v2210, %v2322
        %v2324 = vpop.f32.mrb[0].mxu0
        %v2325 = vadd.f32 %v2212, %v2324
        %v2326 = vpop.f32.mrb[0].mxu0
        %v2327 = vadd.f32 %v2214, %v2326
        %2328 = vmatprep.mubr.bf16.mxu0 0
        %2329 = vmatmul.mubr.bf16.gmra.mrb[0].mxu0 %v405
        %v2330 = vpop.f32.mrb[0].mxu0
        %v2331 = vadd.f32 %v2218, %v2330
        %v2332 = vpop.f32.mrb[0].mxu0
        %v2333 = vadd.f32 %v2220, %v2332
        %v2334 = vpop.f32.mrb[0].mxu0
        %v2335 = vadd.f32 %v2222, %v2334
        %v2336 = vpop.f32.mrb[0].mxu0
        %v2337 = vadd.f32 %v2224, %v2336
        %2338 = vmatprep.mubr.bf16.mxu0 0
        %2339 = vmatmul.mubr.bf16.gmra.mrb[0].mxu0 %v408
        %v2340 = vpop.f32.mrb[0].mxu0
        %v2341 = vadd.f32 %v2228, %v2340
        %v2342 = vpop.f32.mrb[0].mxu0
        %v2343 = vadd.f32 %v2230, %v2342
        %v2344 = vpop.f32.mrb[0].mxu0
        %v2345 = vadd.f32 %v2232, %v2344
        %v2346 = vpop.f32.mrb[0].mxu0
        %v2347 = vadd.f32 %v2234, %v2346
        %2348 = vmatprep.mubr.bf16.mxu0 0
        %2349 = vmatmul.mubr.bf16.gmra.mrb[0].mxu0 %v411
        %v2350 = vpop.f32.mrb[0].mxu0
        %v2351 = vadd.f32 %v2238, %v2350
        %v2352 = vpop.f32.mrb[0].mxu0
        %v2353 = vadd.f32 %v2240, %v2352
        %v2354 = vpop.f32.mrb[0].mxu0
        %v2355 = vadd.f32 %v2242, %v2354
        %v2356 = vpop.f32.mrb[0].mxu0
        %v2357 = vadd.f32 %v2244, %v2356
        %2358 = vmatprep.mubr.bf16.mxu0 0
        %2359 = vmatmul.mubr.bf16.gmra.mrb[0].mxu0 %v414
        %v2360 = vpop.f32.mrb[0].mxu0
        %v2361 = vadd.f32 %v2248, %v2360
        %v2362 = vpop.f32.mrb[0].mxu0
        %v2363 = vadd.f32 %v2250, %v2362
        %v2364 = vpop.f32.mrb[0].mxu0
        %v2365 = vadd.f32 %v2252, %v2364
        %v2366 = vpop.f32.mrb[0].mxu0
        %v2367 = vadd.f32 %v2254, %v2366
        %2368 = vdwg.mxu0
        %2369 = vmatprep.subr.bf16.mxu0 %v1570
        %2370 = vmatpush1.bf16.msra.mxu0 %v1569
        %2371 = vmatprep.subr.bf16.mxu0 %v1582
        %2372 = vmatpush1.bf16.msra.mxu0 %v1581
        %2373 = vmatprep.subr.bf16.mxu0 %v1594
        %2374 = vmatpush1.bf16.msra.mxu0 %v1593
        %2375 = vmatprep.subr.bf16.mxu0 %v1606
        %2376 = vmatpush1.bf16.msra.mxu0 %v1605
        %2377 = vmatprep.subr.bf16.mxu0 %v1618
        %2378 = vmatpush1.bf16.msra.mxu0 %v1617
        %2379 = vmatprep.subr.bf16.mxu0 %v1630
        %2380 = vmatpush1.bf16.msra.mxu0 %v1629
        %2381 = vmatprep.subr.bf16.mxu0 %v1642
        %2382 = vmatpush1.bf16.msra.mxu0 %v1641
        %2383 = vmatprep.subr.bf16.mxu0 %v1654
        %2384 = vmatpush1.bf16.msra.mxu0 %v1653
        %2385 = vmatprep.subr.bf16.mxu0 %v1666
        %2386 = vmatpush1.bf16.msra.mxu0 %v1665
        %2387 = vmatprep.subr.bf16.mxu0 %v1678
        %2388 = vmatpush1.bf16.msra.mxu0 %v1677
        %2389 = vmatprep.subr.bf16.mxu0 %v1690
        %2390 = vmatpush1.bf16.msra.mxu0 %v1689
        %2391 = vmatprep.subr.bf16.mxu0 %v1702
        %2392 = vmatpush1.bf16.msra.mxu0 %v1701
        %2393 = vmatprep.subr.bf16.mxu0 %v1714
        %2394 = vmatpush1.bf16.msra.mxu0 %v1713
        %2395 = vmatprep.subr.bf16.mxu0 %v1726
        %2396 = vmatpush1.bf16.msra.mxu0 %v1725
        %2397 = vmatprep.subr.bf16.mxu0 %v1738
        %2398 = vmatpush1.bf16.msra.mxu0 %v1737
        %2399 = vmatprep.subr.bf16.mxu0 %v1750
        %2400 = vmatpush1.bf16.msra.mxu0 %v1749
        %2401 = vmatprep.mubr.bf16.mxu0 %v392
        %2402 = vmatmul.mubr.bf16.gmra.mrb[0].mxu0 %v391
        %v2403 = vpop.f32.mrb[0].mxu0
        %v2404 = vadd.f32 0.0, %v2403
        %v2405 = vpop.f32.mrb[0].mxu0
        %v2406 = vadd.f32 0.0, %v2405
        %v2407 = vpop.f32.mrb[0].mxu0
        %v2408 = vadd.f32 0.0, %v2407
        %v2409 = vpop.f32.mrb[0].mxu0
        %v2410 = vadd.f32 0.0, %v2409
        %2411 = vmatprep.mubr.bf16.mxu0 %v395
        %2412 = vmatmul.mubr.bf16.gmra.mrb[0].mxu0 %v394
        %v2413 = vpop.f32.mrb[0].mxu0
        %v2414 = vadd.f32 0.0, %v2413
        %v2415 = vpop.f32.mrb[0].mxu0
        %v2416 = vadd.f32 0.0, %v2415
        %v2417 = vpop.f32.mrb[0].mxu0
        %v2418 = vadd.f32 0.0, %v2417
        %v2419 = vpop.f32.mrb[0].mxu0
        %v2420 = vadd.f32 0.0, %v2419
        %2421 = vmatprep.mubr.bf16.mxu0 %v398
        %2422 = vmatmul.mubr.bf16.gmra.mrb[0].mxu0 %v397
        %v2423 = vpop.f32.mrb[0].mxu0
        %v2424 = vadd.f32 0.0, %v2423
        %v2425 = vpop.f32.mrb[0].mxu0
        %v2426 = vadd.f32 0.0, %v2425
        %v2427 = vpop.f32.mrb[0].mxu0
        %v2428 = vadd.f32 0.0, %v2427
        %v2429 = vpop.f32.mrb[0].mxu0
        %v2430 = vadd.f32 0.0, %v2429
        %2431 = vmatprep.mubr.bf16.mxu0 %v401
        %2432 = vmatmul.mubr.bf16.gmra.mrb[0].mxu0 %v400
        %v2433 = vpop.f32.mrb[0].mxu0
        %v2434 = vadd.f32 0.0, %v2433
        %v2435 = vpop.f32.mrb[0].mxu0
        %v2436 = vadd.f32 0.0, %v2435
        %v2437 = vpop.f32.mrb[0].mxu0
        %v2438 = vadd.f32 0.0, %v2437
        %v2439 = vpop.f32.mrb[0].mxu0
        %v2440 = vadd.f32 0.0, %v2439
        %2441 = vmatprep.mubr.bf16.mxu0 %v404
        %2442 = vmatmul.mubr.bf16.gmra.mrb[0].mxu0 %v403
        %v2443 = vpop.f32.mrb[0].mxu0
        %v2444 = vadd.f32 0.0, %v2443
        %v2445 = vpop.f32.mrb[0].mxu0
        %v2446 = vadd.f32 0.0, %v2445
        %v2447 = vpop.f32.mrb[0].mxu0
        %v2448 = vadd.f32 0.0, %v2447
        %v2449 = vpop.f32.mrb[0].mxu0
        %v2450 = vadd.f32 0.0, %v2449
        %2451 = vmatprep.mubr.bf16.mxu0 %v407
        %2452 = vmatmul.mubr.bf16.gmra.mrb[0].mxu0 %v406
        %v2453 = vpop.f32.mrb[0].mxu0
        %v2454 = vadd.f32 0.0, %v2453
        %v2455 = vpop.f32.mrb[0].mxu0
        %v2456 = vadd.f32 0.0, %v2455
        %v2457 = vpop.f32.mrb[0].mxu0
        %v2458 = vadd.f32 0.0, %v2457
        %v2459 = vpop.f32.mrb[0].mxu0
        %v2460 = vadd.f32 0.0, %v2459
        %2461 = vmatprep.mubr.bf16.mxu0 %v410
        %2462 = vmatmul.mubr.bf16.gmra.mrb[0].mxu0 %v409
        %v2463 = vpop.f32.mrb[0].mxu0
        %v2464 = vadd.f32 0.0, %v2463
        %v2465 = vpop.f32.mrb[0].mxu0
        %v2466 = vadd.f32 0.0, %v2465
        %v2467 = vpop.f32.mrb[0].mxu0
        %v2468 = vadd.f32 0.0, %v2467
        %v2469 = vpop.f32.mrb[0].mxu0
        %v2470 = vadd.f32 0.0, %v2469
        %2471 = vmatprep.mubr.bf16.mxu0 %v413
        %2472 = vmatmul.mubr.bf16.gmra.mrb[0].mxu0 %v412
        %v2473 = vpop.f32.mrb[0].mxu0
        %v2474 = vadd.f32 0.0, %v2473
        %v2475 = vpop.f32.mrb[0].mxu0
        %v2476 = vadd.f32 0.0, %v2475
        %v2477 = vpop.f32.mrb[0].mxu0
        %v2478 = vadd.f32 0.0, %v2477
        %v2479 = vpop.f32.mrb[0].mxu0
        %v2480 = vadd.f32 0.0, %v2479
        %2481 = vdwg.mxu0
        %2482 = vmatprep.subr.bf16.mxu0 %v1762
        %2483 = vmatpush1.bf16.msra.mxu0 %v1761
        %2484 = vmatprep.subr.bf16.mxu0 %v1774
        %2485 = vmatpush1.bf16.msra.mxu0 %v1773
        %2486 = vmatprep.subr.bf16.mxu0 %v1786
        %2487 = vmatpush1.bf16.msra.mxu0 %v1785
        %2488 = vmatprep.subr.bf16.mxu0 %v1798
        %2489 = vmatpush1.bf16.msra.mxu0 %v1797
        %2490 = vmatprep.subr.bf16.mxu0 %v1810
        %2491 = vmatpush1.bf16.msra.mxu0 %v1809
        %2492 = vmatprep.subr.bf16.mxu0 %v1822
        %2493 = vmatpush1.bf16.msra.mxu0 %v1821
        %2494 = vmatprep.subr.bf16.mxu0 %v1834
        %2495 = vmatpush1.bf16.msra.mxu0 %v1833
        %2496 = vmatprep.subr.bf16.mxu0 %v1846
        %2497 = vmatpush1.bf16.msra.mxu0 %v1845
        %2498 = vmatprep.subr.bf16.mxu0 0
        %2499 = vmatpush1.bf16.msra.mxu0 0
        %2500 = vmatprep.subr.bf16.mxu0 0
        %2501 = vmatpush1.bf16.msra.mxu0 0
        %2502 = vmatprep.subr.bf16.mxu0 0
        %2503 = vmatpush1.bf16.msra.mxu0 0
        %2504 = vmatprep.subr.bf16.mxu0 0
        %2505 = vmatpush1.bf16.msra.mxu0 0
        %2506 = vmatprep.subr.bf16.mxu0 0
        %2507 = vmatpush1.bf16.msra.mxu0 0
        %2508 = vmatprep.subr.bf16.mxu0 0
        %2509 = vmatpush1.bf16.msra.mxu0 0
        %2510 = vmatprep.subr.bf16.mxu0 0
        %2511 = vmatpush1.bf16.msra.mxu0 0
        %2512 = vmatprep.subr.bf16.mxu0 0
        %2513 = vmatpush1.bf16.msra.mxu0 0
        %2514 = vmatprep.mubr.bf16.mxu0 0
        %2515 = vmatmul.mubr.bf16.gmra.mrb[0].mxu0 %v393
        %v2516 = vpop.f32.mrb[0].mxu0
        %v2517 = vadd.f32 %v2404, %v2516
        %v2518 = vpop.f32.mrb[0].mxu0
        %v2519 = vadd.f32 %v2406, %v2518
        %v2520 = vpop.f32.mrb[0].mxu0
        %v2521 = vadd.f32 %v2408, %v2520
        %v2522 = vpop.f32.mrb[0].mxu0
        %v2523 = vadd.f32 %v2410, %v2522
        %2524 = vmatprep.mubr.bf16.mxu0 0
        %2525 = vmatmul.mubr.bf16.gmra.mrb[0].mxu0 %v396
        %v2526 = vpop.f32.mrb[0].mxu0
        %v2527 = vadd.f32 %v2414, %v2526
        %v2528 = vpop.f32.mrb[0].mxu0
        %v2529 = vadd.f32 %v2416, %v2528
        %v2530 = vpop.f32.mrb[0].mxu0
        %v2531 = vadd.f32 %v2418, %v2530
        %v2532 = vpop.f32.mrb[0].mxu0
        %v2533 = vadd.f32 %v2420, %v2532
        %2534 = vmatprep.mubr.bf16.mxu0 0
        %2535 = vmatmul.mubr.bf16.gmra.mrb[0].mxu0 %v399
        %v2536 = vpop.f32.mrb[0].mxu0
        %v2537 = vadd.f32 %v2424, %v2536
        %v2538 = vpop.f32.mrb[0].mxu0
        %v2539 = vadd.f32 %v2426, %v2538
        %v2540 = vpop.f32.mrb[0].mxu0
        %v2541 = vadd.f32 %v2428, %v2540
        %v2542 = vpop.f32.mrb[0].mxu0
        %v2543 = vadd.f32 %v2430, %v2542
        %2544 = vmatprep.mubr.bf16.mxu0 0
        %2545 = vmatmul.mubr.bf16.gmra.mrb[0].mxu0 %v402
        %v2546 = vpop.f32.mrb[0].mxu0
        %v2547 = vadd.f32 %v2434, %v2546
        %v2548 = vpop.f32.mrb[0].mxu0
        %v2549 = vadd.f32 %v2436, %v2548
        %v2550 = vpop.f32.mrb[0].mxu0
        %v2551 = vadd.f32 %v2438, %v2550
        %v2552 = vpop.f32.mrb[0].mxu0
        %v2553 = vadd.f32 %v2440, %v2552
        %2554 = vmatprep.mubr.bf16.mxu0 0
        %2555 = vmatmul.mubr.bf16.gmra.mrb[0].mxu0 %v405
        %v2556 = vpop.f32.mrb[0].mxu0
        %v2557 = vadd.f32 %v2444, %v2556
        %v2558 = vpop.f32.mrb[0].mxu0
        %v2559 = vadd.f32 %v2446, %v2558
        %v2560 = vpop.f32.mrb[0].mxu0
        %v2561 = vadd.f32 %v2448, %v2560
        %v2562 = vpop.f32.mrb[0].mxu0
        %v2563 = vadd.f32 %v2450, %v2562
        %2564 = vmatprep.mubr.bf16.mxu0 0
        %2565 = vmatmul.mubr.bf16.gmra.mrb[0].mxu0 %v408
        %v2566 = vpop.f32.mrb[0].mxu0
        %v2567 = vadd.f32 %v2454, %v2566
        %v2568 = vpop.f32.mrb[0].mxu0
        %v2569 = vadd.f32 %v2456, %v2568
        %v2570 = vpop.f32.mrb[0].mxu0
        %v2571 = vadd.f32 %v2458, %v2570
        %v2572 = vpop.f32.mrb[0].mxu0
        %v2573 = vadd.f32 %v2460, %v2572
        %2574 = vmatprep.mubr.bf16.mxu0 0
        %2575 = vmatmul.mubr.bf16.gmra.mrb[0].mxu0 %v411
        %v2576 = vpop.f32.mrb[0].mxu0
        %v2577 = vadd.f32 %v2464, %v2576
        %v2578 = vpop.f32.mrb[0].mxu0
        %v2579 = vadd.f32 %v2466, %v2578
        %v2580 = vpop.f32.mrb[0].mxu0
        %v2581 = vadd.f32 %v2468, %v2580
        %v2582 = vpop.f32.mrb[0].mxu0
        %v2583 = vadd.f32 %v2470, %v2582
        %2584 = vmatprep.mubr.bf16.mxu0 0
        %2585 = vmatmul.mubr.bf16.gmra.mrb[0].mxu0 %v414
        %v2586 = vpop.f32.mrb[0].mxu0
        %v2587 = vadd.f32 %v2474, %v2586
        %v2588 = vpop.f32.mrb[0].mxu0
        %v2589 = vadd.f32 %v2476, %v2588
        %v2590 = vpop.f32.mrb[0].mxu0
        %v2591 = vadd.f32 %v2478, %v2590
        %v2592 = vpop.f32.mrb[0].mxu0
        %v2593 = vadd.f32 %v2480, %v2592
        %2594 = vdwg.mxu0
        %2595 = vmatprep.subr.bf16.mxu0 %v1572
        %2596 = vmatpush1.bf16.msra.mxu0 %v1571
        %2597 = vmatprep.subr.bf16.mxu0 %v1584
        %2598 = vmatpush1.bf16.msra.mxu0 %v1583
        %2599 = vmatprep.subr.bf16.mxu0 %v1596
        %2600 = vmatpush1.bf16.msra.mxu0 %v1595
        %2601 = vmatprep.subr.bf16.mxu0 %v1608
        %2602 = vmatpush1.bf16.msra.mxu0 %v1607
        %2603 = vmatprep.subr.bf16.mxu0 %v1620
        %2604 = vmatpush1.bf16.msra.mxu0 %v1619
        %2605 = vmatprep.subr.bf16.mxu0 %v1632
        %2606 = vmatpush1.bf16.msra.mxu0 %v1631
        %2607 = vmatprep.subr.bf16.mxu0 %v1644
        %2608 = vmatpush1.bf16.msra.mxu0 %v1643
        %2609 = vmatprep.subr.bf16.mxu0 %v1656
        %2610 = vmatpush1.bf16.msra.mxu0 %v1655
        %2611 = vmatprep.subr.bf16.mxu0 %v1668
        %2612 = vmatpush1.bf16.msra.mxu0 %v1667
        %2613 = vmatprep.subr.bf16.mxu0 %v1680
        %2614 = vmatpush1.bf16.msra.mxu0 %v1679
        %2615 = vmatprep.subr.bf16.mxu0 %v1692
        %2616 = vmatpush1.bf16.msra.mxu0 %v1691
        %2617 = vmatprep.subr.bf16.mxu0 %v1704
        %2618 = vmatpush1.bf16.msra.mxu0 %v1703
        %2619 = vmatprep.subr.bf16.mxu0 %v1716
        %2620 = vmatpush1.bf16.msra.mxu0 %v1715
        %2621 = vmatprep.subr.bf16.mxu0 %v1728
        %2622 = vmatpush1.bf16.msra.mxu0 %v1727
        %2623 = vmatprep.subr.bf16.mxu0 %v1740
        %2624 = vmatpush1.bf16.msra.mxu0 %v1739
        %2625 = vmatprep.subr.bf16.mxu0 %v1752
        %2626 = vmatpush1.bf16.msra.mxu0 %v1751
        %2627 = vmatprep.mubr.bf16.mxu0 %v392
        %2628 = vmatmul.mubr.bf16.gmra.mrb[0].mxu0 %v391
        %v2629 = vpop.f32.mrb[0].mxu0
        %v2630 = vadd.f32 0.0, %v2629
        %v2631 = vpop.f32.mrb[0].mxu0
        %v2632 = vadd.f32 0.0, %v2631
        %v2633 = vpop.f32.mrb[0].mxu0
        %v2634 = vadd.f32 0.0, %v2633
        %v2635 = vpop.f32.mrb[0].mxu0
        %v2636 = vadd.f32 0.0, %v2635
        %2637 = vmatprep.mubr.bf16.mxu0 %v395
        %2638 = vmatmul.mubr.bf16.gmra.mrb[0].mxu0 %v394
        %v2639 = vpop.f32.mrb[0].mxu0
        %v2640 = vadd.f32 0.0, %v2639
        %v2641 = vpop.f32.mrb[0].mxu0
        %v2642 = vadd.f32 0.0, %v2641
        %v2643 = vpop.f32.mrb[0].mxu0
        %v2644 = vadd.f32 0.0, %v2643
        %v2645 = vpop.f32.mrb[0].mxu0
        %v2646 = vadd.f32 0.0, %v2645
        %2647 = vmatprep.mubr.bf16.mxu0 %v398
        %2648 = vmatmul.mubr.bf16.gmra.mrb[0].mxu0 %v397
        %v2649 = vpop.f32.mrb[0].mxu0
        %v2650 = vadd.f32 0.0, %v2649
        %v2651 = vpop.f32.mrb[0].mxu0
        %v2652 = vadd.f32 0.0, %v2651
        %v2653 = vpop.f32.mrb[0].mxu0
        %v2654 = vadd.f32 0.0, %v2653
        %v2655 = vpop.f32.mrb[0].mxu0
        %v2656 = vadd.f32 0.0, %v2655
        %2657 = vmatprep.mubr.bf16.mxu0 %v401
        %2658 = vmatmul.mubr.bf16.gmra.mrb[0].mxu0 %v400
        %v2659 = vpop.f32.mrb[0].mxu0
        %v2660 = vadd.f32 0.0, %v2659
        %v2661 = vpop.f32.mrb[0].mxu0
        %v2662 = vadd.f32 0.0, %v2661
        %v2663 = vpop.f32.mrb[0].mxu0
        %v2664 = vadd.f32 0.0, %v2663
        %v2665 = vpop.f32.mrb[0].mxu0
        %v2666 = vadd.f32 0.0, %v2665
        %2667 = vmatprep.mubr.bf16.mxu0 %v404
        %2668 = vmatmul.mubr.bf16.gmra.mrb[0].mxu0 %v403
        %v2669 = vpop.f32.mrb[0].mxu0
        %v2670 = vadd.f32 0.0, %v2669
        %v2671 = vpop.f32.mrb[0].mxu0
        %v2672 = vadd.f32 0.0, %v2671
        %v2673 = vpop.f32.mrb[0].mxu0
        %v2674 = vadd.f32 0.0, %v2673
        %v2675 = vpop.f32.mrb[0].mxu0
        %v2676 = vadd.f32 0.0, %v2675
        %2677 = vmatprep.mubr.bf16.mxu0 %v407
        %2678 = vmatmul.mubr.bf16.gmra.mrb[0].mxu0 %v406
        %v2679 = vpop.f32.mrb[0].mxu0
        %v2680 = vadd.f32 0.0, %v2679
        %v2681 = vpop.f32.mrb[0].mxu0
        %v2682 = vadd.f32 0.0, %v2681
        %v2683 = vpop.f32.mrb[0].mxu0
        %v2684 = vadd.f32 0.0, %v2683
        %v2685 = vpop.f32.mrb[0].mxu0
        %v2686 = vadd.f32 0.0, %v2685
        %2687 = vmatprep.mubr.bf16.mxu0 %v410
        %2688 = vmatmul.mubr.bf16.gmra.mrb[0].mxu0 %v409
        %v2689 = vpop.f32.mrb[0].mxu0
        %v2690 = vadd.f32 0.0, %v2689
        %v2691 = vpop.f32.mrb[0].mxu0
        %v2692 = vadd.f32 0.0, %v2691
        %v2693 = vpop.f32.mrb[0].mxu0
        %v2694 = vadd.f32 0.0, %v2693
        %v2695 = vpop.f32.mrb[0].mxu0
        %v2696 = vadd.f32 0.0, %v2695
        %2697 = vmatprep.mubr.bf16.mxu0 %v413
        %2698 = vmatmul.mubr.bf16.gmra.mrb[0].mxu0 %v412
        %v2699 = vpop.f32.mrb[0].mxu0
        %v2700 = vadd.f32 0.0, %v2699
        %v2701 = vpop.f32.mrb[0].mxu0
        %v2702 = vadd.f32 0.0, %v2701
        %v2703 = vpop.f32.mrb[0].mxu0
        %v2704 = vadd.f32 0.0, %v2703
        %v2705 = vpop.f32.mrb[0].mxu0
        %v2706 = vadd.f32 0.0, %v2705
        %2707 = vdwg.mxu0
        %2708 = vmatprep.subr.bf16.mxu0 %v1764
        %2709 = vmatpush1.bf16.msra.mxu0 %v1763
        %2710 = vmatprep.subr.bf16.mxu0 %v1776
        %2711 = vmatpush1.bf16.msra.mxu0 %v1775
        %2712 = vmatprep.subr.bf16.mxu0 %v1788
        %2713 = vmatpush1.bf16.msra.mxu0 %v1787
        %2714 = vmatprep.subr.bf16.mxu0 %v1800
        %2715 = vmatpush1.bf16.msra.mxu0 %v1799
        %2716 = vmatprep.subr.bf16.mxu0 %v1812
        %2717 = vmatpush1.bf16.msra.mxu0 %v1811
        %2718 = vmatprep.subr.bf16.mxu0 %v1824
        %2719 = vmatpush1.bf16.msra.mxu0 %v1823
        %2720 = vmatprep.subr.bf16.mxu0 %v1836
        %2721 = vmatpush1.bf16.msra.mxu0 %v1835
        %2722 = vmatprep.subr.bf16.mxu0 %v1848
        %2723 = vmatpush1.bf16.msra.mxu0 %v1847
        %2724 = vmatprep.subr.bf16.mxu0 0
        %2725 = vmatpush1.bf16.msra.mxu0 0
        %2726 = vmatprep.subr.bf16.mxu0 0
        %2727 = vmatpush1.bf16.msra.mxu0 0
        %2728 = vmatprep.subr.bf16.mxu0 0
        %2729 = vmatpush1.bf16.msra.mxu0 0
        %2730 = vmatprep.subr.bf16.mxu0 0
        %2731 = vmatpush1.bf16.msra.mxu0 0
        %2732 = vmatprep.subr.bf16.mxu0 0
        %2733 = vmatpush1.bf16.msra.mxu0 0
        %2734 = vmatprep.subr.bf16.mxu0 0
        %2735 = vmatpush1.bf16.msra.mxu0 0
        %2736 = vmatprep.subr.bf16.mxu0 0
        %2737 = vmatpush1.bf16.msra.mxu0 0
        %2738 = vmatprep.subr.bf16.mxu0 0
        %2739 = vmatpush1.bf16.msra.mxu0 0
        %2740 = vmatprep.mubr.bf16.mxu0 0
        %2741 = vmatmul.mubr.bf16.gmra.mrb[0].mxu0 %v393
        %v2742 = vpop.f32.mrb[0].mxu0
        %v2743 = vadd.f32 %v2630, %v2742
        %v2744 = vpop.f32.mrb[0].mxu0
        %v2745 = vadd.f32 %v2632, %v2744
        %v2746 = vpop.f32.mrb[0].mxu0
        %v2747 = vadd.f32 %v2634, %v2746
        %v2748 = vpop.f32.mrb[0].mxu0
        %v2749 = vadd.f32 %v2636, %v2748
        %2750 = vmatprep.mubr.bf16.mxu0 0
        %2751 = vmatmul.mubr.bf16.gmra.mrb[0].mxu0 %v396
        %v2752 = vpop.f32.mrb[0].mxu0
        %v2753 = vadd.f32 %v2640, %v2752
        %v2754 = vpop.f32.mrb[0].mxu0
        %v2755 = vadd.f32 %v2642, %v2754
        %v2756 = vpop.f32.mrb[0].mxu0
        %v2757 = vadd.f32 %v2644, %v2756
        %v2758 = vpop.f32.mrb[0].mxu0
        %v2759 = vadd.f32 %v2646, %v2758
        %2760 = vmatprep.mubr.bf16.mxu0 0
        %2761 = vmatmul.mubr.bf16.gmra.mrb[0].mxu0 %v399
        %v2762 = vpop.f32.mrb[0].mxu0
        %v2763 = vadd.f32 %v2650, %v2762
        %v2764 = vpop.f32.mrb[0].mxu0
        %v2765 = vadd.f32 %v2652, %v2764
        %v2766 = vpop.f32.mrb[0].mxu0
        %v2767 = vadd.f32 %v2654, %v2766
        %v2768 = vpop.f32.mrb[0].mxu0
        %v2769 = vadd.f32 %v2656, %v2768
        %2770 = vmatprep.mubr.bf16.mxu0 0
        %2771 = vmatmul.mubr.bf16.gmra.mrb[0].mxu0 %v402
        %v2772 = vpop.f32.mrb[0].mxu0
        %v2773 = vadd.f32 %v2660, %v2772
        %v2774 = vpop.f32.mrb[0].mxu0
        %v2775 = vadd.f32 %v2662, %v2774
        %v2776 = vpop.f32.mrb[0].mxu0
        %v2777 = vadd.f32 %v2664, %v2776
        %v2778 = vpop.f32.mrb[0].mxu0
        %v2779 = vadd.f32 %v2666, %v2778
        %2780 = vmatprep.mubr.bf16.mxu0 0
        %2781 = vmatmul.mubr.bf16.gmra.mrb[0].mxu0 %v405
        %v2782 = vpop.f32.mrb[0].mxu0
        %v2783 = vadd.f32 %v2670, %v2782
        %v2784 = vpop.f32.mrb[0].mxu0
        %v2785 = vadd.f32 %v2672, %v2784
        %v2786 = vpop.f32.mrb[0].mxu0
        %v2787 = vadd.f32 %v2674, %v2786
        %v2788 = vpop.f32.mrb[0].mxu0
        %v2789 = vadd.f32 %v2676, %v2788
        %2790 = vmatprep.mubr.bf16.mxu0 0
        %2791 = vmatmul.mubr.bf16.gmra.mrb[0].mxu0 %v408
        %v2792 = vpop.f32.mrb[0].mxu0
        %v2793 = vadd.f32 %v2680, %v2792
        %v2794 = vpop.f32.mrb[0].mxu0
        %v2795 = vadd.f32 %v2682, %v2794
        %v2796 = vpop.f32.mrb[0].mxu0
        %v2797 = vadd.f32 %v2684, %v2796
        %v2798 = vpop.f32.mrb[0].mxu0
        %v2799 = vadd.f32 %v2686, %v2798
        %2800 = vmatprep.mubr.bf16.mxu0 0
        %2801 = vmatmul.mubr.bf16.gmra.mrb[0].mxu0 %v411
        %v2802 = vpop.f32.mrb[0].mxu0
        %v2803 = vadd.f32 %v2690, %v2802
        %v2804 = vpop.f32.mrb[0].mxu0
        %v2805 = vadd.f32 %v2692, %v2804
        %v2806 = vpop.f32.mrb[0].mxu0
        %v2807 = vadd.f32 %v2694, %v2806
        %v2808 = vpop.f32.mrb[0].mxu0
        %v2809 = vadd.f32 %v2696, %v2808
        %2810 = vmatprep.mubr.bf16.mxu0 0
        %2811 = vmatmul.mubr.bf16.gmra.mrb[0].mxu0 %v414
        %v2812 = vpop.f32.mrb[0].mxu0
        %v2813 = vadd.f32 %v2700, %v2812
        %v2814 = vpop.f32.mrb[0].mxu0
        %v2815 = vadd.f32 %v2702, %v2814
        %v2816 = vpop.f32.mrb[0].mxu0
        %v2817 = vadd.f32 %v2704, %v2816
        %v2818 = vpop.f32.mrb[0].mxu0
        %v2819 = vadd.f32 %v2706, %v2818
        %2820 = vdwg.mxu0
        %2821 = vmatprep.subr.bf16.mxu0 %v1574
        %2822 = vmatpush1.bf16.msra.mxu0 %v1573
        %2823 = vmatprep.subr.bf16.mxu0 %v1586
        %2824 = vmatpush1.bf16.msra.mxu0 %v1585
        %2825 = vmatprep.subr.bf16.mxu0 %v1598
        %2826 = vmatpush1.bf16.msra.mxu0 %v1597
        %2827 = vmatprep.subr.bf16.mxu0 %v1610
        %2828 = vmatpush1.bf16.msra.mxu0 %v1609
        %2829 = vmatprep.subr.bf16.mxu0 %v1622
        %2830 = vmatpush1.bf16.msra.mxu0 %v1621
        %2831 = vmatprep.subr.bf16.mxu0 %v1634
        %2832 = vmatpush1.bf16.msra.mxu0 %v1633
        %2833 = vmatprep.subr.bf16.mxu0 %v1646
        %2834 = vmatpush1.bf16.msra.mxu0 %v1645
        %2835 = vmatprep.subr.bf16.mxu0 %v1658
        %2836 = vmatpush1.bf16.msra.mxu0 %v1657
        %2837 = vmatprep.subr.bf16.mxu0 %v1670
        %2838 = vmatpush1.bf16.msra.mxu0 %v1669
        %2839 = vmatprep.subr.bf16.mxu0 %v1682
        %2840 = vmatpush1.bf16.msra.mxu0 %v1681
        %2841 = vmatprep.subr.bf16.mxu0 %v1694
        %2842 = vmatpush1.bf16.msra.mxu0 %v1693
        %2843 = vmatprep.subr.bf16.mxu0 %v1706
        %2844 = vmatpush1.bf16.msra.mxu0 %v1705
        %2845 = vmatprep.subr.bf16.mxu0 %v1718
        %2846 = vmatpush1.bf16.msra.mxu0 %v1717
        %2847 = vmatprep.subr.bf16.mxu0 %v1730
        %2848 = vmatpush1.bf16.msra.mxu0 %v1729
        %2849 = vmatprep.subr.bf16.mxu0 %v1742
        %2850 = vmatpush1.bf16.msra.mxu0 %v1741
        %2851 = vmatprep.subr.bf16.mxu0 %v1754
        %2852 = vmatpush1.bf16.msra.mxu0 %v1753
        %2853 = vmatprep.mubr.bf16.mxu0 %v392
        %2854 = vmatmul.mubr.bf16.gmra.mrb[0].mxu0 %v391
        %v2855 = vpop.f32.mrb[0].mxu0
        %v2856 = vadd.f32 0.0, %v2855
        %v2857 = vpop.f32.mrb[0].mxu0
        %v2858 = vadd.f32 0.0, %v2857
        %v2859 = vpop.f32.mrb[0].mxu0
        %v2860 = vadd.f32 0.0, %v2859
        %v2861 = vpop.f32.mrb[0].mxu0
        %v2862 = vadd.f32 0.0, %v2861
        %2863 = vmatprep.mubr.bf16.mxu0 %v395
        %2864 = vmatmul.mubr.bf16.gmra.mrb[0].mxu0 %v394
        %v2865 = vpop.f32.mrb[0].mxu0
        %v2866 = vadd.f32 0.0, %v2865
        %v2867 = vpop.f32.mrb[0].mxu0
        %v2868 = vadd.f32 0.0, %v2867
        %v2869 = vpop.f32.mrb[0].mxu0
        %v2870 = vadd.f32 0.0, %v2869
        %v2871 = vpop.f32.mrb[0].mxu0
        %v2872 = vadd.f32 0.0, %v2871
        %2873 = vmatprep.mubr.bf16.mxu0 %v398
        %2874 = vmatmul.mubr.bf16.gmra.mrb[0].mxu0 %v397
        %v2875 = vpop.f32.mrb[0].mxu0
        %v2876 = vadd.f32 0.0, %v2875
        %v2877 = vpop.f32.mrb[0].mxu0
        %v2878 = vadd.f32 0.0, %v2877
        %v2879 = vpop.f32.mrb[0].mxu0
        %v2880 = vadd.f32 0.0, %v2879
        %v2881 = vpop.f32.mrb[0].mxu0
        %v2882 = vadd.f32 0.0, %v2881
        %2883 = vmatprep.mubr.bf16.mxu0 %v401
        %2884 = vmatmul.mubr.bf16.gmra.mrb[0].mxu0 %v400
        %v2885 = vpop.f32.mrb[0].mxu0
        %v2886 = vadd.f32 0.0, %v2885
        %v2887 = vpop.f32.mrb[0].mxu0
        %v2888 = vadd.f32 0.0, %v2887
        %v2889 = vpop.f32.mrb[0].mxu0
        %v2890 = vadd.f32 0.0, %v2889
        %v2891 = vpop.f32.mrb[0].mxu0
        %v2892 = vadd.f32 0.0, %v2891
        %2893 = vmatprep.mubr.bf16.mxu0 %v404
        %2894 = vmatmul.mubr.bf16.gmra.mrb[0].mxu0 %v403
        %v2895 = vpop.f32.mrb[0].mxu0
        %v2896 = vadd.f32 0.0, %v2895
        %v2897 = vpop.f32.mrb[0].mxu0
        %v2898 = vadd.f32 0.0, %v2897
        %v2899 = vpop.f32.mrb[0].mxu0
        %v2900 = vadd.f32 0.0, %v2899
        %v2901 = vpop.f32.mrb[0].mxu0
        %v2902 = vadd.f32 0.0, %v2901
        %2903 = vmatprep.mubr.bf16.mxu0 %v407
        %2904 = vmatmul.mubr.bf16.gmra.mrb[0].mxu0 %v406
        %v2905 = vpop.f32.mrb[0].mxu0
        %v2906 = vadd.f32 0.0, %v2905
        %v2907 = vpop.f32.mrb[0].mxu0
        %v2908 = vadd.f32 0.0, %v2907
        %v2909 = vpop.f32.mrb[0].mxu0
        %v2910 = vadd.f32 0.0, %v2909
        %v2911 = vpop.f32.mrb[0].mxu0
        %v2912 = vadd.f32 0.0, %v2911
        %2913 = vmatprep.mubr.bf16.mxu0 %v410
        %2914 = vmatmul.mubr.bf16.gmra.mrb[0].mxu0 %v409
        %v2915 = vpop.f32.mrb[0].mxu0
        %v2916 = vadd.f32 0.0, %v2915
        %v2917 = vpop.f32.mrb[0].mxu0
        %v2918 = vadd.f32 0.0, %v2917
        %v2919 = vpop.f32.mrb[0].mxu0
        %v2920 = vadd.f32 0.0, %v2919
        %v2921 = vpop.f32.mrb[0].mxu0
        %v2922 = vadd.f32 0.0, %v2921
        %2923 = vmatprep.mubr.bf16.mxu0 %v413
        %2924 = vmatmul.mubr.bf16.gmra.mrb[0].mxu0 %v412
        %v2925 = vpop.f32.mrb[0].mxu0
        %v2926 = vadd.f32 0.0, %v2925
        %v2927 = vpop.f32.mrb[0].mxu0
        %v2928 = vadd.f32 0.0, %v2927
        %v2929 = vpop.f32.mrb[0].mxu0
        %v2930 = vadd.f32 0.0, %v2929
        %v2931 = vpop.f32.mrb[0].mxu0
        %v2932 = vadd.f32 0.0, %v2931
        %2933 = vdwg.mxu0
        %2934 = vmatprep.subr.bf16.mxu0 %v1766
        %2935 = vmatpush1.bf16.msra.mxu0 %v1765
        %2936 = vmatprep.subr.bf16.mxu0 %v1778
        %2937 = vmatpush1.bf16.msra.mxu0 %v1777
        %2938 = vmatprep.subr.bf16.mxu0 %v1790
        %2939 = vmatpush1.bf16.msra.mxu0 %v1789
        %2940 = vmatprep.subr.bf16.mxu0 %v1802
        %2941 = vmatpush1.bf16.msra.mxu0 %v1801
        %2942 = vmatprep.subr.bf16.mxu0 %v1814
        %2943 = vmatpush1.bf16.msra.mxu0 %v1813
        %2944 = vmatprep.subr.bf16.mxu0 %v1826
        %2945 = vmatpush1.bf16.msra.mxu0 %v1825
        %2946 = vmatprep.subr.bf16.mxu0 %v1838
        %2947 = vmatpush1.bf16.msra.mxu0 %v1837
        %2948 = vmatprep.subr.bf16.mxu0 %v1850
        %2949 = vmatpush1.bf16.msra.mxu0 %v1849
        %2950 = vmatprep.subr.bf16.mxu0 0
        %2951 = vmatpush1.bf16.msra.mxu0 0
        %2952 = vmatprep.subr.bf16.mxu0 0
        %2953 = vmatpush1.bf16.msra.mxu0 0
        %2954 = vmatprep.subr.bf16.mxu0 0
        %2955 = vmatpush1.bf16.msra.mxu0 0
        %2956 = vmatprep.subr.bf16.mxu0 0
        %2957 = vmatpush1.bf16.msra.mxu0 0
        %2958 = vmatprep.subr.bf16.mxu0 0
        %2959 = vmatpush1.bf16.msra.mxu0 0
        %2960 = vmatprep.subr.bf16.mxu0 0
        %2961 = vmatpush1.bf16.msra.mxu0 0
        %2962 = vmatprep.subr.bf16.mxu0 0
        %2963 = vmatpush1.bf16.msra.mxu0 0
        %2964 = vmatprep.subr.bf16.mxu0 0
        %2965 = vmatpush1.bf16.msra.mxu0 0
        %2966 = vmatprep.mubr.bf16.mxu0 0
        %2967 = vmatmul.mubr.bf16.gmra.mrb[0].mxu0 %v393
        %v2968 = vpop.f32.mrb[0].mxu0
        %v2969 = vadd.f32 %v2856, %v2968
        %v2970 = vpop.f32.mrb[0].mxu0
        %v2971 = vadd.f32 %v2858, %v2970
        %v2972 = vpop.f32.mrb[0].mxu0
        %v2973 = vadd.f32 %v2860, %v2972
        %v2974 = vpop.f32.mrb[0].mxu0
        %v2975 = vadd.f32 %v2862, %v2974
        %2976 = vmatprep.mubr.bf16.mxu0 0
        %2977 = vmatmul.mubr.bf16.gmra.mrb[0].mxu0 %v396
        %v2978 = vpop.f32.mrb[0].mxu0
        %v2979 = vadd.f32 %v2866, %v2978
        %v2980 = vpop.f32.mrb[0].mxu0
        %v2981 = vadd.f32 %v2868, %v2980
        %v2982 = vpop.f32.mrb[0].mxu0
        %v2983 = vadd.f32 %v2870, %v2982
        %v2984 = vpop.f32.mrb[0].mxu0
        %v2985 = vadd.f32 %v2872, %v2984
        %2986 = vmatprep.mubr.bf16.mxu0 0
        %2987 = vmatmul.mubr.bf16.gmra.mrb[0].mxu0 %v399
        %v2988 = vpop.f32.mrb[0].mxu0
        %v2989 = vadd.f32 %v2876, %v2988
        %v2990 = vpop.f32.mrb[0].mxu0
        %v2991 = vadd.f32 %v2878, %v2990
        %v2992 = vpop.f32.mrb[0].mxu0
        %v2993 = vadd.f32 %v2880, %v2992
        %v2994 = vpop.f32.mrb[0].mxu0
        %v2995 = vadd.f32 %v2882, %v2994
        %2996 = vmatprep.mubr.bf16.mxu0 0
        %2997 = vmatmul.mubr.bf16.gmra.mrb[0].mxu0 %v402
        %v2998 = vpop.f32.mrb[0].mxu0
        %v2999 = vadd.f32 %v2886, %v2998
        %v3000 = vpop.f32.mrb[0].mxu0
        %v3001 = vadd.f32 %v2888, %v3000
        %v3002 = vpop.f32.mrb[0].mxu0
        %v3003 = vadd.f32 %v2890, %v3002
        %v3004 = vpop.f32.mrb[0].mxu0
        %v3005 = vadd.f32 %v2892, %v3004
        %3006 = vmatprep.mubr.bf16.mxu0 0
        %3007 = vmatmul.mubr.bf16.gmra.mrb[0].mxu0 %v405
        %v3008 = vpop.f32.mrb[0].mxu0
        %v3009 = vadd.f32 %v2896, %v3008
        %v3010 = vpop.f32.mrb[0].mxu0
        %v3011 = vadd.f32 %v2898, %v3010
        %v3012 = vpop.f32.mrb[0].mxu0
        %v3013 = vadd.f32 %v2900, %v3012
        %v3014 = vpop.f32.mrb[0].mxu0
        %v3015 = vadd.f32 %v2902, %v3014
        %3016 = vmatprep.mubr.bf16.mxu0 0
        %3017 = vmatmul.mubr.bf16.gmra.mrb[0].mxu0 %v408
        %v3018 = vpop.f32.mrb[0].mxu0
        %v3019 = vadd.f32 %v2906, %v3018
        %v3020 = vpop.f32.mrb[0].mxu0
        %v3021 = vadd.f32 %v2908, %v3020
        %v3022 = vpop.f32.mrb[0].mxu0
        %v3023 = vadd.f32 %v2910, %v3022
        %v3024 = vpop.f32.mrb[0].mxu0
        %v3025 = vadd.f32 %v2912, %v3024
        %3026 = vmatprep.mubr.bf16.mxu0 0
        %3027 = vmatmul.mubr.bf16.gmra.mrb[0].mxu0 %v411
        %v3028 = vpop.f32.mrb[0].mxu0
        %v3029 = vadd.f32 %v2916, %v3028
        %v3030 = vpop.f32.mrb[0].mxu0
        %v3031 = vadd.f32 %v2918, %v3030
        %v3032 = vpop.f32.mrb[0].mxu0
        %v3033 = vadd.f32 %v2920, %v3032
        %v3034 = vpop.f32.mrb[0].mxu0
        %v3035 = vadd.f32 %v2922, %v3034
        %3036 = vmatprep.mubr.bf16.mxu0 0
        %3037 = vmatmul.mubr.bf16.gmra.mrb[0].mxu0 %v414
        %v3038 = vpop.f32.mrb[0].mxu0
        %v3039 = vadd.f32 %v2926, %v3038
        %v3040 = vpop.f32.mrb[0].mxu0
        %v3041 = vadd.f32 %v2928, %v3040
        %v3042 = vpop.f32.mrb[0].mxu0
        %v3043 = vadd.f32 %v2930, %v3042
        %v3044 = vpop.f32.mrb[0].mxu0
        %v3045 = vadd.f32 %v2932, %v3044
        %3046 = vdwg.mxu0
        %3047 = vmatprep.subr.bf16.mxu0 %v1576
        %3048 = vmatpush1.bf16.msra.mxu0 %v1575
        %3049 = vmatprep.subr.bf16.mxu0 %v1588
        %3050 = vmatpush1.bf16.msra.mxu0 %v1587
        %3051 = vmatprep.subr.bf16.mxu0 %v1600
        %3052 = vmatpush1.bf16.msra.mxu0 %v1599
        %3053 = vmatprep.subr.bf16.mxu0 %v1612
        %3054 = vmatpush1.bf16.msra.mxu0 %v1611
        %3055 = vmatprep.subr.bf16.mxu0 %v1624
        %3056 = vmatpush1.bf16.msra.mxu0 %v1623
        %3057 = vmatprep.subr.bf16.mxu0 %v1636
        %3058 = vmatpush1.bf16.msra.mxu0 %v1635
        %3059 = vmatprep.subr.bf16.mxu0 %v1648
        %3060 = vmatpush1.bf16.msra.mxu0 %v1647
        %3061 = vmatprep.subr.bf16.mxu0 %v1660
        %3062 = vmatpush1.bf16.msra.mxu0 %v1659
        %3063 = vmatprep.subr.bf16.mxu0 %v1672
        %3064 = vmatpush1.bf16.msra.mxu0 %v1671
        %3065 = vmatprep.subr.bf16.mxu0 %v1684
        %3066 = vmatpush1.bf16.msra.mxu0 %v1683
        %3067 = vmatprep.subr.bf16.mxu0 %v1696
        %3068 = vmatpush1.bf16.msra.mxu0 %v1695
        %3069 = vmatprep.subr.bf16.mxu0 %v1708
        %3070 = vmatpush1.bf16.msra.mxu0 %v1707
        %3071 = vmatprep.subr.bf16.mxu0 %v1720
        %3072 = vmatpush1.bf16.msra.mxu0 %v1719
        %3073 = vmatprep.subr.bf16.mxu0 %v1732
        %3074 = vmatpush1.bf16.msra.mxu0 %v1731
        %3075 = vmatprep.subr.bf16.mxu0 %v1744
        %3076 = vmatpush1.bf16.msra.mxu0 %v1743
        %3077 = vmatprep.subr.bf16.mxu0 %v1756
        %3078 = vmatpush1.bf16.msra.mxu0 %v1755
        %3079 = vmatprep.mubr.bf16.mxu0 %v392
        %3080 = vmatmul.mubr.bf16.gmra.mrb[0].mxu0 %v391
        %v3081 = vpop.f32.mrb[0].mxu0
        %v3082 = vadd.f32 0.0, %v3081
        %v3083 = vpop.f32.mrb[0].mxu0
        %v3084 = vadd.f32 0.0, %v3083
        %v3085 = vpop.f32.mrb[0].mxu0
        %v3086 = vadd.f32 0.0, %v3085
        %v3087 = vpop.f32.mrb[0].mxu0
        %v3088 = vadd.f32 0.0, %v3087
        %3089 = vmatprep.mubr.bf16.mxu0 %v395
        %3090 = vmatmul.mubr.bf16.gmra.mrb[0].mxu0 %v394
        %v3091 = vpop.f32.mrb[0].mxu0
        %v3092 = vadd.f32 0.0, %v3091
        %v3093 = vpop.f32.mrb[0].mxu0
        %v3094 = vadd.f32 0.0, %v3093
        %v3095 = vpop.f32.mrb[0].mxu0
        %v3096 = vadd.f32 0.0, %v3095
        %v3097 = vpop.f32.mrb[0].mxu0
        %v3098 = vadd.f32 0.0, %v3097
        %3099 = vmatprep.mubr.bf16.mxu0 %v398
        %3100 = vmatmul.mubr.bf16.gmra.mrb[0].mxu0 %v397
        %v3101 = vpop.f32.mrb[0].mxu0
        %v3102 = vadd.f32 0.0, %v3101
        %v3103 = vpop.f32.mrb[0].mxu0
        %v3104 = vadd.f32 0.0, %v3103
        %v3105 = vpop.f32.mrb[0].mxu0
        %v3106 = vadd.f32 0.0, %v3105
        %v3107 = vpop.f32.mrb[0].mxu0
        %v3108 = vadd.f32 0.0, %v3107
        %3109 = vmatprep.mubr.bf16.mxu0 %v401
        %3110 = vmatmul.mubr.bf16.gmra.mrb[0].mxu0 %v400
        %v3111 = vpop.f32.mrb[0].mxu0
        %v3112 = vadd.f32 0.0, %v3111
        %v3113 = vpop.f32.mrb[0].mxu0
        %v3114 = vadd.f32 0.0, %v3113
        %v3115 = vpop.f32.mrb[0].mxu0
        %v3116 = vadd.f32 0.0, %v3115
        %v3117 = vpop.f32.mrb[0].mxu0
        %v3118 = vadd.f32 0.0, %v3117
        %3119 = vmatprep.mubr.bf16.mxu0 %v404
        %3120 = vmatmul.mubr.bf16.gmra.mrb[0].mxu0 %v403
        %v3121 = vpop.f32.mrb[0].mxu0
        %v3122 = vadd.f32 0.0, %v3121
        %v3123 = vpop.f32.mrb[0].mxu0
        %v3124 = vadd.f32 0.0, %v3123
        %v3125 = vpop.f32.mrb[0].mxu0
        %v3126 = vadd.f32 0.0, %v3125
        %v3127 = vpop.f32.mrb[0].mxu0
        %v3128 = vadd.f32 0.0, %v3127
        %3129 = vmatprep.mubr.bf16.mxu0 %v407
        %3130 = vmatmul.mubr.bf16.gmra.mrb[0].mxu0 %v406
        %v3131 = vpop.f32.mrb[0].mxu0
        %v3132 = vadd.f32 0.0, %v3131
        %v3133 = vpop.f32.mrb[0].mxu0
        %v3134 = vadd.f32 0.0, %v3133
        %v3135 = vpop.f32.mrb[0].mxu0
        %v3136 = vadd.f32 0.0, %v3135
        %v3137 = vpop.f32.mrb[0].mxu0
        %v3138 = vadd.f32 0.0, %v3137
        %3139 = vmatprep.mubr.bf16.mxu0 %v410
        %3140 = vmatmul.mubr.bf16.gmra.mrb[0].mxu0 %v409
        %v3141 = vpop.f32.mrb[0].mxu0
        %v3142 = vadd.f32 0.0, %v3141
        %v3143 = vpop.f32.mrb[0].mxu0
        %v3144 = vadd.f32 0.0, %v3143
        %v3145 = vpop.f32.mrb[0].mxu0
        %v3146 = vadd.f32 0.0, %v3145
        %v3147 = vpop.f32.mrb[0].mxu0
        %v3148 = vadd.f32 0.0, %v3147
        %3149 = vmatprep.mubr.bf16.mxu0 %v413
        %3150 = vmatmul.mubr.bf16.gmra.mrb[0].mxu0 %v412
        %v3151 = vpop.f32.mrb[0].mxu0
        %v3152 = vadd.f32 0.0, %v3151
        %v3153 = vpop.f32.mrb[0].mxu0
        %v3154 = vadd.f32 0.0, %v3153
        %v3155 = vpop.f32.mrb[0].mxu0
        %v3156 = vadd.f32 0.0, %v3155
        %v3157 = vpop.f32.mrb[0].mxu0
        %v3158 = vadd.f32 0.0, %v3157
        %3159 = vdwg.mxu0
        %3160 = vmatprep.subr.bf16.mxu0 %v1768
        %3161 = vmatpush1.bf16.msra.mxu0 %v1767
        %3162 = vmatprep.subr.bf16.mxu0 %v1780
        %3163 = vmatpush1.bf16.msra.mxu0 %v1779
        %3164 = vmatprep.subr.bf16.mxu0 %v1792
        %3165 = vmatpush1.bf16.msra.mxu0 %v1791
        %3166 = vmatprep.subr.bf16.mxu0 %v1804
        %3167 = vmatpush1.bf16.msra.mxu0 %v1803
        %3168 = vmatprep.subr.bf16.mxu0 %v1816
        %3169 = vmatpush1.bf16.msra.mxu0 %v1815
        %3170 = vmatprep.subr.bf16.mxu0 %v1828
        %3171 = vmatpush1.bf16.msra.mxu0 %v1827
        %3172 = vmatprep.subr.bf16.mxu0 %v1840
        %3173 = vmatpush1.bf16.msra.mxu0 %v1839
        %3174 = vmatprep.subr.bf16.mxu0 %v1852
        %3175 = vmatpush1.bf16.msra.mxu0 %v1851
        %3176 = vmatprep.subr.bf16.mxu0 0
        %3177 = vmatpush1.bf16.msra.mxu0 0
        %3178 = vmatprep.subr.bf16.mxu0 0
        %3179 = vmatpush1.bf16.msra.mxu0 0
        %3180 = vmatprep.subr.bf16.mxu0 0
        %3181 = vmatpush1.bf16.msra.mxu0 0
        %3182 = vmatprep.subr.bf16.mxu0 0
        %3183 = vmatpush1.bf16.msra.mxu0 0
        %3184 = vmatprep.subr.bf16.mxu0 0
        %3185 = vmatpush1.bf16.msra.mxu0 0
        %3186 = vmatprep.subr.bf16.mxu0 0
        %3187 = vmatpush1.bf16.msra.mxu0 0
        %3188 = vmatprep.subr.bf16.mxu0 0
        %3189 = vmatpush1.bf16.msra.mxu0 0
        %3190 = vmatprep.subr.bf16.mxu0 0
        %3191 = vmatpush1.bf16.msra.mxu0 0
        %3192 = vmatprep.mubr.bf16.mxu0 0
        %3193 = vmatmul.mubr.bf16.gmra.mrb[0].mxu0 %v393
        %v3194 = vpop.f32.mrb[0].mxu0
        %v3195 = vadd.f32 %v3082, %v3194
        %v3196 = vpop.f32.mrb[0].mxu0
        %v3197 = vadd.f32 %v3084, %v3196
        %v3198 = vpop.f32.mrb[0].mxu0
        %v3199 = vadd.f32 %v3086, %v3198
        %v3200 = vpop.f32.mrb[0].mxu0
        %v3201 = vadd.f32 %v3088, %v3200
        %3202 = vmatprep.mubr.bf16.mxu0 0
        %3203 = vmatmul.mubr.bf16.gmra.mrb[0].mxu0 %v396
        %v3204 = vpop.f32.mrb[0].mxu0
        %v3205 = vadd.f32 %v3092, %v3204
        %v3206 = vpop.f32.mrb[0].mxu0
        %v3207 = vadd.f32 %v3094, %v3206
        %v3208 = vpop.f32.mrb[0].mxu0
        %v3209 = vadd.f32 %v3096, %v3208
        %v3210 = vpop.f32.mrb[0].mxu0
        %v3211 = vadd.f32 %v3098, %v3210
        %3212 = vmatprep.mubr.bf16.mxu0 0
        %3213 = vmatmul.mubr.bf16.gmra.mrb[0].mxu0 %v399
        %v3214 = vpop.f32.mrb[0].mxu0
        %v3215 = vadd.f32 %v3102, %v3214
        %v3216 = vpop.f32.mrb[0].mxu0
        %v3217 = vadd.f32 %v3104, %v3216
        %v3218 = vpop.f32.mrb[0].mxu0
        %v3219 = vadd.f32 %v3106, %v3218
        %v3220 = vpop.f32.mrb[0].mxu0
        %v3221 = vadd.f32 %v3108, %v3220
        %3222 = vmatprep.mubr.bf16.mxu0 0
        %3223 = vmatmul.mubr.bf16.gmra.mrb[0].mxu0 %v402
        %v3224 = vpop.f32.mrb[0].mxu0
        %v3225 = vadd.f32 %v3112, %v3224
        %v3226 = vpop.f32.mrb[0].mxu0
        %v3227 = vadd.f32 %v3114, %v3226
        %v3228 = vpop.f32.mrb[0].mxu0
        %v3229 = vadd.f32 %v3116, %v3228
        %v3230 = vpop.f32.mrb[0].mxu0
        %v3231 = vadd.f32 %v3118, %v3230
        %3232 = vmatprep.mubr.bf16.mxu0 0
        %3233 = vmatmul.mubr.bf16.gmra.mrb[0].mxu0 %v405
        %v3234 = vpop.f32.mrb[0].mxu0
        %v3235 = vadd.f32 %v3122, %v3234
        %v3236 = vpop.f32.mrb[0].mxu0
        %v3237 = vadd.f32 %v3124, %v3236
        %v3238 = vpop.f32.mrb[0].mxu0
        %v3239 = vadd.f32 %v3126, %v3238
        %v3240 = vpop.f32.mrb[0].mxu0
        %v3241 = vadd.f32 %v3128, %v3240
        %3242 = vmatprep.mubr.bf16.mxu0 0
        %3243 = vmatmul.mubr.bf16.gmra.mrb[0].mxu0 %v408
        %v3244 = vpop.f32.mrb[0].mxu0
        %v3245 = vadd.f32 %v3132, %v3244
        %v3246 = vpop.f32.mrb[0].mxu0
        %v3247 = vadd.f32 %v3134, %v3246
        %v3248 = vpop.f32.mrb[0].mxu0
        %v3249 = vadd.f32 %v3136, %v3248
        %v3250 = vpop.f32.mrb[0].mxu0
        %v3251 = vadd.f32 %v3138, %v3250
        %3252 = vmatprep.mubr.bf16.mxu0 0
        %3253 = vmatmul.mubr.bf16.gmra.mrb[0].mxu0 %v411
        %v3254 = vpop.f32.mrb[0].mxu0
        %v3255 = vadd.f32 %v3142, %v3254
        %v3256 = vpop.f32.mrb[0].mxu0
        %v3257 = vadd.f32 %v3144, %v3256
        %v3258 = vpop.f32.mrb[0].mxu0
        %v3259 = vadd.f32 %v3146, %v3258
        %v3260 = vpop.f32.mrb[0].mxu0
        %v3261 = vadd.f32 %v3148, %v3260
        %3262 = vmatprep.mubr.bf16.mxu0 0
        %3263 = vmatmul.mubr.bf16.gmra.mrb[0].mxu0 %v414
        %v3264 = vpop.f32.mrb[0].mxu0
        %v3265 = vadd.f32 %v3152, %v3264
        %v3266 = vpop.f32.mrb[0].mxu0
        %v3267 = vadd.f32 %v3154, %v3266
        %v3268 = vpop.f32.mrb[0].mxu0
        %v3269 = vadd.f32 %v3156, %v3268
        %v3270 = vpop.f32.mrb[0].mxu0
        %v3271 = vadd.f32 %v3158, %v3270
        %3272 = vdwg.mxu0
        %3273 = vmatprep.subr.bf16.mxu0 %v1578
        %3274 = vmatpush1.bf16.msra.mxu0 %v1577
        %3275 = vmatprep.subr.bf16.mxu0 %v1590
        %3276 = vmatpush1.bf16.msra.mxu0 %v1589
        %3277 = vmatprep.subr.bf16.mxu0 %v1602
        %3278 = vmatpush1.bf16.msra.mxu0 %v1601
        %3279 = vmatprep.subr.bf16.mxu0 %v1614
        %3280 = vmatpush1.bf16.msra.mxu0 %v1613
        %3281 = vmatprep.subr.bf16.mxu0 %v1626
        %3282 = vmatpush1.bf16.msra.mxu0 %v1625
        %3283 = vmatprep.subr.bf16.mxu0 %v1638
        %3284 = vmatpush1.bf16.msra.mxu0 %v1637
        %3285 = vmatprep.subr.bf16.mxu0 %v1650
        %3286 = vmatpush1.bf16.msra.mxu0 %v1649
        %3287 = vmatprep.subr.bf16.mxu0 %v1662
        %3288 = vmatpush1.bf16.msra.mxu0 %v1661
        %3289 = vmatprep.subr.bf16.mxu0 %v1674
        %3290 = vmatpush1.bf16.msra.mxu0 %v1673
        %3291 = vmatprep.subr.bf16.mxu0 %v1686
        %3292 = vmatpush1.bf16.msra.mxu0 %v1685
        %3293 = vmatprep.subr.bf16.mxu0 %v1698
        %3294 = vmatpush1.bf16.msra.mxu0 %v1697
        %3295 = vmatprep.subr.bf16.mxu0 %v1710
        %3296 = vmatpush1.bf16.msra.mxu0 %v1709
        %3297 = vmatprep.subr.bf16.mxu0 %v1722
        %3298 = vmatpush1.bf16.msra.mxu0 %v1721
        %3299 = vmatprep.subr.bf16.mxu0 %v1734
        %3300 = vmatpush1.bf16.msra.mxu0 %v1733
        %3301 = vmatprep.subr.bf16.mxu0 %v1746
        %3302 = vmatpush1.bf16.msra.mxu0 %v1745
        %3303 = vmatprep.subr.bf16.mxu0 %v1758
        %3304 = vmatpush1.bf16.msra.mxu0 %v1757
        %3305 = vmatprep.mubr.bf16.mxu0 %v392
        %3306 = vmatmul.mubr.bf16.gmra.mrb[0].mxu0 %v391
        %v3307 = vpop.f32.mrb[0].mxu0
        %v3308 = vadd.f32 0.0, %v3307
        %v3309 = vpop.f32.mrb[0].mxu0
        %v3310 = vadd.f32 0.0, %v3309
        %v3311 = vpop.f32.mrb[0].mxu0
        %v3312 = vadd.f32 0.0, %v3311
        %v3313 = vpop.f32.mrb[0].mxu0
        %v3314 = vadd.f32 0.0, %v3313
        %3315 = vmatprep.mubr.bf16.mxu0 %v395
        %3316 = vmatmul.mubr.bf16.gmra.mrb[0].mxu0 %v394
        %v3317 = vpop.f32.mrb[0].mxu0
        %v3318 = vadd.f32 0.0, %v3317
        %v3319 = vpop.f32.mrb[0].mxu0
        %v3320 = vadd.f32 0.0, %v3319
        %v3321 = vpop.f32.mrb[0].mxu0
        %v3322 = vadd.f32 0.0, %v3321
        %v3323 = vpop.f32.mrb[0].mxu0
        %v3324 = vadd.f32 0.0, %v3323
        %3325 = vmatprep.mubr.bf16.mxu0 %v398
        %3326 = vmatmul.mubr.bf16.gmra.mrb[0].mxu0 %v397
        %v3327 = vpop.f32.mrb[0].mxu0
        %v3328 = vadd.f32 0.0, %v3327
        %v3329 = vpop.f32.mrb[0].mxu0
        %v3330 = vadd.f32 0.0, %v3329
        %v3331 = vpop.f32.mrb[0].mxu0
        %v3332 = vadd.f32 0.0, %v3331
        %v3333 = vpop.f32.mrb[0].mxu0
        %v3334 = vadd.f32 0.0, %v3333
        %3335 = vmatprep.mubr.bf16.mxu0 %v401
        %3336 = vmatmul.mubr.bf16.gmra.mrb[0].mxu0 %v400
        %v3337 = vpop.f32.mrb[0].mxu0
        %v3338 = vadd.f32 0.0, %v3337
        %v3339 = vpop.f32.mrb[0].mxu0
        %v3340 = vadd.f32 0.0, %v3339
        %v3341 = vpop.f32.mrb[0].mxu0
        %v3342 = vadd.f32 0.0, %v3341
        %v3343 = vpop.f32.mrb[0].mxu0
        %v3344 = vadd.f32 0.0, %v3343
        %3345 = vmatprep.mubr.bf16.mxu0 %v404
        %3346 = vmatmul.mubr.bf16.gmra.mrb[0].mxu0 %v403
        %v3347 = vpop.f32.mrb[0].mxu0
        %v3348 = vadd.f32 0.0, %v3347
        %v3349 = vpop.f32.mrb[0].mxu0
        %v3350 = vadd.f32 0.0, %v3349
        %v3351 = vpop.f32.mrb[0].mxu0
        %v3352 = vadd.f32 0.0, %v3351
        %v3353 = vpop.f32.mrb[0].mxu0
        %v3354 = vadd.f32 0.0, %v3353
        %3355 = vmatprep.mubr.bf16.mxu0 %v407
        %3356 = vmatmul.mubr.bf16.gmra.mrb[0].mxu0 %v406
        %v3357 = vpop.f32.mrb[0].mxu0
        %v3358 = vadd.f32 0.0, %v3357
        %v3359 = vpop.f32.mrb[0].mxu0
        %v3360 = vadd.f32 0.0, %v3359
        %v3361 = vpop.f32.mrb[0].mxu0
        %v3362 = vadd.f32 0.0, %v3361
        %v3363 = vpop.f32.mrb[0].mxu0
        %v3364 = vadd.f32 0.0, %v3363
        %3365 = vmatprep.mubr.bf16.mxu0 %v410
        %3366 = vmatmul.mubr.bf16.gmra.mrb[0].mxu0 %v409
        %v3367 = vpop.f32.mrb[0].mxu0
        %v3368 = vadd.f32 0.0, %v3367
        %v3369 = vpop.f32.mrb[0].mxu0
        %v3370 = vadd.f32 0.0, %v3369
        %v3371 = vpop.f32.mrb[0].mxu0
        %v3372 = vadd.f32 0.0, %v3371
        %v3373 = vpop.f32.mrb[0].mxu0
        %v3374 = vadd.f32 0.0, %v3373
        %3375 = vmatprep.mubr.bf16.mxu0 %v413
        %3376 = vmatmul.mubr.bf16.gmra.mrb[0].mxu0 %v412
        %v3377 = vpop.f32.mrb[0].mxu0
        %v3378 = vadd.f32 0.0, %v3377
        %v3379 = vpop.f32.mrb[0].mxu0
        %v3380 = vadd.f32 0.0, %v3379
        %v3381 = vpop.f32.mrb[0].mxu0
        %v3382 = vadd.f32 0.0, %v3381
        %v3383 = vpop.f32.mrb[0].mxu0
        %v3384 = vadd.f32 0.0, %v3383
        %3385 = vdwg.mxu0
        %3386 = vmatprep.subr.bf16.mxu0 %v1770
        %3387 = vmatpush1.bf16.msra.mxu0 %v1769
        %3388 = vmatprep.subr.bf16.mxu0 %v1782
        %3389 = vmatpush1.bf16.msra.mxu0 %v1781
        %3390 = vmatprep.subr.bf16.mxu0 %v1794
        %3391 = vmatpush1.bf16.msra.mxu0 %v1793
        %3392 = vmatprep.subr.bf16.mxu0 %v1806
        %3393 = vmatpush1.bf16.msra.mxu0 %v1805
        %3394 = vmatprep.subr.bf16.mxu0 %v1818
        %3395 = vmatpush1.bf16.msra.mxu0 %v1817
        %3396 = vmatprep.subr.bf16.mxu0 %v1830
        %3397 = vmatpush1.bf16.msra.mxu0 %v1829
        %3398 = vmatprep.subr.bf16.mxu0 %v1842
        %3399 = vmatpush1.bf16.msra.mxu0 %v1841
        %3400 = vmatprep.subr.bf16.mxu0 %v1854
        %3401 = vmatpush1.bf16.msra.mxu0 %v1853
        %3402 = vmatprep.subr.bf16.mxu0 0
        %3403 = vmatpush1.bf16.msra.mxu0 0
        %3404 = vmatprep.subr.bf16.mxu0 0
        %3405 = vmatpush1.bf16.msra.mxu0 0
        %3406 = vmatprep.subr.bf16.mxu0 0
        %3407 = vmatpush1.bf16.msra.mxu0 0
        %3408 = vmatprep.subr.bf16.mxu0 0
        %3409 = vmatpush1.bf16.msra.mxu0 0
        %3410 = vmatprep.subr.bf16.mxu0 0
        %3411 = vmatpush1.bf16.msra.mxu0 0
        %3412 = vmatprep.subr.bf16.mxu0 0
        %3413 = vmatpush1.bf16.msra.mxu0 0
        %3414 = vmatprep.subr.bf16.mxu0 0
        %3415 = vmatpush1.bf16.msra.mxu0 0
        %3416 = vmatprep.subr.bf16.mxu0 0
        %3417 = vmatpush1.bf16.msra.mxu0 0
        %3418 = vmatprep.mubr.bf16.mxu0 0
        %3419 = vmatmul.mubr.bf16.gmra.mrb[0].mxu0 %v393
        %v3420 = vpop.f32.mrb[0].mxu0
        %v3421 = vadd.f32 %v3308, %v3420
        %v3422 = vpop.f32.mrb[0].mxu0
        %v3423 = vadd.f32 %v3310, %v3422
        %v3424 = vpop.f32.mrb[0].mxu0
        %v3425 = vadd.f32 %v3312, %v3424
        %v3426 = vpop.f32.mrb[0].mxu0
        %v3427 = vadd.f32 %v3314, %v3426
        %3428 = vmatprep.mubr.bf16.mxu0 0
        %3429 = vmatmul.mubr.bf16.gmra.mrb[0].mxu0 %v396
        %v3430 = vpop.f32.mrb[0].mxu0
        %v3431 = vadd.f32 %v3318, %v3430
        %v3432 = vpop.f32.mrb[0].mxu0
        %v3433 = vadd.f32 %v3320, %v3432
        %v3434 = vpop.f32.mrb[0].mxu0
        %v3435 = vadd.f32 %v3322, %v3434
        %v3436 = vpop.f32.mrb[0].mxu0
        %v3437 = vadd.f32 %v3324, %v3436
        %3438 = vmatprep.mubr.bf16.mxu0 0
        %3439 = vmatmul.mubr.bf16.gmra.mrb[0].mxu0 %v399
        %v3440 = vpop.f32.mrb[0].mxu0
        %v3441 = vadd.f32 %v3328, %v3440
        %v3442 = vpop.f32.mrb[0].mxu0
        %v3443 = vadd.f32 %v3330, %v3442
        %v3444 = vpop.f32.mrb[0].mxu0
        %v3445 = vadd.f32 %v3332, %v3444
        %v3446 = vpop.f32.mrb[0].mxu0
        %v3447 = vadd.f32 %v3334, %v3446
        %3448 = vmatprep.mubr.bf16.mxu0 0
        %3449 = vmatmul.mubr.bf16.gmra.mrb[0].mxu0 %v402
        %v3450 = vpop.f32.mrb[0].mxu0
        %v3451 = vadd.f32 %v3338, %v3450
        %v3452 = vpop.f32.mrb[0].mxu0
        %v3453 = vadd.f32 %v3340, %v3452
        %v3454 = vpop.f32.mrb[0].mxu0
        %v3455 = vadd.f32 %v3342, %v3454
        %v3456 = vpop.f32.mrb[0].mxu0
        %v3457 = vadd.f32 %v3344, %v3456
        %3458 = vmatprep.mubr.bf16.mxu0 0
        %3459 = vmatmul.mubr.bf16.gmra.mrb[0].mxu0 %v405
        %v3460 = vpop.f32.mrb[0].mxu0
        %v3461 = vadd.f32 %v3348, %v3460
        %v3462 = vpop.f32.mrb[0].mxu0
        %v3463 = vadd.f32 %v3350, %v3462
        %v3464 = vpop.f32.mrb[0].mxu0
        %v3465 = vadd.f32 %v3352, %v3464
        %v3466 = vpop.f32.mrb[0].mxu0
        %v3467 = vadd.f32 %v3354, %v3466
        %3468 = vmatprep.mubr.bf16.mxu0 0
        %3469 = vmatmul.mubr.bf16.gmra.mrb[0].mxu0 %v408
        %v3470 = vpop.f32.mrb[0].mxu0
        %v3471 = vadd.f32 %v3358, %v3470
        %v3472 = vpop.f32.mrb[0].mxu0
        %v3473 = vadd.f32 %v3360, %v3472
        %v3474 = vpop.f32.mrb[0].mxu0
        %v3475 = vadd.f32 %v3362, %v3474
        %v3476 = vpop.f32.mrb[0].mxu0
        %v3477 = vadd.f32 %v3364, %v3476
        %3478 = vmatprep.mubr.bf16.mxu0 0
        %3479 = vmatmul.mubr.bf16.gmra.mrb[0].mxu0 %v411
        %v3480 = vpop.f32.mrb[0].mxu0
        %v3481 = vadd.f32 %v3368, %v3480
        %v3482 = vpop.f32.mrb[0].mxu0
        %v3483 = vadd.f32 %v3370, %v3482
        %v3484 = vpop.f32.mrb[0].mxu0
        %v3485 = vadd.f32 %v3372, %v3484
        %v3486 = vpop.f32.mrb[0].mxu0
        %v3487 = vadd.f32 %v3374, %v3486
        %3488 = vmatprep.mubr.bf16.mxu0 0
        %3489 = vmatmul.mubr.bf16.gmra.mrb[0].mxu0 %v414
        %v3490 = vpop.f32.mrb[0].mxu0
        %v3491 = vadd.f32 %v3378, %v3490
        %v3492 = vpop.f32.mrb[0].mxu0
        %v3493 = vadd.f32 %v3380, %v3492
        %v3494 = vpop.f32.mrb[0].mxu0
        %v3495 = vadd.f32 %v3382, %v3494
        %v3496 = vpop.f32.mrb[0].mxu0
        %v3497 = vadd.f32 %v3384, %v3496
        %3498 = vdwg.mxu0
        %v3499 = vmul.f32 %v2291, %v2743
        %v3500 = vmul.f32 %v2293, %v2745
        %v3501 = vmul.f32 %v2517, %v2969
        %v3502 = vmul.f32 %v2519, %v2971
        %v3503 = vmul.f32 %v2295, %v2747
        %v3504 = vmul.f32 %v2297, %v2749
        %v3505 = vmul.f32 %v2521, %v2973
        %v3506 = vmul.f32 %v2523, %v2975
        %v3507 = vmul.f32 %v2301, %v2753
        %v3508 = vmul.f32 %v2303, %v2755
        %v3509 = vmul.f32 %v2527, %v2979
        %v3510 = vmul.f32 %v2529, %v2981
        %v3511 = vmul.f32 %v2305, %v2757
        %v3512 = vmul.f32 %v2307, %v2759
        %v3513 = vmul.f32 %v2531, %v2983
        %v3514 = vmul.f32 %v2533, %v2985
        %v3515 = vmul.f32 %v2311, %v2763
        %v3516 = vmul.f32 %v2313, %v2765
        %v3517 = vmul.f32 %v2537, %v2989
        %v3518 = vmul.f32 %v2539, %v2991
        %v3519 = vmul.f32 %v2315, %v2767
        %v3520 = vmul.f32 %v2317, %v2769
        %v3521 = vmul.f32 %v2541, %v2993
        %v3522 = vmul.f32 %v2543, %v2995
        %v3523 = vmul.f32 %v2321, %v2773
        %v3524 = vmul.f32 %v2323, %v2775
        %v3525 = vmul.f32 %v2547, %v2999
        %v3526 = vmul.f32 %v2549, %v3001
        %v3527 = vmul.f32 %v2325, %v2777
        %v3528 = vmul.f32 %v2327, %v2779
        %v3529 = vmul.f32 %v2551, %v3003
        %v3530 = vmul.f32 %v2553, %v3005
        %v3531 = vmul.f32 %v2331, %v2783
        %v3532 = vmul.f32 %v2333, %v2785
        %v3533 = vmul.f32 %v2557, %v3009
        %v3534 = vmul.f32 %v2559, %v3011
        %v3535 = vmul.f32 %v2335, %v2787
        %v3536 = vmul.f32 %v2337, %v2789
        %v3537 = vmul.f32 %v2561, %v3013
        %v3538 = vmul.f32 %v2563, %v3015
        %v3539 = vmul.f32 %v2341, %v2793
        %v3540 = vmul.f32 %v2343, %v2795
        %v3541 = vmul.f32 %v2567, %v3019
        %v3542 = vmul.f32 %v2569, %v3021
        %v3543 = vmul.f32 %v2345, %v2797
        %v3544 = vmul.f32 %v2347, %v2799
        %v3545 = vmul.f32 %v2571, %v3023
        %v3546 = vmul.f32 %v2573, %v3025
        %v3547 = vmul.f32 %v2351, %v2803
        %v3548 = vmul.f32 %v2353, %v2805
        %v3549 = vmul.f32 %v2577, %v3029
        %v3550 = vmul.f32 %v2579, %v3031
        %v3551 = vmul.f32 %v2355, %v2807
        %v3552 = vmul.f32 %v2357, %v2809
        %v3553 = vmul.f32 %v2581, %v3033
        %v3554 = vmul.f32 %v2583, %v3035
        %v3555 = vmul.f32 %v2361, %v2813
        %v3556 = vmul.f32 %v2363, %v2815
        %v3557 = vmul.f32 %v2587, %v3039
        %v3558 = vmul.f32 %v2589, %v3041
        %v3559 = vmul.f32 %v2365, %v2817
        %v3560 = vmul.f32 %v2367, %v2819
        %v3561 = vmul.f32 %v2591, %v3043
        %v3562 = vmul.f32 %v2593, %v3045
        %v3563 = vmul.f32 %v3499, %v3195
        %v3564 = vmul.f32 %v3500, %v3197
        %v3565 = vmul.f32 %v3501, %v3421
        %v3566 = vmul.f32 %v3502, %v3423
        %v3567 = vmul.f32 %v3503, %v3199
        %v3568 = vmul.f32 %v3504, %v3201
        %v3569 = vmul.f32 %v3505, %v3425
        %v3570 = vmul.f32 %v3506, %v3427
        %v3571 = vmul.f32 %v3507, %v3205
        %v3572 = vmul.f32 %v3508, %v3207
        %v3573 = vmul.f32 %v3509, %v3431
        %v3574 = vmul.f32 %v3510, %v3433
        %v3575 = vmul.f32 %v3511, %v3209
        %v3576 = vmul.f32 %v3512, %v3211
        %v3577 = vmul.f32 %v3513, %v3435
        %v3578 = vmul.f32 %v3514, %v3437
        %v3579 = vmul.f32 %v3515, %v3215
        %v3580 = vmul.f32 %v3516, %v3217
        %v3581 = vmul.f32 %v3517, %v3441
        %v3582 = vmul.f32 %v3518, %v3443
        %v3583 = vmul.f32 %v3519, %v3219
        %v3584 = vmul.f32 %v3520, %v3221
        %v3585 = vmul.f32 %v3521, %v3445
        %v3586 = vmul.f32 %v3522, %v3447
        %v3587 = vmul.f32 %v3523, %v3225
        %v3588 = vmul.f32 %v3524, %v3227
        %v3589 = vmul.f32 %v3525, %v3451
        %v3590 = vmul.f32 %v3526, %v3453
        %v3591 = vmul.f32 %v3527, %v3229
        %v3592 = vmul.f32 %v3528, %v3231
        %v3593 = vmul.f32 %v3529, %v3455
        %v3594 = vmul.f32 %v3530, %v3457
        %v3595 = vmul.f32 %v3531, %v3235
        %v3596 = vmul.f32 %v3532, %v3237
        %v3597 = vmul.f32 %v3533, %v3461
        %v3598 = vmul.f32 %v3534, %v3463
        %v3599 = vmul.f32 %v3535, %v3239
        %v3600 = vmul.f32 %v3536, %v3241
        %v3601 = vmul.f32 %v3537, %v3465
        %v3602 = vmul.f32 %v3538, %v3467
        %v3603 = vmul.f32 %v3539, %v3245
        %v3604 = vmul.f32 %v3540, %v3247
        %v3605 = vmul.f32 %v3541, %v3471
        %v3606 = vmul.f32 %v3542, %v3473
        %v3607 = vmul.f32 %v3543, %v3249
        %v3608 = vmul.f32 %v3544, %v3251
        %v3609 = vmul.f32 %v3545, %v3475
        %v3610 = vmul.f32 %v3546, %v3477
        %v3611 = vmul.f32 %v3547, %v3255
        %v3612 = vmul.f32 %v3548, %v3257
        %v3613 = vmul.f32 %v3549, %v3481
        %v3614 = vmul.f32 %v3550, %v3483
        %v3615 = vmul.f32 %v3551, %v3259
        %v3616 = vmul.f32 %v3552, %v3261
        %v3617 = vmul.f32 %v3553, %v3485
        %v3618 = vmul.f32 %v3554, %v3487
        %v3619 = vmul.f32 %v3555, %v3265
        %v3620 = vmul.f32 %v3556, %v3267
        %v3621 = vmul.f32 %v3557, %v3491
        %v3622 = vmul.f32 %v3558, %v3493
        %v3623 = vmul.f32 %v3559, %v3269
        %v3624 = vmul.f32 %v3560, %v3271
        %v3625 = vmul.f32 %v3561, %v3495
        %v3626 = vmul.f32 %v3562, %v3497
        %v3627 = vpack.c.bf16 %v3567, %v3563
        %v3628 = vpack.c.bf16 %v3568, %v3564
        %v3629 = vpack.c.bf16 %v3569, %v3565
        %v3630 = vpack.c.bf16 %v3570, %v3566
        %v3631 = vpack.c.bf16 %v3575, %v3571
        %v3632 = vpack.c.bf16 %v3576, %v3572
        %v3633 = vpack.c.bf16 %v3577, %v3573
        %v3634 = vpack.c.bf16 %v3578, %v3574
        %v3635 = vpack.c.bf16 %v3583, %v3579
        %v3636 = vpack.c.bf16 %v3584, %v3580
        %v3637 = vpack.c.bf16 %v3585, %v3581
        %v3638 = vpack.c.bf16 %v3586, %v3582
        %v3639 = vpack.c.bf16 %v3591, %v3587
        %v3640 = vpack.c.bf16 %v3592, %v3588
        %v3641 = vpack.c.bf16 %v3593, %v3589
        %v3642 = vpack.c.bf16 %v3594, %v3590
        %v3643 = vpack.c.bf16 %v3599, %v3595
        %v3644 = vpack.c.bf16 %v3600, %v3596
        %v3645 = vpack.c.bf16 %v3601, %v3597
        %v3646 = vpack.c.bf16 %v3602, %v3598
        %v3647 = vpack.c.bf16 %v3607, %v3603
        %v3648 = vpack.c.bf16 %v3608, %v3604
        %v3649 = vpack.c.bf16 %v3609, %v3605
        %v3650 = vpack.c.bf16 %v3610, %v3606
        %v3651 = vpack.c.bf16 %v3615, %v3611
        %v3652 = vpack.c.bf16 %v3616, %v3612
        %v3653 = vpack.c.bf16 %v3617, %v3613
        %v3654 = vpack.c.bf16 %v3618, %v3614
        %v3655 = vpack.c.bf16 %v3623, %v3619
        %v3656 = vpack.c.bf16 %v3624, %v3620
        %v3657 = vpack.c.bf16 %v3625, %v3621
        %v3658 = vpack.c.bf16 %v3626, %v3622
        %v3659 = vld [vmem:[#allocation7] sm:$0xf]
        %v3660 = vld [vmem:[#allocation7 + $0x4] sm:$0xf]
        %v3661 = vld [vmem:[#allocation7 + $0x8] sm:$0xf]
        %v3662 = vld [vmem:[#allocation7 + $0xc] sm:$0xf]
        %v3663 = vld [vmem:[#allocation7 + $0x10] sm:$0xf]
        %v3664 = vld [vmem:[#allocation7 + $0x14] sm:$0xf]
        %v3665 = vld [vmem:[#allocation7 + $0x18] sm:$0xf]
        %v3666 = vld [vmem:[#allocation7 + $0x1c] sm:$0xf]
        %v3667 = vld [vmem:[#allocation7 + $0x20] sm:$0xf]
        %v3668 = vld [vmem:[#allocation7 + $0x24] sm:$0xf]
        %v3669 = vld [vmem:[#allocation7 + $0x28] sm:$0xf]
        %v3670 = vld [vmem:[#allocation7 + $0x2c] sm:$0xf]
        %v3671 = vld [vmem:[#allocation7 + $0x30] sm:$0xf]
        %v3672 = vld [vmem:[#allocation7 + $0x34] sm:$0xf]
        %v3673 = vld [vmem:[#allocation7 + $0x38] sm:$0xf]
        %v3674 = vld [vmem:[#allocation7 + $0x3c] sm:$0xf]
        %v3675 = vld [vmem:[#allocation7 + $0x40] sm:$0xf]
        %v3676 = vld [vmem:[#allocation7 + $0x44] sm:$0xf]
        %v3677 = vld [vmem:[#allocation7 + $0x48] sm:$0xf]
        %v3678 = vld [vmem:[#allocation7 + $0x4c] sm:$0xf]
        %v3679 = vld [vmem:[#allocation7 + $0x50] sm:$0xf]
        %v3680 = vld [vmem:[#allocation7 + $0x54] sm:$0xf]
        %v3681 = vld [vmem:[#allocation7 + $0x58] sm:$0xf]
        %v3682 = vld [vmem:[#allocation7 + $0x5c] sm:$0xf]
        %v3683 = vld [vmem:[#allocation7 + $0x60] sm:$0xf]
        %v3684 = vld [vmem:[#allocation7 + $0x64] sm:$0xf]
        %v3685 = vld [vmem:[#allocation7 + $0x68] sm:$0xf]
        %v3686 = vld [vmem:[#allocation7 + $0x6c] sm:$0xf]
        %v3687 = vld [vmem:[#allocation7 + $0x70] sm:$0xf]
        %v3688 = vld [vmem:[#allocation7 + $0x74] sm:$0xf]
        %v3689 = vld [vmem:[#allocation7 + $0x78] sm:$0xf]
        %v3690 = vld [vmem:[#allocation7 + $0x7c] sm:$0xf]
        %v3691 = vld [vmem:[#allocation7 + $0x80] sm:$0xf]
        %v3692 = vld [vmem:[#allocation7 + $0x84] sm:$0xf]
        %v3693 = vld [vmem:[#allocation7 + $0x88] sm:$0xf]
        %v3694 = vld [vmem:[#allocation7 + $0x8c] sm:$0xf]
        %v3695 = vld [vmem:[#allocation7 + $0x90] sm:$0xf]
        %v3696 = vld [vmem:[#allocation7 + $0x94] sm:$0xf]
        %v3697 = vld [vmem:[#allocation7 + $0x98] sm:$0xf]
        %v3698 = vld [vmem:[#allocation7 + $0x9c] sm:$0xf]
        %v3699 = vld [vmem:[#allocation7 + $0xa0] sm:$0xf]
        %v3700 = vld [vmem:[#allocation7 + $0xa4] sm:$0xf]
        %v3701 = vld [vmem:[#allocation7 + $0xa8] sm:$0xf]
        %v3702 = vld [vmem:[#allocation7 + $0xac] sm:$0xf]
        %v3703 = vld [vmem:[#allocation7 + $0xb0] sm:$0xf]
        %v3704 = vld [vmem:[#allocation7 + $0xb4] sm:$0xf]
        %v3705 = vld [vmem:[#allocation7 + $0xb8] sm:$0xf]
        %v3706 = vld [vmem:[#allocation7 + $0xbc] sm:$0xf]
        %v3707 = vld [vmem:[#allocation7 + $0xc0] sm:$0xf]
        %v3708 = vld [vmem:[#allocation7 + $0xc4] sm:$0xf]
        %v3709 = vld [vmem:[#allocation7 + $0xc8] sm:$0xf]
        %v3710 = vld [vmem:[#allocation7 + $0xcc] sm:$0xf]
        %v3711 = vld [vmem:[#allocation7 + $0xd0] sm:$0xf]
        %v3712 = vld [vmem:[#allocation7 + $0xd4] sm:$0xf]
        %v3713 = vld [vmem:[#allocation7 + $0xd8] sm:$0xf]
        %v3714 = vld [vmem:[#allocation7 + $0xdc] sm:$0xf]
        %v3715 = vld [vmem:[#allocation7 + $0xe0] sm:$0xf]
        %v3716 = vld [vmem:[#allocation7 + $0xe4] sm:$0xf]
        %v3717 = vld [vmem:[#allocation7 + $0xe8] sm:$0xf]
        %v3718 = vld [vmem:[#allocation7 + $0xec] sm:$0xf]
        %v3719 = vld [vmem:[#allocation7 + $0xf0] sm:$0xf]
        %v3720 = vld [vmem:[#allocation7 + $0xf4] sm:$0xf]
        %v3721 = vld [vmem:[#allocation7 + $0xf8] sm:$0xf]
        %v3722 = vld [vmem:[#allocation7 + $0xfc] sm:$0xf]
        %v3723 = vld [vmem:[#allocation8] sm:$0x1]
        %v3725 = vlaneseq
        %v3726 = vshrl.u32 %v3725, 7
        %v3727 = vsub.s32 0, %v3726
        %v3728 = vrot.slane %v3723, %v3727
        %v3794 = vunpack.c.l.b16 %v3659
        %v3795 = vunpack.c.l.b16 %v3660
        %v3796 = vunpack.c.l.b16 %v3661
        %v3797 = vunpack.c.l.b16 %v3662
        %v3798 = vunpack.c.l.b16 %v3663
        %v3799 = vunpack.c.l.b16 %v3664
        %v3800 = vunpack.c.l.b16 %v3665
        %v3801 = vunpack.c.l.b16 %v3666
        %v3802 = vunpack.c.l.b16 %v3667
        %v3803 = vunpack.c.l.b16 %v3668
        %v3804 = vunpack.c.l.b16 %v3669
        %v3805 = vunpack.c.l.b16 %v3670
        %v3806 = vunpack.c.l.b16 %v3671
        %v3807 = vunpack.c.l.b16 %v3672
        %v3808 = vunpack.c.l.b16 %v3673
        %v3809 = vunpack.c.l.b16 %v3674
        %v3810 = vunpack.c.l.b16 %v3675
        %v3811 = vunpack.c.l.b16 %v3676
        %v3812 = vunpack.c.l.b16 %v3677
        %v3813 = vunpack.c.l.b16 %v3678
        %v3814 = vunpack.c.l.b16 %v3679
        %v3815 = vunpack.c.l.b16 %v3680
        %v3816 = vunpack.c.l.b16 %v3681
        %v3817 = vunpack.c.l.b16 %v3682
        %v3818 = vunpack.c.l.b16 %v3683
        %v3819 = vunpack.c.l.b16 %v3684
        %v3820 = vunpack.c.l.b16 %v3685
        %v3821 = vunpack.c.l.b16 %v3686
        %v3822 = vunpack.c.l.b16 %v3687
        %v3823 = vunpack.c.l.b16 %v3688
        %v3824 = vunpack.c.l.b16 %v3689
        %v3825 = vunpack.c.l.b16 %v3690
        %v3826 = vunpack.c.l.b16 %v3691
        %v3827 = vunpack.c.l.b16 %v3692
        %v3828 = vunpack.c.l.b16 %v3693
        %v3829 = vunpack.c.l.b16 %v3694
        %v3830 = vunpack.c.l.b16 %v3695
        %v3831 = vunpack.c.l.b16 %v3696
        %v3832 = vunpack.c.l.b16 %v3697
        %v3833 = vunpack.c.l.b16 %v3698
        %v3834 = vunpack.c.l.b16 %v3699
        %v3835 = vunpack.c.l.b16 %v3700
        %v3836 = vunpack.c.l.b16 %v3701
        %v3837 = vunpack.c.l.b16 %v3702
        %v3838 = vunpack.c.l.b16 %v3703
        %v3839 = vunpack.c.l.b16 %v3704
        %v3840 = vunpack.c.l.b16 %v3705
        %v3841 = vunpack.c.l.b16 %v3706
        %v3842 = vunpack.c.l.b16 %v3707
        %v3843 = vunpack.c.l.b16 %v3708
        %v3844 = vunpack.c.l.b16 %v3709
        %v3845 = vunpack.c.l.b16 %v3710
        %v3846 = vunpack.c.l.b16 %v3711
        %v3847 = vunpack.c.l.b16 %v3712
        %v3848 = vunpack.c.l.b16 %v3713
        %v3849 = vunpack.c.l.b16 %v3714
        %v3850 = vunpack.c.l.b16 %v3715
        %v3851 = vunpack.c.l.b16 %v3716
        %v3852 = vunpack.c.l.b16 %v3717
        %v3853 = vunpack.c.l.b16 %v3718
        %v3854 = vunpack.c.l.b16 %v3719
        %v3855 = vunpack.c.l.b16 %v3720
        %v3856 = vunpack.c.l.b16 %v3721
        %v3857 = vunpack.c.l.b16 %v3722
        %v3858 = vpack.c.b16 %v3795, %v3794
        %v3859 = vpack.c.b16 %v3797, %v3796
        %v3860 = vpack.c.b16 %v3799, %v3798
        %v3861 = vpack.c.b16 %v3801, %v3800
        %v3862 = vpack.c.b16 %v3803, %v3802
        %v3863 = vpack.c.b16 %v3805, %v3804
        %v3864 = vpack.c.b16 %v3807, %v3806
        %v3865 = vpack.c.b16 %v3809, %v3808
        %v3866 = vpack.c.b16 %v3811, %v3810
        %v3867 = vpack.c.b16 %v3813, %v3812
        %v3868 = vpack.c.b16 %v3815, %v3814
        %v3869 = vpack.c.b16 %v3817, %v3816
        %v3870 = vpack.c.b16 %v3819, %v3818
        %v3871 = vpack.c.b16 %v3821, %v3820
        %v3872 = vpack.c.b16 %v3823, %v3822
        %v3873 = vpack.c.b16 %v3825, %v3824
        %v3874 = vpack.c.b16 %v3827, %v3826
        %v3875 = vpack.c.b16 %v3829, %v3828
        %v3876 = vpack.c.b16 %v3831, %v3830
        %v3877 = vpack.c.b16 %v3833, %v3832
        %v3878 = vpack.c.b16 %v3835, %v3834
        %v3879 = vpack.c.b16 %v3837, %v3836
        %v3880 = vpack.c.b16 %v3839, %v3838
        %v3881 = vpack.c.b16 %v3841, %v3840
        %v3882 = vpack.c.b16 %v3843, %v3842
        %v3883 = vpack.c.b16 %v3845, %v3844
        %v3884 = vpack.c.b16 %v3847, %v3846
        %v3885 = vpack.c.b16 %v3849, %v3848
        %v3886 = vpack.c.b16 %v3851, %v3850
        %v3887 = vpack.c.b16 %v3853, %v3852
        %v3888 = vpack.c.b16 %v3855, %v3854
        %v3889 = vpack.c.b16 %v3857, %v3856
        %3922 = vmatprep.subr.bf16.mxu0 0
        %3923 = vmatpush1.bf16.msra.mxu0 %v3858
        %3924 = vmatprep.subr.bf16.mxu0 0
        %3925 = vmatpush1.bf16.msra.mxu0 %v3859
        %3926 = vmatprep.subr.bf16.mxu0 0
        %3927 = vmatpush1.bf16.msra.mxu0 %v3860
        %3928 = vmatprep.subr.bf16.mxu0 0
        %3929 = vmatpush1.bf16.msra.mxu0 %v3861
        %3930 = vmatprep.subr.bf16.mxu0 0
        %3931 = vmatpush1.bf16.msra.mxu0 %v3862
        %3932 = vmatprep.subr.bf16.mxu0 0
        %3933 = vmatpush1.bf16.msra.mxu0 %v3863
        %3934 = vmatprep.subr.bf16.mxu0 0
        %3935 = vmatpush1.bf16.msra.mxu0 %v3864
        %3936 = vmatprep.subr.bf16.mxu0 0
        %3937 = vmatpush1.bf16.msra.mxu0 %v3865
        %3938 = vmatprep.subr.bf16.mxu0 0
        %3939 = vmatpush1.bf16.msra.mxu0 %v3866
        %3940 = vmatprep.subr.bf16.mxu0 0
        %3941 = vmatpush1.bf16.msra.mxu0 %v3867
        %3942 = vmatprep.subr.bf16.mxu0 0
        %3943 = vmatpush1.bf16.msra.mxu0 %v3868
        %3944 = vmatprep.subr.bf16.mxu0 0
        %3945 = vmatpush1.bf16.msra.mxu0 %v3869
        %3946 = vmatprep.subr.bf16.mxu0 0
        %3947 = vmatpush1.bf16.msra.mxu0 %v3870
        %3948 = vmatprep.subr.bf16.mxu0 0
        %3949 = vmatpush1.bf16.msra.mxu0 %v3871
        %3950 = vmatprep.subr.bf16.mxu0 0
        %3951 = vmatpush1.bf16.msra.mxu0 %v3872
        %3952 = vmatprep.subr.bf16.mxu0 0
        %3953 = vmatpush1.bf16.msra.mxu0 %v3873
        %3954 = vmatprep.mubr.bf16.mxu0 %v3628
        %3955 = vmatmul.mubr.bf16.gmra.mrb[0].mxu0 %v3627
        %v3956 = vpop.f32.mrb[0].mxu0
        %v3957 = vadd.f32 %v3728, %v3956
        %v3958 = vpop.f32.mrb[0].mxu0
        %v3959 = vpop.f32.mrb[0].mxu0
        %v3960 = vadd.f32 %v3728, %v3959
        %v3961 = vpop.f32.mrb[0].mxu0
        %3962 = vmatprep.mubr.bf16.mxu0 %v3632
        %3963 = vmatmul.mubr.bf16.gmra.mrb[0].mxu0 %v3631
        %v3964 = vpop.f32.mrb[0].mxu0
        %v3965 = vadd.f32 %v3728, %v3964
        %v3966 = vpop.f32.mrb[0].mxu0
        %v3967 = vpop.f32.mrb[0].mxu0
        %v3968 = vadd.f32 %v3728, %v3967
        %v3969 = vpop.f32.mrb[0].mxu0
        %3970 = vmatprep.mubr.bf16.mxu0 %v3636
        %3971 = vmatmul.mubr.bf16.gmra.mrb[0].mxu0 %v3635
        %v3972 = vpop.f32.mrb[0].mxu0
        %v3973 = vadd.f32 %v3728, %v3972
        %v3974 = vpop.f32.mrb[0].mxu0
        %v3975 = vpop.f32.mrb[0].mxu0
        %v3976 = vadd.f32 %v3728, %v3975
        %v3977 = vpop.f32.mrb[0].mxu0
        %3978 = vmatprep.mubr.bf16.mxu0 %v3640
        %3979 = vmatmul.mubr.bf16.gmra.mrb[0].mxu0 %v3639
        %v3980 = vpop.f32.mrb[0].mxu0
        %v3981 = vadd.f32 %v3728, %v3980
        %v3982 = vpop.f32.mrb[0].mxu0
        %v3983 = vpop.f32.mrb[0].mxu0
        %v3984 = vadd.f32 %v3728, %v3983
        %v3985 = vpop.f32.mrb[0].mxu0
        %3986 = vmatprep.mubr.bf16.mxu0 %v3644
        %3987 = vmatmul.mubr.bf16.gmra.mrb[0].mxu0 %v3643
        %v3988 = vpop.f32.mrb[0].mxu0
        %v3989 = vadd.f32 %v3728, %v3988
        %v3990 = vpop.f32.mrb[0].mxu0
        %v3991 = vpop.f32.mrb[0].mxu0
        %v3992 = vadd.f32 %v3728, %v3991
        %v3993 = vpop.f32.mrb[0].mxu0
        %3994 = vmatprep.mubr.bf16.mxu0 %v3648
        %3995 = vmatmul.mubr.bf16.gmra.mrb[0].mxu0 %v3647
        %v3996 = vpop.f32.mrb[0].mxu0
        %v3997 = vadd.f32 %v3728, %v3996
        %v3998 = vpop.f32.mrb[0].mxu0
        %v3999 = vpop.f32.mrb[0].mxu0
        %v4000 = vadd.f32 %v3728, %v3999
        %v4001 = vpop.f32.mrb[0].mxu0
        %4002 = vmatprep.mubr.bf16.mxu0 %v3652
        %4003 = vmatmul.mubr.bf16.gmra.mrb[0].mxu0 %v3651
        %v4004 = vpop.f32.mrb[0].mxu0
        %v4005 = vadd.f32 %v3728, %v4004
        %v4006 = vpop.f32.mrb[0].mxu0
        %v4007 = vpop.f32.mrb[0].mxu0
        %v4008 = vadd.f32 %v3728, %v4007
        %v4009 = vpop.f32.mrb[0].mxu0
        %4010 = vmatprep.mubr.bf16.mxu0 %v3656
        %4011 = vmatmul.mubr.bf16.gmra.mrb[0].mxu0 %v3655
        %v4012 = vpop.f32.mrb[0].mxu0
        %v4013 = vadd.f32 %v3728, %v4012
        %v4014 = vpop.f32.mrb[0].mxu0
        %v4015 = vpop.f32.mrb[0].mxu0
        %v4016 = vadd.f32 %v3728, %v4015
        %v4017 = vpop.f32.mrb[0].mxu0
        %4018 = vdwg.mxu0
        %4019 = vmatprep.subr.bf16.mxu0 0
        %4020 = vmatpush1.bf16.msra.mxu0 %v3874
        %4021 = vmatprep.subr.bf16.mxu0 0
        %4022 = vmatpush1.bf16.msra.mxu0 %v3875
        %4023 = vmatprep.subr.bf16.mxu0 0
        %4024 = vmatpush1.bf16.msra.mxu0 %v3876
        %4025 = vmatprep.subr.bf16.mxu0 0
        %4026 = vmatpush1.bf16.msra.mxu0 %v3877
        %4027 = vmatprep.subr.bf16.mxu0 0
        %4028 = vmatpush1.bf16.msra.mxu0 %v3878
        %4029 = vmatprep.subr.bf16.mxu0 0
        %4030 = vmatpush1.bf16.msra.mxu0 %v3879
        %4031 = vmatprep.subr.bf16.mxu0 0
        %4032 = vmatpush1.bf16.msra.mxu0 %v3880
        %4033 = vmatprep.subr.bf16.mxu0 0
        %4034 = vmatpush1.bf16.msra.mxu0 %v3881
        %4035 = vmatprep.subr.bf16.mxu0 0
        %4036 = vmatpush1.bf16.msra.mxu0 %v3882
        %4037 = vmatprep.subr.bf16.mxu0 0
        %4038 = vmatpush1.bf16.msra.mxu0 %v3883
        %4039 = vmatprep.subr.bf16.mxu0 0
        %4040 = vmatpush1.bf16.msra.mxu0 %v3884
        %4041 = vmatprep.subr.bf16.mxu0 0
        %4042 = vmatpush1.bf16.msra.mxu0 %v3885
        %4043 = vmatprep.subr.bf16.mxu0 0
        %4044 = vmatpush1.bf16.msra.mxu0 %v3886
        %4045 = vmatprep.subr.bf16.mxu0 0
        %4046 = vmatpush1.bf16.msra.mxu0 %v3887
        %4047 = vmatprep.subr.bf16.mxu0 0
        %4048 = vmatpush1.bf16.msra.mxu0 %v3888
        %4049 = vmatprep.subr.bf16.mxu0 0
        %4050 = vmatpush1.bf16.msra.mxu0 %v3889
        %4051 = vmatprep.mubr.bf16.mxu0 %v3630
        %4052 = vmatmul.mubr.bf16.gmra.mrb[0].mxu0 %v3629
        %v4053 = vpop.f32.mrb[0].mxu0
        %v4054 = vadd.f32 %v3957, %v4053
        %v4055 = vpop.f32.mrb[0].mxu0
        %v4056 = vpop.f32.mrb[0].mxu0
        %v4057 = vadd.f32 %v3960, %v4056
        %v4058 = vpop.f32.mrb[0].mxu0
        %4059 = vmatprep.mubr.bf16.mxu0 %v3634
        %4060 = vmatmul.mubr.bf16.gmra.mrb[0].mxu0 %v3633
        %v4061 = vpop.f32.mrb[0].mxu0
        %v4062 = vadd.f32 %v3965, %v4061
        %v4063 = vpop.f32.mrb[0].mxu0
        %v4064 = vpop.f32.mrb[0].mxu0
        %v4065 = vadd.f32 %v3968, %v4064
        %v4066 = vpop.f32.mrb[0].mxu0
        %4067 = vmatprep.mubr.bf16.mxu0 %v3638
        %4068 = vmatmul.mubr.bf16.gmra.mrb[0].mxu0 %v3637
        %v4069 = vpop.f32.mrb[0].mxu0
        %v4070 = vadd.f32 %v3973, %v4069
        %v4071 = vpop.f32.mrb[0].mxu0
        %v4072 = vpop.f32.mrb[0].mxu0
        %v4073 = vadd.f32 %v3976, %v4072
        %v4074 = vpop.f32.mrb[0].mxu0
        %4075 = vmatprep.mubr.bf16.mxu0 %v3642
        %4076 = vmatmul.mubr.bf16.gmra.mrb[0].mxu0 %v3641
        %v4077 = vpop.f32.mrb[0].mxu0
        %v4078 = vadd.f32 %v3981, %v4077
        %v4079 = vpop.f32.mrb[0].mxu0
        %v4080 = vpop.f32.mrb[0].mxu0
        %v4081 = vadd.f32 %v3984, %v4080
        %v4082 = vpop.f32.mrb[0].mxu0
        %4083 = vmatprep.mubr.bf16.mxu0 %v3646
        %4084 = vmatmul.mubr.bf16.gmra.mrb[0].mxu0 %v3645
        %v4085 = vpop.f32.mrb[0].mxu0
        %v4086 = vadd.f32 %v3989, %v4085
        %v4087 = vpop.f32.mrb[0].mxu0
        %v4088 = vpop.f32.mrb[0].mxu0
        %v4089 = vadd.f32 %v3992, %v4088
        %v4090 = vpop.f32.mrb[0].mxu0
        %4091 = vmatprep.mubr.bf16.mxu0 %v3650
        %4092 = vmatmul.mubr.bf16.gmra.mrb[0].mxu0 %v3649
        %v4093 = vpop.f32.mrb[0].mxu0
        %v4094 = vadd.f32 %v3997, %v4093
        %v4095 = vpop.f32.mrb[0].mxu0
        %v4096 = vpop.f32.mrb[0].mxu0
        %v4097 = vadd.f32 %v4000, %v4096
        %v4098 = vpop.f32.mrb[0].mxu0
        %4099 = vmatprep.mubr.bf16.mxu0 %v3654
        %4100 = vmatmul.mubr.bf16.gmra.mrb[0].mxu0 %v3653
        %v4101 = vpop.f32.mrb[0].mxu0
        %v4102 = vadd.f32 %v4005, %v4101
        %v4103 = vpop.f32.mrb[0].mxu0
        %v4104 = vpop.f32.mrb[0].mxu0
        %v4105 = vadd.f32 %v4008, %v4104
        %v4106 = vpop.f32.mrb[0].mxu0
        %4107 = vmatprep.mubr.bf16.mxu0 %v3658
        %4108 = vmatmul.mubr.bf16.gmra.mrb[0].mxu0 %v3657
        %v4109 = vpop.f32.mrb[0].mxu0
        %v4110 = vadd.f32 %v4013, %v4109
        %v4111 = vpop.f32.mrb[0].mxu0
        %v4112 = vpop.f32.mrb[0].mxu0
        %v4113 = vadd.f32 %v4016, %v4112
        %v4114 = vpop.f32.mrb[0].mxu0
        %4115 = vdwg.mxu0
        %v4116 = vmax.f32 %v4054, 0.0
        %v4117 = vmax.f32 %v4057, 0.0
        %v4118 = vmax.f32 %v4062, 0.0
        %v4119 = vmax.f32 %v4065, 0.0
        %v4120 = vmax.f32 %v4070, 0.0
        %v4121 = vmax.f32 %v4073, 0.0
        %v4122 = vmax.f32 %v4078, 0.0
        %v4123 = vmax.f32 %v4081, 0.0
        %v4124 = vmax.f32 %v4086, 0.0
        %v4125 = vmax.f32 %v4089, 0.0
        %v4126 = vmax.f32 %v4094, 0.0
        %v4127 = vmax.f32 %v4097, 0.0
        %v4128 = vmax.f32 %v4102, 0.0
        %v4129 = vmax.f32 %v4105, 0.0
        %v4130 = vmax.f32 %v4110, 0.0
        %v4131 = vmax.f32 %v4113, 0.0
        %v4132 = vpack.c.bf16 %v4117, %v4116
        %v4133 = vpack.c.bf16 %v4119, %v4118
        %v4134 = vpack.c.bf16 %v4121, %v4120
        %v4135 = vpack.c.bf16 %v4123, %v4122
        %v4136 = vpack.c.bf16 %v4125, %v4124
        %v4137 = vpack.c.bf16 %v4127, %v4126
        %v4138 = vpack.c.bf16 %v4129, %v4128
        %v4139 = vpack.c.bf16 %v4131, %v4130
        %v4140 = vld [vmem:[#allocation10] sm:$0xf]
        %v4141 = vld [vmem:[#allocation10 + $0x4] sm:$0xf]
        %v4142 = vld [vmem:[#allocation10 + $0x8] sm:$0xf]
        %v4143 = vld [vmem:[#allocation10 + $0xc] sm:$0xf]
        %v4144 = vld [vmem:[#allocation10 + $0x10] sm:$0xf]
        %v4145 = vld [vmem:[#allocation10 + $0x14] sm:$0xf]
        %v4146 = vld [vmem:[#allocation10 + $0x18] sm:$0xf]
        %v4147 = vld [vmem:[#allocation10 + $0x1c] sm:$0xf]
        %v4148 = vld [vmem:[#allocation10 + $0x20] sm:$0xf]
        %v4149 = vld [vmem:[#allocation10 + $0x24] sm:$0xf]
        %v4150 = vld [vmem:[#allocation10 + $0x28] sm:$0xf]
        %v4151 = vld [vmem:[#allocation10 + $0x2c] sm:$0xf]
        %v4152 = vld [vmem:[#allocation10 + $0x30] sm:$0xf]
        %v4153 = vld [vmem:[#allocation10 + $0x34] sm:$0xf]
        %v4154 = vld [vmem:[#allocation10 + $0x38] sm:$0xf]
        %v4155 = vld [vmem:[#allocation10 + $0x3c] sm:$0xf]
        %v4156 = vld [vmem:[#allocation11] sm:$0x1]
        %v4158 = vlaneseq
        %v4159 = vshrl.u32 %v4158, 7
        %v4160 = vsub.s32 0, %v4159
        %v4161 = vrot.slane %v4156, %v4160
        %v4179 = vunpack.c.l.b16 %v4140
        %v4180 = vunpack.c.l.b16 %v4141
        %v4181 = vunpack.c.l.b16 %v4142
        %v4182 = vunpack.c.l.b16 %v4143
        %v4183 = vunpack.c.l.b16 %v4144
        %v4184 = vunpack.c.l.b16 %v4145
        %v4185 = vunpack.c.l.b16 %v4146
        %v4186 = vunpack.c.l.b16 %v4147
        %v4187 = vunpack.c.l.b16 %v4148
        %v4188 = vunpack.c.l.b16 %v4149
        %v4189 = vunpack.c.l.b16 %v4150
        %v4190 = vunpack.c.l.b16 %v4151
        %v4191 = vunpack.c.l.b16 %v4152
        %v4192 = vunpack.c.l.b16 %v4153
        %v4193 = vunpack.c.l.b16 %v4154
        %v4194 = vunpack.c.l.b16 %v4155
        %v4195 = vpack.c.b16 %v4180, %v4179
        %v4196 = vpack.c.b16 %v4182, %v4181
        %v4197 = vpack.c.b16 %v4184, %v4183
        %v4198 = vpack.c.b16 %v4186, %v4185
        %v4199 = vpack.c.b16 %v4188, %v4187
        %v4200 = vpack.c.b16 %v4190, %v4189
        %v4201 = vpack.c.b16 %v4192, %v4191
        %v4202 = vpack.c.b16 %v4194, %v4193
        %4211 = vmatprep.subr.bf16.mxu0 0
        %4212 = vmatpush1.bf16.msra.mxu0 %v4195
        %4213 = vmatprep.subr.bf16.mxu0 0
        %4214 = vmatpush1.bf16.msra.mxu0 %v4196
        %4215 = vmatprep.subr.bf16.mxu0 0
        %4216 = vmatpush1.bf16.msra.mxu0 %v4197
        %4217 = vmatprep.subr.bf16.mxu0 0
        %4218 = vmatpush1.bf16.msra.mxu0 %v4198
        %4219 = vmatprep.subr.bf16.mxu0 0
        %4220 = vmatpush1.bf16.msra.mxu0 %v4199
        %4221 = vmatprep.subr.bf16.mxu0 0
        %4222 = vmatpush1.bf16.msra.mxu0 %v4200
        %4223 = vmatprep.subr.bf16.mxu0 0
        %4224 = vmatpush1.bf16.msra.mxu0 %v4201
        %4225 = vmatprep.subr.bf16.mxu0 0
        %4226 = vmatpush1.bf16.msra.mxu0 %v4202
        %4227 = vmatprep.subr.bf16.mxu0 0
        %4228 = vmatpush1.bf16.msra.mxu0 0
        %4229 = vmatprep.subr.bf16.mxu0 0
        %4230 = vmatpush1.bf16.msra.mxu0 0
        %4231 = vmatprep.subr.bf16.mxu0 0
        %4232 = vmatpush1.bf16.msra.mxu0 0
        %4233 = vmatprep.subr.bf16.mxu0 0
        %4234 = vmatpush1.bf16.msra.mxu0 0
        %4235 = vmatprep.subr.bf16.mxu0 0
        %4236 = vmatpush1.bf16.msra.mxu0 0
        %4237 = vmatprep.subr.bf16.mxu0 0
        %4238 = vmatpush1.bf16.msra.mxu0 0
        %4239 = vmatprep.subr.bf16.mxu0 0
        %4240 = vmatpush1.bf16.msra.mxu0 0
        %4241 = vmatprep.subr.bf16.mxu0 0
        %4242 = vmatpush1.bf16.msra.mxu0 0
        %4243 = vmatprep.mubr.bf16.mxu0 0
        %4244 = vmatmul.mubr.bf16.gmra.mrb[0].mxu0 %v4132
        %v4245 = vpop.f32.mrb[0].mxu0
        %v4246 = vadd.f32 %v4161, %v4245
        %v4247 = vpop.f32.mrb[0].mxu0
        %v4248 = vpop.f32.mrb[0].mxu0
        %v4249 = vadd.f32 %v4161, %v4248
        %v4250 = vpop.f32.mrb[0].mxu0
        %4251 = vmatprep.mubr.bf16.mxu0 0
        %4252 = vmatmul.mubr.bf16.gmra.mrb[0].mxu0 %v4133
        %v4253 = vpop.f32.mrb[0].mxu0
        %v4254 = vadd.f32 %v4161, %v4253
        %v4255 = vpop.f32.mrb[0].mxu0
        %v4256 = vpop.f32.mrb[0].mxu0
        %v4257 = vadd.f32 %v4161, %v4256
        %v4258 = vpop.f32.mrb[0].mxu0
        %4259 = vmatprep.mubr.bf16.mxu0 0
        %4260 = vmatmul.mubr.bf16.gmra.mrb[0].mxu0 %v4134
        %v4261 = vpop.f32.mrb[0].mxu0
        %v4262 = vadd.f32 %v4161, %v4261
        %v4263 = vpop.f32.mrb[0].mxu0
        %v4264 = vpop.f32.mrb[0].mxu0
        %v4265 = vadd.f32 %v4161, %v4264
        %v4266 = vpop.f32.mrb[0].mxu0
        %4267 = vmatprep.mubr.bf16.mxu0 0
        %4268 = vmatmul.mubr.bf16.gmra.mrb[0].mxu0 %v4135
        %v4269 = vpop.f32.mrb[0].mxu0
        %v4270 = vadd.f32 %v4161, %v4269
        %v4271 = vpop.f32.mrb[0].mxu0
        %v4272 = vpop.f32.mrb[0].mxu0
        %v4273 = vadd.f32 %v4161, %v4272
        %v4274 = vpop.f32.mrb[0].mxu0
        %4275 = vmatprep.mubr.bf16.mxu0 0
        %4276 = vmatmul.mubr.bf16.gmra.mrb[0].mxu0 %v4136
        %v4277 = vpop.f32.mrb[0].mxu0
        %v4278 = vadd.f32 %v4161, %v4277
        %v4279 = vpop.f32.mrb[0].mxu0
        %v4280 = vpop.f32.mrb[0].mxu0
        %v4281 = vadd.f32 %v4161, %v4280
        %v4282 = vpop.f32.mrb[0].mxu0
        %4283 = vmatprep.mubr.bf16.mxu0 0
        %4284 = vmatmul.mubr.bf16.gmra.mrb[0].mxu0 %v4137
        %v4285 = vpop.f32.mrb[0].mxu0
        %v4286 = vadd.f32 %v4161, %v4285
        %v4287 = vpop.f32.mrb[0].mxu0
        %v4288 = vpop.f32.mrb[0].mxu0
        %v4289 = vadd.f32 %v4161, %v4288
        %v4290 = vpop.f32.mrb[0].mxu0
        %4291 = vmatprep.mubr.bf16.mxu0 0
        %4292 = vmatmul.mubr.bf16.gmra.mrb[0].mxu0 %v4138
        %v4293 = vpop.f32.mrb[0].mxu0
        %v4294 = vadd.f32 %v4161, %v4293
        %v4295 = vpop.f32.mrb[0].mxu0
        %v4296 = vpop.f32.mrb[0].mxu0
        %v4297 = vadd.f32 %v4161, %v4296
        %v4298 = vpop.f32.mrb[0].mxu0
        %4299 = vmatprep.mubr.bf16.mxu0 0
        %4300 = vmatmul.mubr.bf16.gmra.mrb[0].mxu0 %v4139
        %v4301 = vpop.f32.mrb[0].mxu0
        %v4302 = vadd.f32 %v4161, %v4301
        %v4303 = vpop.f32.mrb[0].mxu0
        %v4304 = vpop.f32.mrb[0].mxu0
        %v4305 = vadd.f32 %v4161, %v4304
        %v4306 = vpop.f32.mrb[0].mxu0
        %4307 = vdwg.mxu0
        %v4308 = vmax.f32 %v4246, 0.0
        %v4309 = vmax.f32 %v4249, 0.0
        %v4310 = vmax.f32 %v4254, 0.0
        %v4311 = vmax.f32 %v4257, 0.0
        %v4312 = vmax.f32 %v4262, 0.0
        %v4313 = vmax.f32 %v4265, 0.0
        %v4314 = vmax.f32 %v4270, 0.0
        %v4315 = vmax.f32 %v4273, 0.0
        %v4316 = vmax.f32 %v4278, 0.0
        %v4317 = vmax.f32 %v4281, 0.0
        %v4318 = vmax.f32 %v4286, 0.0
        %v4319 = vmax.f32 %v4289, 0.0
        %v4320 = vmax.f32 %v4294, 0.0
        %v4321 = vmax.f32 %v4297, 0.0
        %v4322 = vmax.f32 %v4302, 0.0
        %v4323 = vmax.f32 %v4305, 0.0
        %v4324 = vadd.f32 %v4308, %v345
        %v4325 = vadd.f32 %v4309, %v348
        %v4326 = vadd.f32 %v4310, %v351
        %v4327 = vadd.f32 %v4311, %v354
        %v4328 = vadd.f32 %v4312, %v357
        %v4329 = vadd.f32 %v4313, %v360
        %v4330 = vadd.f32 %v4314, %v363
        %v4331 = vadd.f32 %v4315, %v366
        %v4332 = vadd.f32 %v4316, %v369
        %v4333 = vadd.f32 %v4317, %v372
        %v4334 = vadd.f32 %v4318, %v375
        %v4335 = vadd.f32 %v4319, %v378
        %v4336 = vadd.f32 %v4320, %v381
        %v4337 = vadd.f32 %v4321, %v384
        %v4338 = vadd.f32 %v4322, %v387
        %v4339 = vadd.f32 %v4323, %v390
        %4340 = vst [vmem:[%s339] sm:$0xff] %v4324
        %4341 = vst [vmem:[%s339 + $0x8] sm:$0xff] %v4325
        %4342 = vst [vmem:[%s339 + $0x10] sm:$0xff] %v4326
        %4343 = vst [vmem:[%s339 + $0x18] sm:$0xff] %v4327
        %4344 = vst [vmem:[%s339 + $0x20] sm:$0xff] %v4328
        %4345 = vst [vmem:[%s339 + $0x28] sm:$0xff] %v4329
        %4346 = vst [vmem:[%s339 + $0x30] sm:$0xff] %v4330
        %4347 = vst [vmem:[%s339 + $0x38] sm:$0xff] %v4331
        %4348 = vst [vmem:[%s339 + $0x40] sm:$0xff] %v4332
        %4349 = vst [vmem:[%s339 + $0x48] sm:$0xff] %v4333
        %4350 = vst [vmem:[%s339 + $0x50] sm:$0xff] %v4334
        %4351 = vst [vmem:[%s339 + $0x58] sm:$0xff] %v4335
        %4352 = vst [vmem:[%s339 + $0x60] sm:$0xff] %v4336
        %4353 = vst [vmem:[%s339 + $0x68] sm:$0xff] %v4337
        %4354 = vst [vmem:[%s339 + $0x70] sm:$0xff] %v4338
        %4355 = vst [vmem:[%s339 + $0x78] sm:$0xff] %v4339
        %s4356 = sand.u32 %s165, 1
        %s4357 = scalar_lea.sflag [#allocation4], %s4356
        %s4358 = sand.u32 %s165, 1
        %s4359 = smul.addr %s4358, 128
        %s4360 = scalar_lea.vmem [#allocation13], %s4359
        // Predicated region
        $region69: #{tpu_custom_call.1} parent=43 // pred_check
          %p4361 = pneg %p175
        $region70: #{tpu_custom_call.1} parent=43 // pred_check_branch
          %4363 = sbr.rel (%p4361) target = $region72
        $region71: #{tpu_custom_call.1} parent=43 // pred_region
          %s4364 = smul.u32 16, %s26
          %s4366 = ssub.s32 2048, 2048
          %4367 = vsyncadd %s4357, %s4366
          %s4368 = smul.addr %s4364, 128
          %s4369 = scalar_lea.hbm %s6, %s4368
          %s4370 = sshll.u32 %s4360, 4
          %s4371 = int_to_ptr.vmem [resolvable:$true] %s4370
          %4376 = dma.vmem_to_hbm [thread:$0]  %s4371, 2048, %s4369, %s4357, 128, 128, 8
        $region72: #{tpu_custom_call.1} parent=43 // pred_fallthru
          _
      $region44: #{tpu_custom_call.1} parent=5 // pred_fallthru
        _
      %p4377 = scmp.le.s32.totalorder 2, %s21
      // Predicated region
      $region73: #{tpu_custom_call.1} parent=5 // pred_check
        %p4378 = pneg %p4377
      $region74: #{tpu_custom_call.1} parent=5 // pred_check_branch
        %4380 = sbr.rel (%p4378) target = $region76
      $region75: #{tpu_custom_call.1} parent=5 // pred_region
        %s4381 = ssub.s32 %s21, 2
        // Predicated region
        $region77: #{tpu_custom_call.1} parent=75 // pred_check
          %p4382 = pneg %p181
        $region78: #{tpu_custom_call.1} parent=75 // pred_check_branch
          %4384 = sbr.rel (%p4382) target = $region80
        $region79: #{tpu_custom_call.1} parent=75 // pred_region
          %s4385 = sand.u32 %s166, 1
          %s4386 = scalar_lea.sflag [#allocation4], %s4385
          %s4387 = sand.u32 %s166, 1
          %s4388 = smul.addr %s4387, 128
          %s4389 = scalar_lea.vmem [#allocation13], %s4388
          %4390 = dma.done %s4386, 2048
        $region80: #{tpu_custom_call.1} parent=75 // pred_fallthru
          _
      $region76: #{tpu_custom_call.1} parent=5 // pred_fallthru
        _
    $region6: #{tpu_custom_call.1} parent=1 // loop_footer
      %s25 = sadd.s32 1, %s21
    $region7: #{tpu_custom_call.1} parent=1 // loop_footer_branch
      %20 = sbr.rel target = $region3
    $region8: #{tpu_custom_call.1} parent=1 // loop_exit
      _
    %4391 = vsyncpa [#allocation3], 1
    %s4392 = scalar_lea.sflag [#allocation3], 1
    %4393 = vsyncpa %s4392, 1
    %4394 = vsyncpa [#allocation6], 1
    %4395 = vsyncpa [#allocation9], 1
    %4396 = vsyncpa [#allocation12], 1
    %4397 = vsyncpa [#allocation4], 1
    %s4398 = scalar_lea.sflag [#allocation4], 1
    %4399 = vsyncpa %s4398, 1

</llo_original>
